<compile_context>
chip_gen: v6e
topology: v6e:2x2x1
jax: 0.10.0
libtpu: 0.0.40
codegen_flags: <defaults>
</compile_context>

<pallas_src>
import jax
import jax.numpy as jnp
from jax import lax
from jax.experimental import pallas as pl
from jax.experimental.pallas import tpu as pltpu

C_HID = 256   # fixed hidden width of _CNN
C_OUT = 80    # _CNN's default `input_size` = last conv out-channels
C_PAD = 128   # lane-dense padded output width


def _round_up(x, m):
    return ((x + m - 1) // m) * m


def _cdiv(a, b):
    return (a + b - 1) // b


def _pick_vmem_limit():
    phys = 64 * 1024 * 1024          # conservative default (v7x per-TC VMEM)
    try:
        phys = int(getattr(pltpu.get_tpu_info(), "vmem_capacity_bytes", 2 * phys))
    except Exception:
        pass
    # Leave ~25% headroom under physical VMEM (matters most on v7x's 64 MiB):
    # -> ~48 MiB on v7x, ~96 MiB on v6e/v5e.
    return max(32 * 1024 * 1024, min((phys * 3) // 4, 100 * 1024 * 1024))


def _pick_block_n(n, p):
    """Batch-tile heuristic: target ~2048 matmul rows per grid step."""
    target_rows = 2048
    bt = max(1, target_rows // p)
    bt = _round_up(min(bt, 512), 8)
    bt = max(8, min(bt, _round_up(n, 8)))
    g = _cdiv(n, bt)
    if g > 1 and g % 2 == 1:          # best effort: even grid for v7x's 2 TCs
        alt = max(8, _round_up(_cdiv(n, g + 1), 8))
        if _cdiv(n, alt) % 2 == 0:
            bt = alt
    return bt


def _make_kernel(bt, p, l3, c_in):
    r = bt * p                        # matmul rows per grid step (multiple of 64)

    def kernel(x_ref, w1_ref, w2_ref, w3_ref, o_ref, xh_ref, hh_ref, s_ref):
        # x_ref : (r, c_in) bf16 -- bt samples, p padded positions each.
        # w*_ref: (3, C_in_layer, C_out_layer) bf16 -- per-tap weights.
        # xh_ref: (r+8, c_in) bf16 scratch, hh_ref: (r+8, 256) bf16 scratch
        #         (8 zero halo rows keep the shifted tap loads in-bounds).
        # s_ref : (r, 128) f32 scratch holding conv3 output for the reduction.

        def conv_relu(src_ref, w_ref):
            # out[row] = relu(sum_k src[row + k] @ W_k): three accumulating
            # dots on tap-shifted windows of the haloed scratch (uniform M=r).
            acc = jnp.dot(src_ref[pl.ds(0, r), :], w_ref[0],
                          preferred_element_type=jnp.float32)
            acc = acc + jnp.dot(src_ref[pl.ds(1, r), :], w_ref[1],
                                preferred_element_type=jnp.float32)
            acc = acc + jnp.dot(src_ref[pl.ds(2, r), :], w_ref[2],
                                preferred_element_type=jnp.float32)
            return jnp.maximum(acc, 0.0)

        # Zero the halo rows once per step.
        xh_ref[pl.ds(r, 8), :] = jnp.zeros((8, c_in), jnp.bfloat16)
        hh_ref[pl.ds(r, 8), :] = jnp.zeros((8, C_HID), jnp.bfloat16)

        # ---- conv1 + ReLU -------------------------------------------------
        xh_ref[pl.ds(0, r), :] = x_ref[...]
        h1 = conv_relu(xh_ref, w1_ref).astype(jnp.bfloat16)      # (r, 256)

        # ---- conv2 + ReLU -------------------------------------------------
        hh_ref[pl.ds(0, r), :] = h1
        h2 = conv_relu(hh_ref, w2_ref).astype(jnp.bfloat16)      # (r, 256)

        # ---- conv3 + ReLU (f32 kept for the sequence sum) ------------------
        hh_ref[pl.ds(0, r), :] = h2
        s_ref[...] = conv_relu(hh_ref, w3_ref)                   # (r, 128) f32

        # Dropout = identity (eval).  torch.sum over the sequence dim ==
        # per-sample masked sum over the L3 = W-6 valid positions, done as an
        # f32 sublane reduction (off the MXU).  Rows with position >= l3 hold
        # garbage (halo / cross-sample taps) and are masked out here.
        valid = jax.lax.broadcasted_iota(jnp.int32, (p, C_PAD), 0) < l3

        def body(b, carry):
            start = pl.multiple_of(b * p, 8)
            blk = s_ref[pl.ds(start, p), :]                      # (p, 128) f32
            blk = jnp.where(valid, blk, 0.0)
            o_ref[pl.ds(b, 1), :] = jnp.sum(blk, axis=0, keepdims=True)
            return carry

        lax.fori_loop(0, bt, body, 0)

    return kernel


def hcgnet_cnn_forward(x_nchw, w1, w2, w3, *, block_n=None):
    """x_nchw: (N, C_in, 1, W) float32; w*: PyTorch Conv2d weights (out, in, 1, 3)."""
    n, c_in, height, width = x_nchw.shape
    assert height == 1, "HCGNetCNN expects H == 1 (IQ layout); squeeze(dim=2) relies on it"
    assert width >= 7, "need W >= 7 so the third conv's output length W-6 is positive"

    l3 = width - 6
    p = _round_up(width, 8)                 # padded per-sample row stride

    if block_n is None:
        bt = _pick_block_n(n, p)
    else:
        assert block_n >= 8 and block_n % 8 == 0
        bt = block_n
    g = _cdiv(n, bt)
    np_ = g * bt
    r = bt * p

    # channels-last, pad batch -> np_ and width -> p, flatten (sample, pos) rows.
    x = jnp.transpose(x_nchw[:, :, 0, :], (0, 2, 1))             # (N, W, C_in)
    x = jnp.pad(x, ((0, np_ - n), (0, p - width), (0, 0)))
    xf = x.reshape(np_ * p, c_in).astype(jnp.bfloat16)

    def repack(wq, out_pad=0):              # (O, I, 1, 3) -> (3, I, O[+pad])
        wt = jnp.transpose(wq[:, :, 0, :], (2, 1, 0))
        if out_pad:
            wt = jnp.pad(wt, ((0, 0), (0, 0), (0, out_pad)))
        return wt.astype(jnp.bfloat16)

    w1p = repack(w1)                        # (3, C_in, 256)
    w2p = repack(w2)                        # (3, 256, 256)
    w3p = repack(w3, C_PAD - C_OUT)         # (3, 256, 128)

    per_row_flops = 6 * (c_in * C_HID + C_HID * C_HID + C_HID * C_PAD)
    flops = g * r * (per_row_flops + C_PAD)
    bytes_accessed = (xf.size * 2 + (w1p.size + w2p.size + w3p.size) * 2
                      + np_ * C_PAD * 4)

    out = pl.pallas_call(
        _make_kernel(bt, p, l3, c_in),
        out_shape=jax.ShapeDtypeStruct((np_, C_PAD), jnp.float32),
        grid_spec=pltpu.PrefetchScalarGridSpec(
            num_scalar_prefetch=0,
            grid=(g,),
            in_specs=[
                pl.BlockSpec((r, c_in), lambda i: (i, 0)),
                pl.BlockSpec((3, c_in, C_HID), lambda i: (0, 0, 0)),
                pl.BlockSpec((3, C_HID, C_HID), lambda i: (0, 0, 0)),
                pl.BlockSpec((3, C_HID, C_PAD), lambda i: (0, 0, 0)),
            ],
            out_specs=pl.BlockSpec((bt, C_PAD), lambda i: (i, 0)),
            scratch_shapes=[
                pltpu.VMEM((r + 8, c_in), jnp.bfloat16),
                pltpu.VMEM((r + 8, C_HID), jnp.bfloat16),
                pltpu.VMEM((r, C_PAD), jnp.float32),
            ],
        ),
        compiler_params=pltpu.CompilerParams(
            dimension_semantics=("parallel",),
            vmem_limit_bytes=_pick_vmem_limit(),
        ),
        cost_estimate=pl.CostEstimate(
            flops=int(flops),
            transcendentals=0,
            bytes_accessed=int(bytes_accessed)),
    )(xf, w1p, w2p, w3p)

    return out[:n, :C_OUT]


def reference_forward(x_nchw, w1, w2, w3):
    """Pure-JAX reference of the eval-mode PyTorch forward."""
    x = jnp.transpose(x_nchw[:, :, 0, :], (0, 2, 1))             # (N, W, C)

    def conv_relu(h, w):                                         # w: (O, I, 1, 3)
        length = h.shape[1] - 2
        wt = jnp.transpose(w[:, :, 0, :], (2, 1, 0))             # (3, I, O)
        acc = sum(jnp.einsum('nwc,co->nwo', h[:, k:k + length, :], wt[k])
                  for k in range(3))
        return jnp.maximum(acc, 0.0)

    h = conv_relu(conv_relu(conv_relu(x, w1), w2), w3)           # (N, W-6, 80)
    return jnp.sum(h, axis=1)                                    # (N, 80)


if __name__ == "__main__":
    key = jax.random.PRNGKey(0)
    k_x, k1, k2, k3 = jax.random.split(key, 4)

    # Small shapes: batch=2, depth(C_in)=4, H=1, W=16  (W-6 = 10 after 3 convs)
    N, C_IN, W = 2, 4, 16
    x = jax.random.normal(k_x, (N, C_IN, 1, W), dtype=jnp.float32)

    # kaiming_normal_(mode='fan_out', nonlinearity='relu'): std = sqrt(2 / (out*kH*kW))
    def kaiming_conv(k, out_ch, in_ch):
        std = (2.0 / (out_ch * 1 * 3)) ** 0.5
        return std * jax.random.normal(k, (out_ch, in_ch, 1, 3), dtype=jnp.float32)

    w1 = kaiming_conv(k1, C_HID, C_IN)
    w2 = kaiming_conv(k2, C_HID, C_HID)
    w3 = kaiming_conv(k3, C_OUT, C_HID)

    out = hcgnet_cnn_forward(x, w1, w2, w3)
    jax.block_until_ready(out)
    assert out.shape == (N, C_OUT) and out.dtype == jnp.float32

    # Loose tolerance: matmul operands are bf16 with f32 accumulation.
    ref = reference_forward(x, w1, w2, w3)
    err = float(jnp.max(jnp.abs(out - ref)))
    scale = 1.0 + float(jnp.max(jnp.abs(ref)))
    assert err < 0.1 * scale, f"kernel/reference mismatch: max|diff|={err}"

    # Regression guard (reviewer ask): N not a multiple of the batch tile,
    # W not a multiple of 8 (exercises width padding), multi-step grid.
    N2, W2 = 20, 19
    x2 = jax.random.normal(jax.random.PRNGKey(1), (N2, C_IN, 1, W2),
                           dtype=jnp.float32)
    out2 = hcgnet_cnn_forward(x2, w1, w2, w3, block_n=8)
    jax.block_until_ready(out2)
    ref2 = reference_forward(x2, w1, w2, w3)
    err2 = float(jnp.max(jnp.abs(out2 - ref2)))
    scale2 = 1.0 + float(jnp.max(jnp.abs(ref2)))
    assert err2 < 0.1 * scale2, f"kernel/reference mismatch: max|diff|={err2}"

    print("KERNEL_OK")
</pallas_src>

<mosaic_0001>
module attributes {stable_mosaic.version = 11 : i64} {
  func.func @kernel(%arg0: i32, %arg1: memref<128x4xbf16, #tpu.memory_space<vmem>>, %arg2: memref<3x4x256xbf16, #tpu.memory_space<vmem>>, %arg3: memref<3x256x256xbf16, #tpu.memory_space<vmem>>, %arg4: memref<3x256x128xbf16, #tpu.memory_space<vmem>>, %arg5: memref<8x128xf32, #tpu.memory_space<vmem>>, %arg6: memref<136x4xbf16, #tpu.memory_space<vmem>>, %arg7: memref<136x256xbf16, #tpu.memory_space<vmem>>, %arg8: memref<128x128xf32, #tpu.memory_space<vmem>>) attributes {dimension_semantics = [#tpu.dimension_semantics<parallel>], iteration_bounds = array<i64: 1>, scalar_prefetch = 0 : i64, scratch_operands = 3 : i64, tpu.core_type = #tpu.core_type<tc>, window_params = [{transform_indices = @transform_0, window_bounds = array<i64: 128, 4>}, {pipeline_mode = #tpu.pipeline_mode<synchronous>, transform_indices = @transform_1, window_bounds = array<i64: 3, 4, 256>}, {pipeline_mode = #tpu.pipeline_mode<synchronous>, transform_indices = @transform_2, window_bounds = array<i64: 3, 256, 256>}, {pipeline_mode = #tpu.pipeline_mode<synchronous>, transform_indices = @transform_3, window_bounds = array<i64: 3, 256, 128>}, {transform_indices = @transform_4, window_bounds = array<i64: 8, 128>}]} {
    %cst = arith.constant 0.000000e+00 : bf16
    %0 = vector.broadcast %cst : bf16 to vector<8x4xbf16>
    %c128 = arith.constant 128 : index
    %c0 = arith.constant 0 : index
    %1 = vector.load %arg6[%c128, %c0] : memref<136x4xbf16, #tpu.memory_space<vmem>>, vector<8x4xbf16>
    tpu.vector_store %arg6[%c128, %c0], %0 {strides = array<i32>} : memref<136x4xbf16, #tpu.memory_space<vmem>>, vector<8x4xbf16>,
    %cst_0 = arith.constant 0.000000e+00 : bf16
    %2 = vector.broadcast %cst_0 : bf16 to vector<8x256xbf16>
    %c128_1 = arith.constant 128 : index
    %c0_2 = arith.constant 0 : index
    %3 = vector.load %arg7[%c128_1, %c0_2] : memref<136x256xbf16, #tpu.memory_space<vmem>>, vector<8x256xbf16>
    tpu.vector_store %arg7[%c128_1, %c0_2], %2 {strides = array<i32>} : memref<136x256xbf16, #tpu.memory_space<vmem>>, vector<8x256xbf16>,
    %c0_3 = arith.constant 0 : index
    %c0_4 = arith.constant 0 : index
    %4 = vector.load %arg1[%c0_3, %c0_4] : memref<128x4xbf16, #tpu.memory_space<vmem>>, vector<128x4xbf16>
    %c0_5 = arith.constant 0 : index
    %c0_6 = arith.constant 0 : index
    %5 = vector.load %arg6[%c0_5, %c0_6] : memref<136x4xbf16, #tpu.memory_space<vmem>>, vector<128x4xbf16>
    tpu.vector_store %arg6[%c0_5, %c0_6], %4 {strides = array<i32>} : memref<136x4xbf16, #tpu.memory_space<vmem>>, vector<128x4xbf16>,
    %c0_7 = arith.constant 0 : index
    %c0_8 = arith.constant 0 : index
    %6 = vector.load %arg6[%c0_7, %c0_8] : memref<136x4xbf16, #tpu.memory_space<vmem>>, vector<128x4xbf16>
    %c0_9 = arith.constant 0 : index
    %c0_10 = arith.constant 0 : index
    %c0_11 = arith.constant 0 : index
    %7 = vector.load %arg2[%c0_9, %c0_10, %c0_11] : memref<3x4x256xbf16, #tpu.memory_space<vmem>>, vector<1x4x256xbf16>
    %8 = vector.shape_cast %7 : vector<1x4x256xbf16> to vector<4x256xbf16>
    %cst_12 = arith.constant dense<0.000000e+00> : vector<128x256xf32>
    %9 = tpu.matmul %6, %8, %cst_12 {dimension_numbers = #tpu.dot_dimension_numbers<[1], [0], [0], [1], [0, 0, 1, 1], [], []>} : vector<128x4xbf16>, vector<4x256xbf16>, vector<128x256xf32> -> vector<128x256xf32>
    %c1 = arith.constant 1 : index
    %c0_13 = arith.constant 0 : index
    %10 = vector.load %arg6[%c1, %c0_13] : memref<136x4xbf16, #tpu.memory_space<vmem>>, vector<128x4xbf16>
    %c1_14 = arith.constant 1 : index
    %c0_15 = arith.constant 0 : index
    %c0_16 = arith.constant 0 : index
    %11 = vector.load %arg2[%c1_14, %c0_15, %c0_16] : memref<3x4x256xbf16, #tpu.memory_space<vmem>>, vector<1x4x256xbf16>
    %12 = vector.shape_cast %11 : vector<1x4x256xbf16> to vector<4x256xbf16>
    %cst_17 = arith.constant dense<0.000000e+00> : vector<128x256xf32>
    %13 = tpu.matmul %10, %12, %cst_17 {dimension_numbers = #tpu.dot_dimension_numbers<[1], [0], [0], [1], [0, 0, 1, 1], [], []>} : vector<128x4xbf16>, vector<4x256xbf16>, vector<128x256xf32> -> vector<128x256xf32>
    %14 = arith.addf %9, %13 : vector<128x256xf32>
    %c2 = arith.constant 2 : index
    %c0_18 = arith.constant 0 : index
    %15 = vector.load %arg6[%c2, %c0_18] : memref<136x4xbf16, #tpu.memory_space<vmem>>, vector<128x4xbf16>
    %c2_19 = arith.constant 2 : index
    %c0_20 = arith.constant 0 : index
    %c0_21 = arith.constant 0 : index
    %16 = vector.load %arg2[%c2_19, %c0_20, %c0_21] : memref<3x4x256xbf16, #tpu.memory_space<vmem>>, vector<1x4x256xbf16>
    %17 = vector.shape_cast %16 : vector<1x4x256xbf16> to vector<4x256xbf16>
    %cst_22 = arith.constant dense<0.000000e+00> : vector<128x256xf32>
    %18 = tpu.matmul %15, %17, %cst_22 {dimension_numbers = #tpu.dot_dimension_numbers<[1], [0], [0], [1], [0, 0, 1, 1], [], []>} : vector<128x4xbf16>, vector<4x256xbf16>, vector<128x256xf32> -> vector<128x256xf32>
    %19 = arith.addf %14, %18 : vector<128x256xf32>
    %cst_23 = arith.constant 0.000000e+00 : f32
    %20 = vector.broadcast %cst_23 : f32 to vector<128x256xf32>
    %21 = arith.maximumf %19, %20 : vector<128x256xf32>
    %22 = arith.truncf %21 : vector<128x256xf32> to vector<128x256xbf16>
    %c0_24 = arith.constant 0 : index
    %c0_25 = arith.constant 0 : index
    %23 = vector.load %arg7[%c0_24, %c0_25] : memref<136x256xbf16, #tpu.memory_space<vmem>>, vector<128x256xbf16>
    tpu.vector_store %arg7[%c0_24, %c0_25], %22 {strides = array<i32>} : memref<136x256xbf16, #tpu.memory_space<vmem>>, vector<128x256xbf16>,
    %c0_26 = arith.constant 0 : index
    %c0_27 = arith.constant 0 : index
    %24 = vector.load %arg7[%c0_26, %c0_27] : memref<136x256xbf16, #tpu.memory_space<vmem>>, vector<128x256xbf16>
    %c0_28 = arith.constant 0 : index
    %c0_29 = arith.constant 0 : index
    %c0_30 = arith.constant 0 : index
    %25 = vector.load %arg3[%c0_28, %c0_29, %c0_30] : memref<3x256x256xbf16, #tpu.memory_space<vmem>>, vector<1x256x256xbf16>
    %26 = vector.shape_cast %25 : vector<1x256x256xbf16> to vector<256x256xbf16>
    %cst_31 = arith.constant dense<0.000000e+00> : vector<128x256xf32>
    %27 = tpu.matmul %24, %26, %cst_31 {dimension_numbers = #tpu.dot_dimension_numbers<[1], [0], [0], [1], [0, 0, 1, 1], [], []>} : vector<128x256xbf16>, vector<256x256xbf16>, vector<128x256xf32> -> vector<128x256xf32>
    %c1_32 = arith.constant 1 : index
    %c0_33 = arith.constant 0 : index
    %28 = vector.load %arg7[%c1_32, %c0_33] : memref<136x256xbf16, #tpu.memory_space<vmem>>, vector<128x256xbf16>
    %c1_34 = arith.constant 1 : index
    %c0_35 = arith.constant 0 : index
    %c0_36 = arith.constant 0 : index
    %29 = vector.load %arg3[%c1_34, %c0_35, %c0_36] : memref<3x256x256xbf16, #tpu.memory_space<vmem>>, vector<1x256x256xbf16>
    %30 = vector.shape_cast %29 : vector<1x256x256xbf16> to vector<256x256xbf16>
    %cst_37 = arith.constant dense<0.000000e+00> : vector<128x256xf32>
    %31 = tpu.matmul %28, %30, %cst_37 {dimension_numbers = #tpu.dot_dimension_numbers<[1], [0], [0], [1], [0, 0, 1, 1], [], []>} : vector<128x256xbf16>, vector<256x256xbf16>, vector<128x256xf32> -> vector<128x256xf32>
    %32 = arith.addf %27, %31 : vector<128x256xf32>
    %c2_38 = arith.constant 2 : index
    %c0_39 = arith.constant 0 : index
    %33 = vector.load %arg7[%c2_38, %c0_39] : memref<136x256xbf16, #tpu.memory_space<vmem>>, vector<128x256xbf16>
    %c2_40 = arith.constant 2 : index
    %c0_41 = arith.constant 0 : index
    %c0_42 = arith.constant 0 : index
    %34 = vector.load %arg3[%c2_40, %c0_41, %c0_42] : memref<3x256x256xbf16, #tpu.memory_space<vmem>>, vector<1x256x256xbf16>
    %35 = vector.shape_cast %34 : vector<1x256x256xbf16> to vector<256x256xbf16>
    %cst_43 = arith.constant dense<0.000000e+00> : vector<128x256xf32>
    %36 = tpu.matmul %33, %35, %cst_43 {dimension_numbers = #tpu.dot_dimension_numbers<[1], [0], [0], [1], [0, 0, 1, 1], [], []>} : vector<128x256xbf16>, vector<256x256xbf16>, vector<128x256xf32> -> vector<128x256xf32>
    %37 = arith.addf %32, %36 : vector<128x256xf32>
    %cst_44 = arith.constant 0.000000e+00 : f32
    %38 = vector.broadcast %cst_44 : f32 to vector<128x256xf32>
    %39 = arith.maximumf %37, %38 : vector<128x256xf32>
    %40 = arith.truncf %39 : vector<128x256xf32> to vector<128x256xbf16>
    %c0_45 = arith.constant 0 : index
    %c0_46 = arith.constant 0 : index
    %41 = vector.load %arg7[%c0_45, %c0_46] : memref<136x256xbf16, #tpu.memory_space<vmem>>, vector<128x256xbf16>
    tpu.vector_store %arg7[%c0_45, %c0_46], %40 {strides = array<i32>} : memref<136x256xbf16, #tpu.memory_space<vmem>>, vector<128x256xbf16>,
    %c0_47 = arith.constant 0 : index
    %c0_48 = arith.constant 0 : index
    %42 = vector.load %arg7[%c0_47, %c0_48] : memref<136x256xbf16, #tpu.memory_space<vmem>>, vector<128x256xbf16>
    %c0_49 = arith.constant 0 : index
    %c0_50 = arith.constant 0 : index
    %c0_51 = arith.constant 0 : index
    %43 = vector.load %arg4[%c0_49, %c0_50, %c0_51] : memref<3x256x128xbf16, #tpu.memory_space<vmem>>, vector<1x256x128xbf16>
    %44 = vector.shape_cast %43 : vector<1x256x128xbf16> to vector<256x128xbf16>
    %cst_52 = arith.constant dense<0.000000e+00> : vector<128x128xf32>
    %45 = tpu.matmul %42, %44, %cst_52 {dimension_numbers = #tpu.dot_dimension_numbers<[1], [0], [0], [1], [0, 0, 1, 1], [], []>} : vector<128x256xbf16>, vector<256x128xbf16>, vector<128x128xf32> -> vector<128x128xf32>
    %c1_53 = arith.constant 1 : index
    %c0_54 = arith.constant 0 : index
    %46 = vector.load %arg7[%c1_53, %c0_54] : memref<136x256xbf16, #tpu.memory_space<vmem>>, vector<128x256xbf16>
    %c1_55 = arith.constant 1 : index
    %c0_56 = arith.constant 0 : index
    %c0_57 = arith.constant 0 : index
    %47 = vector.load %arg4[%c1_55, %c0_56, %c0_57] : memref<3x256x128xbf16, #tpu.memory_space<vmem>>, vector<1x256x128xbf16>
    %48 = vector.shape_cast %47 : vector<1x256x128xbf16> to vector<256x128xbf16>
    %cst_58 = arith.constant dense<0.000000e+00> : vector<128x128xf32>
    %49 = tpu.matmul %46, %48, %cst_58 {dimension_numbers = #tpu.dot_dimension_numbers<[1], [0], [0], [1], [0, 0, 1, 1], [], []>} : vector<128x256xbf16>, vector<256x128xbf16>, vector<128x128xf32> -> vector<128x128xf32>
    %50 = arith.addf %45, %49 : vector<128x128xf32>
    %c2_59 = arith.constant 2 : index
    %c0_60 = arith.constant 0 : index
    %51 = vector.load %arg7[%c2_59, %c0_60] : memref<136x256xbf16, #tpu.memory_space<vmem>>, vector<128x256xbf16>
    %c2_61 = arith.constant 2 : index
    %c0_62 = arith.constant 0 : index
    %c0_63 = arith.constant 0 : index
    %52 = vector.load %arg4[%c2_61, %c0_62, %c0_63] : memref<3x256x128xbf16, #tpu.memory_space<vmem>>, vector<1x256x128xbf16>
    %53 = vector.shape_cast %52 : vector<1x256x128xbf16> to vector<256x128xbf16>
    %cst_64 = arith.constant dense<0.000000e+00> : vector<128x128xf32>
    %54 = tpu.matmul %51, %53, %cst_64 {dimension_numbers = #tpu.dot_dimension_numbers<[1], [0], [0], [1], [0, 0, 1, 1], [], []>} : vector<128x256xbf16>, vector<256x128xbf16>, vector<128x128xf32> -> vector<128x128xf32>
    %55 = arith.addf %50, %54 : vector<128x128xf32>
    %cst_65 = arith.constant 0.000000e+00 : f32
    %56 = vector.broadcast %cst_65 : f32 to vector<128x128xf32>
    %57 = arith.maximumf %55, %56 : vector<128x128xf32>
    %c0_66 = arith.constant 0 : index
    %c0_67 = arith.constant 0 : index
    %58 = vector.load %arg8[%c0_66, %c0_67] : memref<128x128xf32, #tpu.memory_space<vmem>>, vector<128x128xf32>
    tpu.vector_store %arg8[%c0_66, %c0_67], %57 {strides = array<i32>} : memref<128x128xf32, #tpu.memory_space<vmem>>, vector<128x128xf32>,
    %59 = tpu.iota {dimensions = array<i32: 0>} : vector<16x128xi32>
    %c10_i32 = arith.constant 10 : i32
    %60 = vector.broadcast %c10_i32 : i32 to vector<16x128xi32>
    %61 = arith.cmpi slt, %59, %60 : vector<16x128xi32>
    %c0_i32 = arith.constant 0 : i32
    %c8_i32 = arith.constant 8 : i32
    %62 = arith.addi %c0_i32, %c8_i32 : i32
    %c1_i32 = arith.constant 1 : i32
    scf.for %arg9 = %c0_i32 to %62 step %c1_i32  : i32 {
      %c16_i32 = arith.constant 16 : i32
      %63 = arith.muli %arg9, %c16_i32 : i32
      %64 = tpu.assume_multiple %63, 8 : i32
      %65 = arith.index_cast %64 : i32 to index
      %c0_69 = arith.constant 0 : index
      %66 = vector.load %arg8[%65, %c0_69] : memref<128x128xf32, #tpu.memory_space<vmem>>, vector<16x128xf32>
      %cst_70 = arith.constant 0.000000e+00 : f32
      %67 = vector.broadcast %cst_70 : f32 to vector<16x128xf32>
      %68 = arith.select %61, %66, %67 : vector<16x128xi1>, vector<16x128xf32>
      %cst_71 = arith.constant dense<0.000000e+00> : vector<128xf32>
      %69 = vector.multi_reduction <add>, %68, %cst_71 [0] : vector<16x128xf32> to vector<128xf32>
      %70 = vector.shape_cast %69 : vector<128xf32> to vector<1x128xf32>
      %71 = arith.index_cast %arg9 : i32 to index
      %c0_72 = arith.constant 0 : index
      %72 = vector.load %arg5[%71, %c0_72] : memref<8x128xf32, #tpu.memory_space<vmem>>, vector<1x128xf32>
      tpu.vector_store %arg5[%71, %c0_72], %70 {strides = array<i32>} : memref<8x128xf32, #tpu.memory_space<vmem>>, vector<1x128xf32>,
    }
    %c8_i32_68 = arith.constant 8 : i32
    return
  }
  func.func @transform_0(%arg0: i32) -> (i32, i32) {
    %c0_i32 = arith.constant 0 : i32
    %c0_i32_0 = arith.constant 0 : i32
    return %arg0, %c0_i32 : i32, i32
  }
  func.func @transform_1(%arg0: i32) -> (i32, i32, i32) {
    %c0_i32 = arith.constant 0 : i32
    %c0_i32_0 = arith.constant 0 : i32
    %c0_i32_1 = arith.constant 0 : i32
    %c0_i32_2 = arith.constant 0 : i32
    return %c0_i32, %c0_i32_0, %c0_i32_1 : i32, i32, i32
  }
  func.func @transform_2(%arg0: i32) -> (i32, i32, i32) {
    %c0_i32 = arith.constant 0 : i32
    %c0_i32_0 = arith.constant 0 : i32
    %c0_i32_1 = arith.constant 0 : i32
    %c0_i32_2 = arith.constant 0 : i32
    return %c0_i32, %c0_i32_0, %c0_i32_1 : i32, i32, i32
  }
  func.func @transform_3(%arg0: i32) -> (i32, i32, i32) {
    %c0_i32 = arith.constant 0 : i32
    %c0_i32_0 = arith.constant 0 : i32
    %c0_i32_1 = arith.constant 0 : i32
    %c0_i32_2 = arith.constant 0 : i32
    return %c0_i32, %c0_i32_0, %c0_i32_1 : i32, i32, i32
  }
  func.func @transform_4(%arg0: i32) -> (i32, i32) {
    %c0_i32 = arith.constant 0 : i32
    %c0_i32_0 = arith.constant 0 : i32
    return %arg0, %c0_i32 : i32, i32
  }
}

</mosaic_0001>

<llo_original>
// kernel: tpu_custom_call.1
$region0: #{tpu_custom_call.1}
  #allocation0 [shape = 'u32[]', space=smem, size = 0x4, offset = 0x4, fixed_abs, tag = 'smem constant byte address 0x4 - core index']
  #allocation1 [shape = 'u32[144,128]{1,0:T(1,128)}', space=vmem, size = 0x12000, scoped, tag = 'internal scratch']
  #allocation2 [shape = 'bf16[136,4]{1,0:T(8,128)(2,1)}', space=vmem, size = 0x8800, scoped, tag = 'scratch operand']
  #allocation3 [shape = 'bf16[136,256]{1,0:T(8,128)(2,1)}', space=vmem, size = 0x11000, scoped, tag = 'scratch operand']
  #allocation4 [shape = 'f32[128,128]{1,0:T(8,128)}', space=vmem, size = 0x10000, scoped, tag = 'scratch operand']
  %s0 = inlined_call_operand.vmem [shape: bf16[128,4], index: 0, kind: input, shape index: {}]
  %s1 = inlined_call_operand.vmem [shape: bf16[3,4,256], index: 1, kind: input, shape index: {}]
  %s2 = inlined_call_operand.hbm [shape: bf16[3,256,256], index: 2, kind: input, shape index: {}]
  %s3 = inlined_call_operand.hbm [shape: bf16[3,256,128], index: 3, kind: input, shape index: {}]
  %s4 = inlined_call_operand.hbm [shape: f32[8,128], index: 4, kind: output, shape index: {}]
  %s5 = sld [smem:[#allocation0]]
  $region41: #{tpu_custom_call.1} parent=0
    _
  %s7 = ssub.s32 1, %s5
  %s8 = scalar_select 0, %s7, %s5
  $region1: #{tpu_custom_call.1} parent=0
    #allocation5 [shape = 'u8[393216]{0}', space=vmem, size = 0x60000, scoped, tag = 'input window, operand 2, single buffered']
    #allocation6 [shape = 's32[1]{0}', space=sflag, size = 0x4, scoped, tag = 'scoped memory for tpu_custom_call.1']
    #allocation7 [shape = 's32[1]{0}', space=sflag, size = 0x4, scoped, tag = 'scoped memory for tpu_custom_call.1']
    #allocation8 [shape = 'u8[196608]{0}', space=vmem, size = 0x30000, scoped, tag = 'input window, operand 3, single buffered']
    #allocation9 [shape = 's32[1]{0}', space=sflag, size = 0x4, scoped, tag = 'scoped memory for tpu_custom_call.1']
    #allocation10 [shape = 'u8[4096]{0}', space=vmem, size = 0x1000, scoped, tag = 'output window, operand 0, single buffered']
    %9 = vsyncpa [#allocation6], 0
    %10 = vsyncpa [#allocation9], 0
    %11 = vsyncpa [#allocation7], 0
    // Predicated region
    $region2: #{tpu_custom_call.1} parent=1 // pred_check
      _
    $region3: #{tpu_custom_call.1} parent=1 // pred_check_branch
      %13 = sbr.rel (0) target = $region5
    $region4: #{tpu_custom_call.1} parent=1 // pred_region
      _
    $region5: #{tpu_custom_call.1} parent=1 // pred_fallthru
      _
    // Predicated region
    $region6: #{tpu_custom_call.1} parent=1 // pred_check
      _
    $region7: #{tpu_custom_call.1} parent=1 // pred_check_branch
      %15 = sbr.rel (0) target = $region9
    $region8: #{tpu_custom_call.1} parent=1 // pred_region
      _
    $region9: #{tpu_custom_call.1} parent=1 // pred_fallthru
      _
    // Predicated region
    $region10: #{tpu_custom_call.1} parent=1 // pred_check
      _
    $region11: #{tpu_custom_call.1} parent=1 // pred_check_branch
      %17 = sbr.rel (0) target = $region13
    $region12: #{tpu_custom_call.1} parent=1 // pred_region
      %s19 = ssub.s32 12288, 12288
      %20 = vsyncadd [#allocation6], %s19
      %s21 = sshll.u32 [#allocation5], 4
      %s22 = int_to_ptr.vmem [resolvable:$true] %s21
      %27 = dma.hbm_to_vmem [thread:$0]  %s2, 12288, %s22, [#allocation6], 128, 128, 8
    $region13: #{tpu_custom_call.1} parent=1 // pred_fallthru
      _
    // Predicated region
    $region14: #{tpu_custom_call.1} parent=1 // pred_check
      _
    $region15: #{tpu_custom_call.1} parent=1 // pred_check_branch
      %29 = sbr.rel (0) target = $region17
    $region16: #{tpu_custom_call.1} parent=1 // pred_region
      %s31 = ssub.s32 6144, 6144
      %32 = vsyncadd [#allocation9], %s31
      %s33 = sshll.u32 [#allocation8], 4
      %s34 = int_to_ptr.vmem [resolvable:$true] %s33
      %39 = dma.hbm_to_vmem [thread:$0]  %s3, 6144, %s34, [#allocation9], 64, 64, 4
    $region17: #{tpu_custom_call.1} parent=1 // pred_fallthru
      _
    // Predicated region
    $region18: #{tpu_custom_call.1} parent=1 // pred_check
      _
    $region19: #{tpu_custom_call.1} parent=1 // pred_check_branch
      %41 = sbr.rel (0) target = $region21
    $region20: #{tpu_custom_call.1} parent=1 // pred_region
      %42 = dma.done [#allocation6], 12288
    $region21: #{tpu_custom_call.1} parent=1 // pred_fallthru
      _
    // Predicated region
    $region22: #{tpu_custom_call.1} parent=1 // pred_check
      _
    $region23: #{tpu_custom_call.1} parent=1 // pred_check_branch
      %44 = sbr.rel (0) target = $region25
    $region24: #{tpu_custom_call.1} parent=1 // pred_region
      %45 = dma.done [#allocation9], 6144
    $region25: #{tpu_custom_call.1} parent=1 // pred_fallthru
      _
    %vm47 = vcmask 27648
    %48 = vst.msk [vmem:[#allocation2 + $0x40] sm:$0xf] %vm47, 0
    %49 = vst [vmem:[#allocation3 + $0x80] sm:$0xff] 0
    %v50 = vld [vmem:[%s0] sm:$0xf]
    %v51 = vld [vmem:[%s0 + $0x4] sm:$0xf]
    %v52 = vld [vmem:[%s0 + $0x8] sm:$0xf]
    %v53 = vld [vmem:[%s0 + $0xc] sm:$0xf]
    %v54 = vld [vmem:[%s0 + $0x10] sm:$0xf]
    %v55 = vld [vmem:[%s0 + $0x14] sm:$0xf]
    %v56 = vld [vmem:[%s0 + $0x18] sm:$0xf]
    %v57 = vld [vmem:[%s0 + $0x1c] sm:$0xf]
    %v58 = vld [vmem:[%s0 + $0x20] sm:$0xf]
    %v59 = vld [vmem:[%s0 + $0x24] sm:$0xf]
    %v60 = vld [vmem:[%s0 + $0x28] sm:$0xf]
    %v61 = vld [vmem:[%s0 + $0x2c] sm:$0xf]
    %v62 = vld [vmem:[%s0 + $0x30] sm:$0xf]
    %v63 = vld [vmem:[%s0 + $0x34] sm:$0xf]
    %v64 = vld [vmem:[%s0 + $0x38] sm:$0xf]
    %v65 = vld [vmem:[%s0 + $0x3c] sm:$0xf]
    %66 = vst.msk [vmem:[#allocation2] sm:$0xf] %vm47, %v50
    %67 = vst.msk [vmem:[#allocation2 + $0x4] sm:$0xf] %vm47, %v51
    %68 = vst.msk [vmem:[#allocation2 + $0x8] sm:$0xf] %vm47, %v52
    %69 = vst.msk [vmem:[#allocation2 + $0xc] sm:$0xf] %vm47, %v53
    %70 = vst.msk [vmem:[#allocation2 + $0x10] sm:$0xf] %vm47, %v54
    %71 = vst.msk [vmem:[#allocation2 + $0x14] sm:$0xf] %vm47, %v55
    %72 = vst.msk [vmem:[#allocation2 + $0x18] sm:$0xf] %vm47, %v56
    %73 = vst.msk [vmem:[#allocation2 + $0x1c] sm:$0xf] %vm47, %v57
    %74 = vst.msk [vmem:[#allocation2 + $0x20] sm:$0xf] %vm47, %v58
    %75 = vst.msk [vmem:[#allocation2 + $0x24] sm:$0xf] %vm47, %v59
    %76 = vst.msk [vmem:[#allocation2 + $0x28] sm:$0xf] %vm47, %v60
    %77 = vst.msk [vmem:[#allocation2 + $0x2c] sm:$0xf] %vm47, %v61
    %78 = vst.msk [vmem:[#allocation2 + $0x30] sm:$0xf] %vm47, %v62
    %79 = vst.msk [vmem:[#allocation2 + $0x34] sm:$0xf] %vm47, %v63
    %80 = vst.msk [vmem:[#allocation2 + $0x38] sm:$0xf] %vm47, %v64
    %81 = vst.msk [vmem:[#allocation2 + $0x3c] sm:$0xf] %vm47, %v65
    %v82 = vld [vmem:[#allocation2] sm:$0xf]
    %v83 = vld [vmem:[#allocation2 + $0x4] sm:$0xf]
    %v84 = vld [vmem:[#allocation2 + $0x8] sm:$0xf]
    %v85 = vld [vmem:[#allocation2 + $0xc] sm:$0xf]
    %v86 = vld [vmem:[#allocation2 + $0x10] sm:$0xf]
    %v87 = vld [vmem:[#allocation2 + $0x14] sm:$0xf]
    %v88 = vld [vmem:[#allocation2 + $0x18] sm:$0xf]
    %v89 = vld [vmem:[#allocation2 + $0x1c] sm:$0xf]
    %v90 = vld [vmem:[#allocation2 + $0x20] sm:$0xf]
    %v91 = vld [vmem:[#allocation2 + $0x24] sm:$0xf]
    %v92 = vld [vmem:[#allocation2 + $0x28] sm:$0xf]
    %v93 = vld [vmem:[#allocation2 + $0x2c] sm:$0xf]
    %v94 = vld [vmem:[#allocation2 + $0x30] sm:$0xf]
    %v95 = vld [vmem:[#allocation2 + $0x34] sm:$0xf]
    %v96 = vld [vmem:[#allocation2 + $0x38] sm:$0xf]
    %v97 = vld [vmem:[#allocation2 + $0x3c] sm:$0xf]
    %v98 = vld [vmem:[%s1] sm:$0xf]
    %v99 = vld [vmem:[#allocation2 + $0x40] sm:$0x1]
    %s100 = scalar_lea.vmem %s1, 4
    %v101 = vld [vmem:[%s100] sm:$0xf]
    %v119 = vunpack.c.l.b16 %v82
    %v120 = vunpack.c.l.b16 %v83
    %v121 = vunpack.c.l.b16 %v84
    %v122 = vunpack.c.l.b16 %v85
    %v123 = vunpack.c.l.b16 %v86
    %v124 = vunpack.c.l.b16 %v87
    %v125 = vunpack.c.l.b16 %v88
    %v126 = vunpack.c.l.b16 %v89
    %v127 = vunpack.c.l.b16 %v90
    %v128 = vunpack.c.l.b16 %v91
    %v129 = vunpack.c.l.b16 %v92
    %v130 = vunpack.c.l.b16 %v93
    %v131 = vunpack.c.l.b16 %v94
    %v132 = vunpack.c.l.b16 %v95
    %v133 = vunpack.c.l.b16 %v96
    %v134 = vunpack.c.l.b16 %v97
    %v135 = vunpack.c.l.b16 %v99
    %v136 = vpack.c.b16 %v120, %v119
    %v137 = vpack.c.b16 %v122, %v121
    %v138 = vpack.c.b16 %v124, %v123
    %v139 = vpack.c.b16 %v126, %v125
    %v140 = vpack.c.b16 %v128, %v127
    %v141 = vpack.c.b16 %v130, %v129
    %v142 = vpack.c.b16 %v132, %v131
    %v143 = vpack.c.b16 %v134, %v133
    %v144 = vpack.c.b16 %v135, %v135
    %vm145 = vsmask.f32 7424
    %v147 = vshrl.u32 %v136, 16
    %v149 = vshll.u32 %v136, 16
    %v151 = vrot.slane %v149, 1
    %v152 = vor.u32 %v147, %v151
    %v154 = vshll.u32 %v137, 16
    %v156 = vrot.slane %v154, 1
    %v157 = vsel %vm145, %v152, %v156
    %v158 = vshrl.u32 %v137, 16
    %v160 = vor.u32 %v158, %v156
    %v162 = vshll.u32 %v138, 16
    %v164 = vrot.slane %v162, 1
    %v165 = vsel %vm145, %v160, %v164
    %v166 = vshrl.u32 %v138, 16
    %v168 = vor.u32 %v166, %v164
    %v170 = vshll.u32 %v139, 16
    %v172 = vrot.slane %v170, 1
    %v173 = vsel %vm145, %v168, %v172
    %v174 = vshrl.u32 %v139, 16
    %v176 = vor.u32 %v174, %v172
    %v178 = vshll.u32 %v140, 16
    %v180 = vrot.slane %v178, 1
    %v181 = vsel %vm145, %v176, %v180
    %v182 = vshrl.u32 %v140, 16
    %v184 = vor.u32 %v182, %v180
    %v186 = vshll.u32 %v141, 16
    %v188 = vrot.slane %v186, 1
    %v189 = vsel %vm145, %v184, %v188
    %v190 = vshrl.u32 %v141, 16
    %v192 = vor.u32 %v190, %v188
    %v194 = vshll.u32 %v142, 16
    %v196 = vrot.slane %v194, 1
    %v197 = vsel %vm145, %v192, %v196
    %v198 = vshrl.u32 %v142, 16
    %v200 = vor.u32 %v198, %v196
    %v202 = vshll.u32 %v143, 16
    %v204 = vrot.slane %v202, 1
    %v205 = vsel %vm145, %v200, %v204
    %v206 = vshrl.u32 %v143, 16
    %v208 = vor.u32 %v206, %v204
    %v210 = vshll.u32 %v144, 16
    %v212 = vrot.slane %v210, 1
    %v213 = vsel %vm145, %v208, %v212
    %v216 = vunpack.c.l.s4 1983009808
    %v217 = vunpack.c.0.s8 %v216
    %v218 = vlaneseq
    %v219 = vshrl.u32 %v218, 7
    %v220 = vsub.s32 %v217, %v219
    %v221 = vrot.slane %v101, %v220
    %v222 = vcombine.high %v221, %v221
    %vm223 = vcmask 31744
    %v225 = vsel %vm223, %v157, 0
    %v228 = vsel %vm223, %v165, 0
    %v231 = vsel %vm223, %v173, 0
    %v234 = vsel %vm223, %v181, 0
    %v237 = vsel %vm223, %v189, 0
    %v240 = vsel %vm223, %v197, 0
    %v243 = vsel %vm223, %v205, 0
    %v246 = vsel %vm223, %v213, 0
    %vm248 = vcmask 1041408
    %v250 = vsel %vm248, %v221, 0
    %v253 = vsel %vm248, %v222, 0
    %255 = vmatprep.subr.bf16.mxu0 0
    %256 = vmatpush1.bf16.msra.mxu0 0
    %257 = vmatprep.subr.bf16.mxu0 0
    %258 = vmatpush1.bf16.msra.mxu0 0
    %259 = vmatprep.subr.bf16.mxu0 0
    %260 = vmatpush1.bf16.msra.mxu0 0
    %261 = vmatprep.subr.bf16.mxu0 0
    %262 = vmatpush1.bf16.msra.mxu0 0
    %263 = vmatprep.subr.bf16.mxu0 0
    %264 = vmatpush1.bf16.msra.mxu0 0
    %265 = vmatprep.subr.bf16.mxu0 0
    %266 = vmatpush1.bf16.msra.mxu0 0
    %267 = vmatprep.subr.bf16.mxu0 0
    %268 = vmatpush1.bf16.msra.mxu0 0
    %269 = vmatprep.subr.bf16.mxu0 %v253
    %270 = vmatpush1.bf16.msra.mxu0 %v250
    %271 = vmatprep.subr.bf16.mxu0 0
    %272 = vmatpush2.bf16.msra.mxu0 0
    %273 = vmatprep.subr.bf16.mxu0 0
    %274 = vmatpush2.bf16.msra.mxu0 0
    %275 = vmatprep.subr.bf16.mxu0 0
    %276 = vmatpush2.bf16.msra.mxu0 0
    %277 = vmatprep.subr.bf16.mxu0 0
    %278 = vmatpush2.bf16.msra.mxu0 0
    %279 = vmatprep.subr.bf16.mxu0 0
    %280 = vmatpush2.bf16.msra.mxu0 0
    %281 = vmatprep.subr.bf16.mxu0 0
    %282 = vmatpush2.bf16.msra.mxu0 0
    %283 = vmatprep.subr.bf16.mxu0 0
    %284 = vmatpush2.bf16.msra.mxu0 0
    %285 = vmatprep.subr.bf16.mxu0 0
    %286 = vmatpush2.bf16.msra.mxu0 0
    %287 = vmatprep.mubr.bf16.mxu0 0
    %288 = vmatmul.mubr.bf16.gmra.mxu0 %v225
    %v289 = vpop.f32.mrf.mxu0
    %v290 = vadd.f32 0.0, %v289
    %v291 = vpop.f32.mrf.mxu0
    %v292 = vadd.f32 0.0, %v291
    %v293 = vpop.f32.mrf.mxu0
    %v294 = vadd.f32 0.0, %v293
    %v295 = vpop.f32.mrf.mxu0
    %v296 = vadd.f32 0.0, %v295
    %297 = vmatprep.mubr.bf16.mxu0 0
    %298 = vmatmul.mubr.bf16.gmra.mxu0 %v228
    %v299 = vpop.f32.mrf.mxu0
    %v300 = vadd.f32 0.0, %v299
    %v301 = vpop.f32.mrf.mxu0
    %v302 = vadd.f32 0.0, %v301
    %v303 = vpop.f32.mrf.mxu0
    %v304 = vadd.f32 0.0, %v303
    %v305 = vpop.f32.mrf.mxu0
    %v306 = vadd.f32 0.0, %v305
    %307 = vmatprep.mubr.bf16.mxu0 0
    %308 = vmatmul.mubr.bf16.gmra.mxu0 %v231
    %v309 = vpop.f32.mrf.mxu0
    %v310 = vadd.f32 0.0, %v309
    %v311 = vpop.f32.mrf.mxu0
    %v312 = vadd.f32 0.0, %v311
    %v313 = vpop.f32.mrf.mxu0
    %v314 = vadd.f32 0.0, %v313
    %v315 = vpop.f32.mrf.mxu0
    %v316 = vadd.f32 0.0, %v315
    %317 = vmatprep.mubr.bf16.mxu0 0
    %318 = vmatmul.mubr.bf16.gmra.mxu0 %v234
    %v319 = vpop.f32.mrf.mxu0
    %v320 = vadd.f32 0.0, %v319
    %v321 = vpop.f32.mrf.mxu0
    %v322 = vadd.f32 0.0, %v321
    %v323 = vpop.f32.mrf.mxu0
    %v324 = vadd.f32 0.0, %v323
    %v325 = vpop.f32.mrf.mxu0
    %v326 = vadd.f32 0.0, %v325
    %327 = vmatprep.mubr.bf16.mxu0 0
    %328 = vmatmul.mubr.bf16.gmra.mxu0 %v237
    %v329 = vpop.f32.mrf.mxu0
    %v330 = vadd.f32 0.0, %v329
    %v331 = vpop.f32.mrf.mxu0
    %v332 = vadd.f32 0.0, %v331
    %v333 = vpop.f32.mrf.mxu0
    %v334 = vadd.f32 0.0, %v333
    %v335 = vpop.f32.mrf.mxu0
    %v336 = vadd.f32 0.0, %v335
    %337 = vmatprep.mubr.bf16.mxu0 0
    %338 = vmatmul.mubr.bf16.gmra.mxu0 %v240
    %v339 = vpop.f32.mrf.mxu0
    %v340 = vadd.f32 0.0, %v339
    %v341 = vpop.f32.mrf.mxu0
    %v342 = vadd.f32 0.0, %v341
    %v343 = vpop.f32.mrf.mxu0
    %v344 = vadd.f32 0.0, %v343
    %v345 = vpop.f32.mrf.mxu0
    %v346 = vadd.f32 0.0, %v345
    %347 = vmatprep.mubr.bf16.mxu0 0
    %348 = vmatmul.mubr.bf16.gmra.mxu0 %v243
    %v349 = vpop.f32.mrf.mxu0
    %v350 = vadd.f32 0.0, %v349
    %v351 = vpop.f32.mrf.mxu0
    %v352 = vadd.f32 0.0, %v351
    %v353 = vpop.f32.mrf.mxu0
    %v354 = vadd.f32 0.0, %v353
    %v355 = vpop.f32.mrf.mxu0
    %v356 = vadd.f32 0.0, %v355
    %357 = vmatprep.mubr.bf16.mxu0 0
    %358 = vmatmul.mubr.bf16.gmra.mxu0 %v246
    %v359 = vpop.f32.mrf.mxu0
    %v360 = vadd.f32 0.0, %v359
    %v361 = vpop.f32.mrf.mxu0
    %v362 = vadd.f32 0.0, %v361
    %v363 = vpop.f32.mrf.mxu0
    %v364 = vadd.f32 0.0, %v363
    %v365 = vpop.f32.mrf.mxu0
    %v366 = vadd.f32 0.0, %v365
    %367 = vdwg.mxu0
    %v370 = vunpack.c.l.s4 1983009808
    %v371 = vunpack.c.0.s8 %v370
    %v372 = vlaneseq
    %v373 = vshrl.u32 %v372, 7
    %v374 = vsub.s32 %v371, %v373
    %v375 = vrot.slane %v98, %v374
    %v376 = vcombine.high %v375, %v375
    %v377 = vsel %vm223, %v136, 0
    %v379 = vsel %vm223, %v137, 0
    %v381 = vsel %vm223, %v138, 0
    %v383 = vsel %vm223, %v139, 0
    %v385 = vsel %vm223, %v140, 0
    %v387 = vsel %vm223, %v141, 0
    %v389 = vsel %vm223, %v142, 0
    %v391 = vsel %vm223, %v143, 0
    %v394 = vsel %vm248, %v375, 0
    %v397 = vsel %vm248, %v376, 0
    %399 = vmatprep.subr.bf16.mxu0 0
    %400 = vmatpush1.bf16.msra.mxu0 0
    %401 = vmatprep.subr.bf16.mxu0 0
    %402 = vmatpush1.bf16.msra.mxu0 0
    %403 = vmatprep.subr.bf16.mxu0 0
    %404 = vmatpush1.bf16.msra.mxu0 0
    %405 = vmatprep.subr.bf16.mxu0 0
    %406 = vmatpush1.bf16.msra.mxu0 0
    %407 = vmatprep.subr.bf16.mxu0 0
    %408 = vmatpush1.bf16.msra.mxu0 0
    %409 = vmatprep.subr.bf16.mxu0 0
    %410 = vmatpush1.bf16.msra.mxu0 0
    %411 = vmatprep.subr.bf16.mxu0 0
    %412 = vmatpush1.bf16.msra.mxu0 0
    %413 = vmatprep.subr.bf16.mxu0 %v397
    %414 = vmatpush1.bf16.msra.mxu0 %v394
    %415 = vmatprep.subr.bf16.mxu0 0
    %416 = vmatpush2.bf16.msra.mxu0 0
    %417 = vmatprep.subr.bf16.mxu0 0
    %418 = vmatpush2.bf16.msra.mxu0 0
    %419 = vmatprep.subr.bf16.mxu0 0
    %420 = vmatpush2.bf16.msra.mxu0 0
    %421 = vmatprep.subr.bf16.mxu0 0
    %422 = vmatpush2.bf16.msra.mxu0 0
    %423 = vmatprep.subr.bf16.mxu0 0
    %424 = vmatpush2.bf16.msra.mxu0 0
    %425 = vmatprep.subr.bf16.mxu0 0
    %426 = vmatpush2.bf16.msra.mxu0 0
    %427 = vmatprep.subr.bf16.mxu0 0
    %428 = vmatpush2.bf16.msra.mxu0 0
    %429 = vmatprep.subr.bf16.mxu0 0
    %430 = vmatpush2.bf16.msra.mxu0 0
    %431 = vmatprep.mubr.bf16.mxu0 0
    %432 = vmatmul.mubr.bf16.gmra.mxu0 %v377
    %v433 = vpop.f32.mrf.mxu0
    %v434 = vadd.f32 %v290, %v433
    %v435 = vpop.f32.mrf.mxu0
    %v436 = vadd.f32 %v292, %v435
    %v437 = vpop.f32.mrf.mxu0
    %v438 = vadd.f32 %v294, %v437
    %v439 = vpop.f32.mrf.mxu0
    %v440 = vadd.f32 %v296, %v439
    %441 = vmatprep.mubr.bf16.mxu0 0
    %442 = vmatmul.mubr.bf16.gmra.mxu0 %v379
    %v443 = vpop.f32.mrf.mxu0
    %v444 = vadd.f32 %v300, %v443
    %v445 = vpop.f32.mrf.mxu0
    %v446 = vadd.f32 %v302, %v445
    %v447 = vpop.f32.mrf.mxu0
    %v448 = vadd.f32 %v304, %v447
    %v449 = vpop.f32.mrf.mxu0
    %v450 = vadd.f32 %v306, %v449
    %451 = vmatprep.mubr.bf16.mxu0 0
    %452 = vmatmul.mubr.bf16.gmra.mxu0 %v381
    %v453 = vpop.f32.mrf.mxu0
    %v454 = vadd.f32 %v310, %v453
    %v455 = vpop.f32.mrf.mxu0
    %v456 = vadd.f32 %v312, %v455
    %v457 = vpop.f32.mrf.mxu0
    %v458 = vadd.f32 %v314, %v457
    %v459 = vpop.f32.mrf.mxu0
    %v460 = vadd.f32 %v316, %v459
    %461 = vmatprep.mubr.bf16.mxu0 0
    %462 = vmatmul.mubr.bf16.gmra.mxu0 %v383
    %v463 = vpop.f32.mrf.mxu0
    %v464 = vadd.f32 %v320, %v463
    %v465 = vpop.f32.mrf.mxu0
    %v466 = vadd.f32 %v322, %v465
    %v467 = vpop.f32.mrf.mxu0
    %v468 = vadd.f32 %v324, %v467
    %v469 = vpop.f32.mrf.mxu0
    %v470 = vadd.f32 %v326, %v469
    %471 = vmatprep.mubr.bf16.mxu0 0
    %472 = vmatmul.mubr.bf16.gmra.mxu0 %v385
    %v473 = vpop.f32.mrf.mxu0
    %v474 = vadd.f32 %v330, %v473
    %v475 = vpop.f32.mrf.mxu0
    %v476 = vadd.f32 %v332, %v475
    %v477 = vpop.f32.mrf.mxu0
    %v478 = vadd.f32 %v334, %v477
    %v479 = vpop.f32.mrf.mxu0
    %v480 = vadd.f32 %v336, %v479
    %481 = vmatprep.mubr.bf16.mxu0 0
    %482 = vmatmul.mubr.bf16.gmra.mxu0 %v387
    %v483 = vpop.f32.mrf.mxu0
    %v484 = vadd.f32 %v340, %v483
    %v485 = vpop.f32.mrf.mxu0
    %v486 = vadd.f32 %v342, %v485
    %v487 = vpop.f32.mrf.mxu0
    %v488 = vadd.f32 %v344, %v487
    %v489 = vpop.f32.mrf.mxu0
    %v490 = vadd.f32 %v346, %v489
    %491 = vmatprep.mubr.bf16.mxu0 0
    %492 = vmatmul.mubr.bf16.gmra.mxu0 %v389
    %v493 = vpop.f32.mrf.mxu0
    %v494 = vadd.f32 %v350, %v493
    %v495 = vpop.f32.mrf.mxu0
    %v496 = vadd.f32 %v352, %v495
    %v497 = vpop.f32.mrf.mxu0
    %v498 = vadd.f32 %v354, %v497
    %v499 = vpop.f32.mrf.mxu0
    %v500 = vadd.f32 %v356, %v499
    %501 = vmatprep.mubr.bf16.mxu0 0
    %502 = vmatmul.mubr.bf16.gmra.mxu0 %v391
    %v503 = vpop.f32.mrf.mxu0
    %v504 = vadd.f32 %v360, %v503
    %v505 = vpop.f32.mrf.mxu0
    %v506 = vadd.f32 %v362, %v505
    %v507 = vpop.f32.mrf.mxu0
    %v508 = vadd.f32 %v364, %v507
    %v509 = vpop.f32.mrf.mxu0
    %v510 = vadd.f32 %v366, %v509
    %511 = vdwg.mxu0
    %v512 = vld [vmem:[#allocation2] sm:$0xe]
    %v513 = vld [vmem:[#allocation2 + $0x4] sm:$0xf]
    %v514 = vld [vmem:[#allocation2 + $0x8] sm:$0xf]
    %v515 = vld [vmem:[#allocation2 + $0xc] sm:$0xf]
    %v516 = vld [vmem:[#allocation2 + $0x10] sm:$0xf]
    %v517 = vld [vmem:[#allocation2 + $0x14] sm:$0xf]
    %v518 = vld [vmem:[#allocation2 + $0x18] sm:$0xf]
    %v519 = vld [vmem:[#allocation2 + $0x1c] sm:$0xf]
    %v520 = vld [vmem:[#allocation2 + $0x20] sm:$0xf]
    %v521 = vld [vmem:[#allocation2 + $0x24] sm:$0xf]
    %v522 = vld [vmem:[#allocation2 + $0x28] sm:$0xf]
    %v523 = vld [vmem:[#allocation2 + $0x2c] sm:$0xf]
    %v524 = vld [vmem:[#allocation2 + $0x30] sm:$0xf]
    %v525 = vld [vmem:[#allocation2 + $0x34] sm:$0xf]
    %v526 = vld [vmem:[#allocation2 + $0x38] sm:$0xf]
    %v527 = vld [vmem:[#allocation2 + $0x3c] sm:$0xf]
    %v528 = vld [vmem:[#allocation2 + $0x40] sm:$0x1]
    %s529 = scalar_lea.vmem %s1, 8
    %v530 = vld [vmem:[%s529] sm:$0xf]
    %v548 = vunpack.c.l.b16 %v512
    %v549 = vunpack.c.l.b16 %v513
    %v550 = vunpack.c.l.b16 %v514
    %v551 = vunpack.c.l.b16 %v515
    %v552 = vunpack.c.l.b16 %v516
    %v553 = vunpack.c.l.b16 %v517
    %v554 = vunpack.c.l.b16 %v518
    %v555 = vunpack.c.l.b16 %v519
    %v556 = vunpack.c.l.b16 %v520
    %v557 = vunpack.c.l.b16 %v521
    %v558 = vunpack.c.l.b16 %v522
    %v559 = vunpack.c.l.b16 %v523
    %v560 = vunpack.c.l.b16 %v524
    %v561 = vunpack.c.l.b16 %v525
    %v562 = vunpack.c.l.b16 %v526
    %v563 = vunpack.c.l.b16 %v527
    %v564 = vunpack.c.l.b16 %v528
    %v565 = vpack.c.b16 %v549, %v548
    %v566 = vpack.c.b16 %v551, %v550
    %v567 = vpack.c.b16 %v553, %v552
    %v568 = vpack.c.b16 %v555, %v554
    %v569 = vpack.c.b16 %v557, %v556
    %v570 = vpack.c.b16 %v559, %v558
    %v571 = vpack.c.b16 %v561, %v560
    %v572 = vpack.c.b16 %v563, %v562
    %v573 = vpack.c.b16 %v564, %v564
    %vm574 = vcmask 1046528
    %v575 = vrot.slane %v565, 1
    %v576 = vrot.slane %v566, 1
    %v577 = vsel %vm574, %v575, %v576
    %v578 = vrot.slane %v567, 1
    %v579 = vsel %vm574, %v576, %v578
    %v580 = vrot.slane %v568, 1
    %v581 = vsel %vm574, %v578, %v580
    %v582 = vrot.slane %v569, 1
    %v583 = vsel %vm574, %v580, %v582
    %v584 = vrot.slane %v570, 1
    %v585 = vsel %vm574, %v582, %v584
    %v586 = vrot.slane %v571, 1
    %v587 = vsel %vm574, %v584, %v586
    %v588 = vrot.slane %v572, 1
    %v589 = vsel %vm574, %v586, %v588
    %v590 = vrot.slane %v573, 1
    %v591 = vsel %vm574, %v588, %v590
    %v594 = vunpack.c.l.s4 1983009808
    %v595 = vunpack.c.0.s8 %v594
    %v596 = vlaneseq
    %v597 = vshrl.u32 %v596, 7
    %v598 = vsub.s32 %v595, %v597
    %v599 = vrot.slane %v530, %v598
    %v600 = vcombine.high %v599, %v599
    %v602 = vsel %vm223, %v577, 0
    %v605 = vsel %vm223, %v579, 0
    %v608 = vsel %vm223, %v581, 0
    %v611 = vsel %vm223, %v583, 0
    %v614 = vsel %vm223, %v585, 0
    %v617 = vsel %vm223, %v587, 0
    %v620 = vsel %vm223, %v589, 0
    %v623 = vsel %vm223, %v591, 0
    %v626 = vsel %vm248, %v599, 0
    %v629 = vsel %vm248, %v600, 0
    %631 = vmatprep.subr.bf16.mxu0 0
    %632 = vmatpush1.bf16.msra.mxu0 0
    %633 = vmatprep.subr.bf16.mxu0 0
    %634 = vmatpush1.bf16.msra.mxu0 0
    %635 = vmatprep.subr.bf16.mxu0 0
    %636 = vmatpush1.bf16.msra.mxu0 0
    %637 = vmatprep.subr.bf16.mxu0 0
    %638 = vmatpush1.bf16.msra.mxu0 0
    %639 = vmatprep.subr.bf16.mxu0 0
    %640 = vmatpush1.bf16.msra.mxu0 0
    %641 = vmatprep.subr.bf16.mxu0 0
    %642 = vmatpush1.bf16.msra.mxu0 0
    %643 = vmatprep.subr.bf16.mxu0 0
    %644 = vmatpush1.bf16.msra.mxu0 0
    %645 = vmatprep.subr.bf16.mxu0 %v629
    %646 = vmatpush1.bf16.msra.mxu0 %v626
    %647 = vmatprep.subr.bf16.mxu0 0
    %648 = vmatpush2.bf16.msra.mxu0 0
    %649 = vmatprep.subr.bf16.mxu0 0
    %650 = vmatpush2.bf16.msra.mxu0 0
    %651 = vmatprep.subr.bf16.mxu0 0
    %652 = vmatpush2.bf16.msra.mxu0 0
    %653 = vmatprep.subr.bf16.mxu0 0
    %654 = vmatpush2.bf16.msra.mxu0 0
    %655 = vmatprep.subr.bf16.mxu0 0
    %656 = vmatpush2.bf16.msra.mxu0 0
    %657 = vmatprep.subr.bf16.mxu0 0
    %658 = vmatpush2.bf16.msra.mxu0 0
    %659 = vmatprep.subr.bf16.mxu0 0
    %660 = vmatpush2.bf16.msra.mxu0 0
    %661 = vmatprep.subr.bf16.mxu0 0
    %662 = vmatpush2.bf16.msra.mxu0 0
    %663 = vmatprep.mubr.bf16.mxu0 0
    %664 = vmatmul.mubr.bf16.gmra.mxu0 %v602
    %v665 = vpop.f32.mrf.mxu0
    %v666 = vadd.f32 0.0, %v665
    %v667 = vpop.f32.mrf.mxu0
    %v668 = vadd.f32 0.0, %v667
    %v669 = vpop.f32.mrf.mxu0
    %v670 = vadd.f32 0.0, %v669
    %v671 = vpop.f32.mrf.mxu0
    %v672 = vadd.f32 0.0, %v671
    %673 = vmatprep.mubr.bf16.mxu0 0
    %674 = vmatmul.mubr.bf16.gmra.mxu0 %v605
    %v675 = vpop.f32.mrf.mxu0
    %v676 = vadd.f32 0.0, %v675
    %v677 = vpop.f32.mrf.mxu0
    %v678 = vadd.f32 0.0, %v677
    %v679 = vpop.f32.mrf.mxu0
    %v680 = vadd.f32 0.0, %v679
    %v681 = vpop.f32.mrf.mxu0
    %v682 = vadd.f32 0.0, %v681
    %683 = vmatprep.mubr.bf16.mxu0 0
    %684 = vmatmul.mubr.bf16.gmra.mxu0 %v608
    %v685 = vpop.f32.mrf.mxu0
    %v686 = vadd.f32 0.0, %v685
    %v687 = vpop.f32.mrf.mxu0
    %v688 = vadd.f32 0.0, %v687
    %v689 = vpop.f32.mrf.mxu0
    %v690 = vadd.f32 0.0, %v689
    %v691 = vpop.f32.mrf.mxu0
    %v692 = vadd.f32 0.0, %v691
    %693 = vmatprep.mubr.bf16.mxu0 0
    %694 = vmatmul.mubr.bf16.gmra.mxu0 %v611
    %v695 = vpop.f32.mrf.mxu0
    %v696 = vadd.f32 0.0, %v695
    %v697 = vpop.f32.mrf.mxu0
    %v698 = vadd.f32 0.0, %v697
    %v699 = vpop.f32.mrf.mxu0
    %v700 = vadd.f32 0.0, %v699
    %v701 = vpop.f32.mrf.mxu0
    %v702 = vadd.f32 0.0, %v701
    %703 = vmatprep.mubr.bf16.mxu0 0
    %704 = vmatmul.mubr.bf16.gmra.mxu0 %v614
    %v705 = vpop.f32.mrf.mxu0
    %v706 = vadd.f32 0.0, %v705
    %v707 = vpop.f32.mrf.mxu0
    %v708 = vadd.f32 0.0, %v707
    %v709 = vpop.f32.mrf.mxu0
    %v710 = vadd.f32 0.0, %v709
    %v711 = vpop.f32.mrf.mxu0
    %v712 = vadd.f32 0.0, %v711
    %713 = vmatprep.mubr.bf16.mxu0 0
    %714 = vmatmul.mubr.bf16.gmra.mxu0 %v617
    %v715 = vpop.f32.mrf.mxu0
    %v716 = vadd.f32 0.0, %v715
    %v717 = vpop.f32.mrf.mxu0
    %v718 = vadd.f32 0.0, %v717
    %v719 = vpop.f32.mrf.mxu0
    %v720 = vadd.f32 0.0, %v719
    %v721 = vpop.f32.mrf.mxu0
    %v722 = vadd.f32 0.0, %v721
    %723 = vmatprep.mubr.bf16.mxu0 0
    %724 = vmatmul.mubr.bf16.gmra.mxu0 %v620
    %v725 = vpop.f32.mrf.mxu0
    %v726 = vadd.f32 0.0, %v725
    %v727 = vpop.f32.mrf.mxu0
    %v728 = vadd.f32 0.0, %v727
    %v729 = vpop.f32.mrf.mxu0
    %v730 = vadd.f32 0.0, %v729
    %v731 = vpop.f32.mrf.mxu0
    %v732 = vadd.f32 0.0, %v731
    %733 = vmatprep.mubr.bf16.mxu0 0
    %734 = vmatmul.mubr.bf16.gmra.mxu0 %v623
    %v735 = vpop.f32.mrf.mxu0
    %v736 = vadd.f32 0.0, %v735
    %v737 = vpop.f32.mrf.mxu0
    %v738 = vadd.f32 0.0, %v737
    %v739 = vpop.f32.mrf.mxu0
    %v740 = vadd.f32 0.0, %v739
    %v741 = vpop.f32.mrf.mxu0
    %v742 = vadd.f32 0.0, %v741
    %743 = vdwg.mxu0
    %v744 = vadd.f32 %v434, %v666
    %v745 = vadd.f32 %v436, %v668
    %v746 = vadd.f32 %v438, %v670
    %v747 = vadd.f32 %v440, %v672
    %v748 = vadd.f32 %v444, %v676
    %v749 = vadd.f32 %v446, %v678
    %v750 = vadd.f32 %v448, %v680
    %v751 = vadd.f32 %v450, %v682
    %v752 = vadd.f32 %v454, %v686
    %v753 = vadd.f32 %v456, %v688
    %v754 = vadd.f32 %v458, %v690
    %v755 = vadd.f32 %v460, %v692
    %v756 = vadd.f32 %v464, %v696
    %v757 = vadd.f32 %v466, %v698
    %v758 = vadd.f32 %v468, %v700
    %v759 = vadd.f32 %v470, %v702
    %v760 = vadd.f32 %v474, %v706
    %v761 = vadd.f32 %v476, %v708
    %v762 = vadd.f32 %v478, %v710
    %v763 = vadd.f32 %v480, %v712
    %v764 = vadd.f32 %v484, %v716
    %v765 = vadd.f32 %v486, %v718
    %v766 = vadd.f32 %v488, %v720
    %v767 = vadd.f32 %v490, %v722
    %v768 = vadd.f32 %v494, %v726
    %v769 = vadd.f32 %v496, %v728
    %v770 = vadd.f32 %v498, %v730
    %v771 = vadd.f32 %v500, %v732
    %v772 = vadd.f32 %v504, %v736
    %v773 = vadd.f32 %v506, %v738
    %v774 = vadd.f32 %v508, %v740
    %v775 = vadd.f32 %v510, %v742
    %v776 = vmax.f32 %v744, 0.0
    %v777 = vmax.f32 %v745, 0.0
    %v778 = vmax.f32 %v746, 0.0
    %v779 = vmax.f32 %v747, 0.0
    %v780 = vmax.f32 %v748, 0.0
    %v781 = vmax.f32 %v749, 0.0
    %v782 = vmax.f32 %v750, 0.0
    %v783 = vmax.f32 %v751, 0.0
    %v784 = vmax.f32 %v752, 0.0
    %v785 = vmax.f32 %v753, 0.0
    %v786 = vmax.f32 %v754, 0.0
    %v787 = vmax.f32 %v755, 0.0
    %v788 = vmax.f32 %v756, 0.0
    %v789 = vmax.f32 %v757, 0.0
    %v790 = vmax.f32 %v758, 0.0
    %v791 = vmax.f32 %v759, 0.0
    %v792 = vmax.f32 %v760, 0.0
    %v793 = vmax.f32 %v761, 0.0
    %v794 = vmax.f32 %v762, 0.0
    %v795 = vmax.f32 %v763, 0.0
    %v796 = vmax.f32 %v764, 0.0
    %v797 = vmax.f32 %v765, 0.0
    %v798 = vmax.f32 %v766, 0.0
    %v799 = vmax.f32 %v767, 0.0
    %v800 = vmax.f32 %v768, 0.0
    %v801 = vmax.f32 %v769, 0.0
    %v802 = vmax.f32 %v770, 0.0
    %v803 = vmax.f32 %v771, 0.0
    %v804 = vmax.f32 %v772, 0.0
    %v805 = vmax.f32 %v773, 0.0
    %v806 = vmax.f32 %v774, 0.0
    %v807 = vmax.f32 %v775, 0.0
    %v808 = vpack.c.bf16 %v778, %v776
    %v809 = vpack.c.bf16 %v779, %v777
    %v810 = vpack.c.bf16 %v782, %v780
    %v811 = vpack.c.bf16 %v783, %v781
    %v812 = vpack.c.bf16 %v786, %v784
    %v813 = vpack.c.bf16 %v787, %v785
    %v814 = vpack.c.bf16 %v790, %v788
    %v815 = vpack.c.bf16 %v791, %v789
    %v816 = vpack.c.bf16 %v794, %v792
    %v817 = vpack.c.bf16 %v795, %v793
    %v818 = vpack.c.bf16 %v798, %v796
    %v819 = vpack.c.bf16 %v799, %v797
    %v820 = vpack.c.bf16 %v802, %v800
    %v821 = vpack.c.bf16 %v803, %v801
    %v822 = vpack.c.bf16 %v806, %v804
    %v823 = vpack.c.bf16 %v807, %v805
    %v840 = vunpack.c.l.b16 %v808
    %v841 = vunpack.c.l.b16 %v809
    %v842 = vunpack.c.h.b16 %v808
    %v843 = vunpack.c.h.b16 %v809
    %v844 = vunpack.c.l.b16 %v810
    %v845 = vunpack.c.l.b16 %v811
    %v846 = vunpack.c.h.b16 %v810
    %v847 = vunpack.c.h.b16 %v811
    %v848 = vunpack.c.l.b16 %v812
    %v849 = vunpack.c.l.b16 %v813
    %v850 = vunpack.c.h.b16 %v812
    %v851 = vunpack.c.h.b16 %v813
    %v852 = vunpack.c.l.b16 %v814
    %v853 = vunpack.c.l.b16 %v815
    %v854 = vunpack.c.h.b16 %v814
    %v855 = vunpack.c.h.b16 %v815
    %v856 = vunpack.c.l.b16 %v816
    %v857 = vunpack.c.l.b16 %v817
    %v858 = vunpack.c.h.b16 %v816
    %v859 = vunpack.c.h.b16 %v817
    %v860 = vunpack.c.l.b16 %v818
    %v861 = vunpack.c.l.b16 %v819
    %v862 = vunpack.c.h.b16 %v818
    %v863 = vunpack.c.h.b16 %v819
    %v864 = vunpack.c.l.b16 %v820
    %v865 = vunpack.c.l.b16 %v821
    %v866 = vunpack.c.h.b16 %v820
    %v867 = vunpack.c.h.b16 %v821
    %v868 = vunpack.c.l.b16 %v822
    %v869 = vunpack.c.l.b16 %v823
    %v870 = vunpack.c.h.b16 %v822
    %v871 = vunpack.c.h.b16 %v823
    %v872 = vpack.c.b16 %v841, %v840
    %v873 = vpack.c.b16 %v843, %v842
    %v874 = vpack.c.b16 %v845, %v844
    %v875 = vpack.c.b16 %v847, %v846
    %v876 = vpack.c.b16 %v849, %v848
    %v877 = vpack.c.b16 %v851, %v850
    %v878 = vpack.c.b16 %v853, %v852
    %v879 = vpack.c.b16 %v855, %v854
    %v880 = vpack.c.b16 %v857, %v856
    %v881 = vpack.c.b16 %v859, %v858
    %v882 = vpack.c.b16 %v861, %v860
    %v883 = vpack.c.b16 %v863, %v862
    %v884 = vpack.c.b16 %v865, %v864
    %v885 = vpack.c.b16 %v867, %v866
    %v886 = vpack.c.b16 %v869, %v868
    %v887 = vpack.c.b16 %v871, %v870
    %904 = vst [vmem:[#allocation3] sm:$0xff] %v872
    %905 = vst [vmem:[#allocation3 + $0x8] sm:$0xff] %v873
    %906 = vst [vmem:[#allocation3 + $0x10] sm:$0xff] %v874
    %907 = vst [vmem:[#allocation3 + $0x18] sm:$0xff] %v875
    %908 = vst [vmem:[#allocation3 + $0x20] sm:$0xff] %v876
    %909 = vst [vmem:[#allocation3 + $0x28] sm:$0xff] %v877
    %910 = vst [vmem:[#allocation3 + $0x30] sm:$0xff] %v878
    %911 = vst [vmem:[#allocation3 + $0x38] sm:$0xff] %v879
    %912 = vst [vmem:[#allocation3 + $0x40] sm:$0xff] %v880
    %913 = vst [vmem:[#allocation3 + $0x48] sm:$0xff] %v881
    %914 = vst [vmem:[#allocation3 + $0x50] sm:$0xff] %v882
    %915 = vst [vmem:[#allocation3 + $0x58] sm:$0xff] %v883
    %916 = vst [vmem:[#allocation3 + $0x60] sm:$0xff] %v884
    %917 = vst [vmem:[#allocation3 + $0x68] sm:$0xff] %v885
    %918 = vst [vmem:[#allocation3 + $0x70] sm:$0xff] %v886
    %919 = vst [vmem:[#allocation3 + $0x78] sm:$0xff] %v887
    %v920 = vld [vmem:[#allocation3] sm:$0xff]
    %v921 = vld [vmem:[#allocation3 + $0x8] sm:$0xff]
    %v922 = vld [vmem:[#allocation3 + $0x10] sm:$0xff]
    %v923 = vld [vmem:[#allocation3 + $0x18] sm:$0xff]
    %v924 = vld [vmem:[#allocation3 + $0x20] sm:$0xff]
    %v925 = vld [vmem:[#allocation3 + $0x28] sm:$0xff]
    %v926 = vld [vmem:[#allocation3 + $0x30] sm:$0xff]
    %v927 = vld [vmem:[#allocation3 + $0x38] sm:$0xff]
    %v928 = vld [vmem:[#allocation3 + $0x40] sm:$0xff]
    %v929 = vld [vmem:[#allocation3 + $0x48] sm:$0xff]
    %v930 = vld [vmem:[#allocation3 + $0x50] sm:$0xff]
    %v931 = vld [vmem:[#allocation3 + $0x58] sm:$0xff]
    %v932 = vld [vmem:[#allocation3 + $0x60] sm:$0xff]
    %v933 = vld [vmem:[#allocation3 + $0x68] sm:$0xff]
    %v934 = vld [vmem:[#allocation3 + $0x70] sm:$0xff]
    %v935 = vld [vmem:[#allocation3 + $0x78] sm:$0xff]
    %v936 = vld [vmem:[#allocation5] sm:$0xff]
    %v937 = vld [vmem:[#allocation5 + $0x8] sm:$0xff]
    %v938 = vld [vmem:[#allocation5 + $0x10] sm:$0xff]
    %v939 = vld [vmem:[#allocation5 + $0x18] sm:$0xff]
    %v940 = vld [vmem:[#allocation5 + $0x20] sm:$0xff]
    %v941 = vld [vmem:[#allocation5 + $0x28] sm:$0xff]
    %v942 = vld [vmem:[#allocation5 + $0x30] sm:$0xff]
    %v943 = vld [vmem:[#allocation5 + $0x38] sm:$0xff]
    %v944 = vld [vmem:[#allocation5 + $0x40] sm:$0xff]
    %v945 = vld [vmem:[#allocation5 + $0x48] sm:$0xff]
    %v946 = vld [vmem:[#allocation5 + $0x50] sm:$0xff]
    %v947 = vld [vmem:[#allocation5 + $0x58] sm:$0xff]
    %v948 = vld [vmem:[#allocation5 + $0x60] sm:$0xff]
    %v949 = vld [vmem:[#allocation5 + $0x68] sm:$0xff]
    %v950 = vld [vmem:[#allocation5 + $0x70] sm:$0xff]
    %v951 = vld [vmem:[#allocation5 + $0x78] sm:$0xff]
    %v952 = vld [vmem:[#allocation5 + $0x80] sm:$0xff]
    %v953 = vld [vmem:[#allocation5 + $0x88] sm:$0xff]
    %v954 = vld [vmem:[#allocation5 + $0x90] sm:$0xff]
    %v955 = vld [vmem:[#allocation5 + $0x98] sm:$0xff]
    %v956 = vld [vmem:[#allocation5 + $0xa0] sm:$0xff]
    %v957 = vld [vmem:[#allocation5 + $0xa8] sm:$0xff]
    %v958 = vld [vmem:[#allocation5 + $0xb0] sm:$0xff]
    %v959 = vld [vmem:[#allocation5 + $0xb8] sm:$0xff]
    %v960 = vld [vmem:[#allocation5 + $0xc0] sm:$0xff]
    %v961 = vld [vmem:[#allocation5 + $0xc8] sm:$0xff]
    %v962 = vld [vmem:[#allocation5 + $0xd0] sm:$0xff]
    %v963 = vld [vmem:[#allocation5 + $0xd8] sm:$0xff]
    %v964 = vld [vmem:[#allocation5 + $0xe0] sm:$0xff]
    %v965 = vld [vmem:[#allocation5 + $0xe8] sm:$0xff]
    %v966 = vld [vmem:[#allocation5 + $0xf0] sm:$0xff]
    %v967 = vld [vmem:[#allocation5 + $0xf8] sm:$0xff]
    %v968 = vld [vmem:[#allocation3] sm:$0xff]
    %v969 = vld [vmem:[#allocation3 + $0x8] sm:$0xff]
    %v970 = vld [vmem:[#allocation3 + $0x10] sm:$0xff]
    %v971 = vld [vmem:[#allocation3 + $0x18] sm:$0xff]
    %v972 = vld [vmem:[#allocation3 + $0x20] sm:$0xff]
    %v973 = vld [vmem:[#allocation3 + $0x28] sm:$0xff]
    %v974 = vld [vmem:[#allocation3 + $0x30] sm:$0xff]
    %v975 = vld [vmem:[#allocation3 + $0x38] sm:$0xff]
    %v976 = vld [vmem:[#allocation3 + $0x40] sm:$0xff]
    %v977 = vld [vmem:[#allocation3 + $0x48] sm:$0xff]
    %v978 = vld [vmem:[#allocation3 + $0x50] sm:$0xff]
    %v979 = vld [vmem:[#allocation3 + $0x58] sm:$0xff]
    %v980 = vld [vmem:[#allocation3 + $0x60] sm:$0xff]
    %v981 = vld [vmem:[#allocation3 + $0x68] sm:$0xff]
    %v982 = vld [vmem:[#allocation3 + $0x70] sm:$0xff]
    %v983 = vld [vmem:[#allocation3 + $0x78] sm:$0xff]
    %v984 = vld [vmem:[#allocation3 + $0x80] sm:$0x11]
    %s985 = scalar_lea.vmem [#allocation5], 256
    %v986 = vld [vmem:[%s985] sm:$0xff]
    %v987 = vld [vmem:[%s985 + $0x8] sm:$0xff]
    %v988 = vld [vmem:[%s985 + $0x10] sm:$0xff]
    %v989 = vld [vmem:[%s985 + $0x18] sm:$0xff]
    %v990 = vld [vmem:[%s985 + $0x20] sm:$0xff]
    %v991 = vld [vmem:[%s985 + $0x28] sm:$0xff]
    %v992 = vld [vmem:[%s985 + $0x30] sm:$0xff]
    %v993 = vld [vmem:[%s985 + $0x38] sm:$0xff]
    %v994 = vld [vmem:[%s985 + $0x40] sm:$0xff]
    %v995 = vld [vmem:[%s985 + $0x48] sm:$0xff]
    %v996 = vld [vmem:[%s985 + $0x50] sm:$0xff]
    %v997 = vld [vmem:[%s985 + $0x58] sm:$0xff]
    %v998 = vld [vmem:[%s985 + $0x60] sm:$0xff]
    %v999 = vld [vmem:[%s985 + $0x68] sm:$0xff]
    %v1000 = vld [vmem:[%s985 + $0x70] sm:$0xff]
    %v1001 = vld [vmem:[%s985 + $0x78] sm:$0xff]
    %v1002 = vld [vmem:[%s985 + $0x80] sm:$0xff]
    %v1003 = vld [vmem:[%s985 + $0x88] sm:$0xff]
    %v1004 = vld [vmem:[%s985 + $0x90] sm:$0xff]
    %v1005 = vld [vmem:[%s985 + $0x98] sm:$0xff]
    %v1006 = vld [vmem:[%s985 + $0xa0] sm:$0xff]
    %v1007 = vld [vmem:[%s985 + $0xa8] sm:$0xff]
    %v1008 = vld [vmem:[%s985 + $0xb0] sm:$0xff]
    %v1009 = vld [vmem:[%s985 + $0xb8] sm:$0xff]
    %v1010 = vld [vmem:[%s985 + $0xc0] sm:$0xff]
    %v1011 = vld [vmem:[%s985 + $0xc8] sm:$0xff]
    %v1012 = vld [vmem:[%s985 + $0xd0] sm:$0xff]
    %v1013 = vld [vmem:[%s985 + $0xd8] sm:$0xff]
    %v1014 = vld [vmem:[%s985 + $0xe0] sm:$0xff]
    %v1015 = vld [vmem:[%s985 + $0xe8] sm:$0xff]
    %v1016 = vld [vmem:[%s985 + $0xf0] sm:$0xff]
    %v1017 = vld [vmem:[%s985 + $0xf8] sm:$0xff]
    %v1035 = vunpack.c.l.b16 %v968
    %v1036 = vunpack.c.h.b16 %v968
    %v1037 = vunpack.c.l.b16 %v969
    %v1038 = vunpack.c.h.b16 %v969
    %v1039 = vunpack.c.l.b16 %v970
    %v1040 = vunpack.c.h.b16 %v970
    %v1041 = vunpack.c.l.b16 %v971
    %v1042 = vunpack.c.h.b16 %v971
    %v1043 = vunpack.c.l.b16 %v972
    %v1044 = vunpack.c.h.b16 %v972
    %v1045 = vunpack.c.l.b16 %v973
    %v1046 = vunpack.c.h.b16 %v973
    %v1047 = vunpack.c.l.b16 %v974
    %v1048 = vunpack.c.h.b16 %v974
    %v1049 = vunpack.c.l.b16 %v975
    %v1050 = vunpack.c.h.b16 %v975
    %v1051 = vunpack.c.l.b16 %v976
    %v1052 = vunpack.c.h.b16 %v976
    %v1053 = vunpack.c.l.b16 %v977
    %v1054 = vunpack.c.h.b16 %v977
    %v1055 = vunpack.c.l.b16 %v978
    %v1056 = vunpack.c.h.b16 %v978
    %v1057 = vunpack.c.l.b16 %v979
    %v1058 = vunpack.c.h.b16 %v979
    %v1059 = vunpack.c.l.b16 %v980
    %v1060 = vunpack.c.h.b16 %v980
    %v1061 = vunpack.c.l.b16 %v981
    %v1062 = vunpack.c.h.b16 %v981
    %v1063 = vunpack.c.l.b16 %v982
    %v1064 = vunpack.c.h.b16 %v982
    %v1065 = vunpack.c.l.b16 %v983
    %v1066 = vunpack.c.h.b16 %v983
    %v1067 = vunpack.c.l.b16 %v984
    %v1068 = vunpack.c.h.b16 %v984
    %v1069 = vpack.c.b16 %v1037, %v1035
    %v1070 = vpack.c.b16 %v1038, %v1036
    %v1071 = vpack.c.b16 %v1041, %v1039
    %v1072 = vpack.c.b16 %v1042, %v1040
    %v1073 = vpack.c.b16 %v1045, %v1043
    %v1074 = vpack.c.b16 %v1046, %v1044
    %v1075 = vpack.c.b16 %v1049, %v1047
    %v1076 = vpack.c.b16 %v1050, %v1048
    %v1077 = vpack.c.b16 %v1053, %v1051
    %v1078 = vpack.c.b16 %v1054, %v1052
    %v1079 = vpack.c.b16 %v1057, %v1055
    %v1080 = vpack.c.b16 %v1058, %v1056
    %v1081 = vpack.c.b16 %v1061, %v1059
    %v1082 = vpack.c.b16 %v1062, %v1060
    %v1083 = vpack.c.b16 %v1065, %v1063
    %v1084 = vpack.c.b16 %v1066, %v1064
    %v1085 = vpack.c.b16 %v1067, %v1067
    %v1086 = vpack.c.b16 %v1068, %v1068
    %v1088 = vshrl.u32 %v1069, 16
    %v1090 = vshll.u32 %v1069, 16
    %v1092 = vrot.slane %v1090, 1
    %v1093 = vor.u32 %v1088, %v1092
    %v1095 = vshll.u32 %v1071, 16
    %v1097 = vrot.slane %v1095, 1
    %v1098 = vsel %vm145, %v1093, %v1097
    %v1100 = vshrl.u32 %v1070, 16
    %v1102 = vshll.u32 %v1070, 16
    %v1104 = vrot.slane %v1102, 1
    %v1105 = vor.u32 %v1100, %v1104
    %v1107 = vshll.u32 %v1072, 16
    %v1109 = vrot.slane %v1107, 1
    %v1110 = vsel %vm145, %v1105, %v1109
    %v1111 = vshrl.u32 %v1071, 16
    %v1113 = vor.u32 %v1111, %v1097
    %v1115 = vshll.u32 %v1073, 16
    %v1117 = vrot.slane %v1115, 1
    %v1118 = vsel %vm145, %v1113, %v1117
    %v1119 = vshrl.u32 %v1072, 16
    %v1121 = vor.u32 %v1119, %v1109
    %v1123 = vshll.u32 %v1074, 16
    %v1125 = vrot.slane %v1123, 1
    %v1126 = vsel %vm145, %v1121, %v1125
    %v1127 = vshrl.u32 %v1073, 16
    %v1129 = vor.u32 %v1127, %v1117
    %v1131 = vshll.u32 %v1075, 16
    %v1133 = vrot.slane %v1131, 1
    %v1134 = vsel %vm145, %v1129, %v1133
    %v1135 = vshrl.u32 %v1074, 16
    %v1137 = vor.u32 %v1135, %v1125
    %v1139 = vshll.u32 %v1076, 16
    %v1141 = vrot.slane %v1139, 1
    %v1142 = vsel %vm145, %v1137, %v1141
    %v1143 = vshrl.u32 %v1075, 16
    %v1145 = vor.u32 %v1143, %v1133
    %v1147 = vshll.u32 %v1077, 16
    %v1149 = vrot.slane %v1147, 1
    %v1150 = vsel %vm145, %v1145, %v1149
    %v1151 = vshrl.u32 %v1076, 16
    %v1153 = vor.u32 %v1151, %v1141
    %v1155 = vshll.u32 %v1078, 16
    %v1157 = vrot.slane %v1155, 1
    %v1158 = vsel %vm145, %v1153, %v1157
    %v1159 = vshrl.u32 %v1077, 16
    %v1161 = vor.u32 %v1159, %v1149
    %v1163 = vshll.u32 %v1079, 16
    %v1165 = vrot.slane %v1163, 1
    %v1166 = vsel %vm145, %v1161, %v1165
    %v1167 = vshrl.u32 %v1078, 16
    %v1169 = vor.u32 %v1167, %v1157
    %v1171 = vshll.u32 %v1080, 16
    %v1173 = vrot.slane %v1171, 1
    %v1174 = vsel %vm145, %v1169, %v1173
    %v1175 = vshrl.u32 %v1079, 16
    %v1177 = vor.u32 %v1175, %v1165
    %v1179 = vshll.u32 %v1081, 16
    %v1181 = vrot.slane %v1179, 1
    %v1182 = vsel %vm145, %v1177, %v1181
    %v1183 = vshrl.u32 %v1080, 16
    %v1185 = vor.u32 %v1183, %v1173
    %v1187 = vshll.u32 %v1082, 16
    %v1189 = vrot.slane %v1187, 1
    %v1190 = vsel %vm145, %v1185, %v1189
    %v1191 = vshrl.u32 %v1081, 16
    %v1193 = vor.u32 %v1191, %v1181
    %v1195 = vshll.u32 %v1083, 16
    %v1197 = vrot.slane %v1195, 1
    %v1198 = vsel %vm145, %v1193, %v1197
    %v1199 = vshrl.u32 %v1082, 16
    %v1201 = vor.u32 %v1199, %v1189
    %v1203 = vshll.u32 %v1084, 16
    %v1205 = vrot.slane %v1203, 1
    %v1206 = vsel %vm145, %v1201, %v1205
    %v1207 = vshrl.u32 %v1083, 16
    %v1209 = vor.u32 %v1207, %v1197
    %v1211 = vshll.u32 %v1085, 16
    %v1213 = vrot.slane %v1211, 1
    %v1214 = vsel %vm145, %v1209, %v1213
    %v1215 = vshrl.u32 %v1084, 16
    %v1217 = vor.u32 %v1215, %v1205
    %v1219 = vshll.u32 %v1086, 16
    %v1221 = vrot.slane %v1219, 1
    %v1222 = vsel %vm145, %v1217, %v1221
    %v1271 = vunpack.c.l.b16 %v986
    %v1272 = vunpack.c.h.b16 %v986
    %v1273 = vunpack.c.l.b16 %v987
    %v1274 = vunpack.c.h.b16 %v987
    %v1275 = vunpack.c.l.b16 %v988
    %v1276 = vunpack.c.h.b16 %v988
    %v1277 = vunpack.c.l.b16 %v989
    %v1278 = vunpack.c.h.b16 %v989
    %v1279 = vunpack.c.l.b16 %v990
    %v1280 = vunpack.c.h.b16 %v990
    %v1281 = vunpack.c.l.b16 %v991
    %v1282 = vunpack.c.h.b16 %v991
    %v1283 = vunpack.c.l.b16 %v992
    %v1284 = vunpack.c.h.b16 %v992
    %v1285 = vunpack.c.l.b16 %v993
    %v1286 = vunpack.c.h.b16 %v993
    %v1287 = vunpack.c.l.b16 %v994
    %v1288 = vunpack.c.h.b16 %v994
    %v1289 = vunpack.c.l.b16 %v995
    %v1290 = vunpack.c.h.b16 %v995
    %v1291 = vunpack.c.l.b16 %v996
    %v1292 = vunpack.c.h.b16 %v996
    %v1293 = vunpack.c.l.b16 %v997
    %v1294 = vunpack.c.h.b16 %v997
    %v1295 = vunpack.c.l.b16 %v998
    %v1296 = vunpack.c.h.b16 %v998
    %v1297 = vunpack.c.l.b16 %v999
    %v1298 = vunpack.c.h.b16 %v999
    %v1299 = vunpack.c.l.b16 %v1000
    %v1300 = vunpack.c.h.b16 %v1000
    %v1301 = vunpack.c.l.b16 %v1001
    %v1302 = vunpack.c.h.b16 %v1001
    %v1303 = vunpack.c.l.b16 %v1002
    %v1304 = vunpack.c.h.b16 %v1002
    %v1305 = vunpack.c.l.b16 %v1003
    %v1306 = vunpack.c.h.b16 %v1003
    %v1307 = vunpack.c.l.b16 %v1004
    %v1308 = vunpack.c.h.b16 %v1004
    %v1309 = vunpack.c.l.b16 %v1005
    %v1310 = vunpack.c.h.b16 %v1005
    %v1311 = vunpack.c.l.b16 %v1006
    %v1312 = vunpack.c.h.b16 %v1006
    %v1313 = vunpack.c.l.b16 %v1007
    %v1314 = vunpack.c.h.b16 %v1007
    %v1315 = vunpack.c.l.b16 %v1008
    %v1316 = vunpack.c.h.b16 %v1008
    %v1317 = vunpack.c.l.b16 %v1009
    %v1318 = vunpack.c.h.b16 %v1009
    %v1319 = vunpack.c.l.b16 %v1010
    %v1320 = vunpack.c.h.b16 %v1010
    %v1321 = vunpack.c.l.b16 %v1011
    %v1322 = vunpack.c.h.b16 %v1011
    %v1323 = vunpack.c.l.b16 %v1012
    %v1324 = vunpack.c.h.b16 %v1012
    %v1325 = vunpack.c.l.b16 %v1013
    %v1326 = vunpack.c.h.b16 %v1013
    %v1327 = vunpack.c.l.b16 %v1014
    %v1328 = vunpack.c.h.b16 %v1014
    %v1329 = vunpack.c.l.b16 %v1015
    %v1330 = vunpack.c.h.b16 %v1015
    %v1331 = vunpack.c.l.b16 %v1016
    %v1332 = vunpack.c.h.b16 %v1016
    %v1333 = vunpack.c.l.b16 %v1017
    %v1334 = vunpack.c.h.b16 %v1017
    %v1335 = vpack.c.b16 %v1273, %v1271
    %v1336 = vpack.c.b16 %v1274, %v1272
    %v1337 = vpack.c.b16 %v1277, %v1275
    %v1338 = vpack.c.b16 %v1278, %v1276
    %v1339 = vpack.c.b16 %v1281, %v1279
    %v1340 = vpack.c.b16 %v1282, %v1280
    %v1341 = vpack.c.b16 %v1285, %v1283
    %v1342 = vpack.c.b16 %v1286, %v1284
    %v1343 = vpack.c.b16 %v1289, %v1287
    %v1344 = vpack.c.b16 %v1290, %v1288
    %v1345 = vpack.c.b16 %v1293, %v1291
    %v1346 = vpack.c.b16 %v1294, %v1292
    %v1347 = vpack.c.b16 %v1297, %v1295
    %v1348 = vpack.c.b16 %v1298, %v1296
    %v1349 = vpack.c.b16 %v1301, %v1299
    %v1350 = vpack.c.b16 %v1302, %v1300
    %v1351 = vpack.c.b16 %v1305, %v1303
    %v1352 = vpack.c.b16 %v1306, %v1304
    %v1353 = vpack.c.b16 %v1309, %v1307
    %v1354 = vpack.c.b16 %v1310, %v1308
    %v1355 = vpack.c.b16 %v1313, %v1311
    %v1356 = vpack.c.b16 %v1314, %v1312
    %v1357 = vpack.c.b16 %v1317, %v1315
    %v1358 = vpack.c.b16 %v1318, %v1316
    %v1359 = vpack.c.b16 %v1321, %v1319
    %v1360 = vpack.c.b16 %v1322, %v1320
    %v1361 = vpack.c.b16 %v1325, %v1323
    %v1362 = vpack.c.b16 %v1326, %v1324
    %v1363 = vpack.c.b16 %v1329, %v1327
    %v1364 = vpack.c.b16 %v1330, %v1328
    %v1365 = vpack.c.b16 %v1333, %v1331
    %v1366 = vpack.c.b16 %v1334, %v1332
    %1399 = vmatprep.subr.bf16.mxu0 %v1350
    %1400 = vmatpush1.bf16.msra.mxu0 %v1349
    %1401 = vmatprep.subr.bf16.mxu0 %v1348
    %1402 = vmatpush1.bf16.msra.mxu0 %v1347
    %1403 = vmatprep.subr.bf16.mxu0 %v1346
    %1404 = vmatpush1.bf16.msra.mxu0 %v1345
    %1405 = vmatprep.subr.bf16.mxu0 %v1344
    %1406 = vmatpush1.bf16.msra.mxu0 %v1343
    %1407 = vmatprep.subr.bf16.mxu0 %v1342
    %1408 = vmatpush1.bf16.msra.mxu0 %v1341
    %1409 = vmatprep.subr.bf16.mxu0 %v1340
    %1410 = vmatpush1.bf16.msra.mxu0 %v1339
    %1411 = vmatprep.subr.bf16.mxu0 %v1338
    %1412 = vmatpush1.bf16.msra.mxu0 %v1337
    %1413 = vmatprep.subr.bf16.mxu0 %v1336
    %1414 = vmatpush1.bf16.msra.mxu0 %v1335
    %1415 = vmatprep.subr.bf16.mxu0 %v1366
    %1416 = vmatpush2.bf16.msra.mxu0 %v1365
    %1417 = vmatprep.subr.bf16.mxu0 %v1364
    %1418 = vmatpush2.bf16.msra.mxu0 %v1363
    %1419 = vmatprep.subr.bf16.mxu0 %v1362
    %1420 = vmatpush2.bf16.msra.mxu0 %v1361
    %1421 = vmatprep.subr.bf16.mxu0 %v1360
    %1422 = vmatpush2.bf16.msra.mxu0 %v1359
    %1423 = vmatprep.subr.bf16.mxu0 %v1358
    %1424 = vmatpush2.bf16.msra.mxu0 %v1357
    %1425 = vmatprep.subr.bf16.mxu0 %v1356
    %1426 = vmatpush2.bf16.msra.mxu0 %v1355
    %1427 = vmatprep.subr.bf16.mxu0 %v1354
    %1428 = vmatpush2.bf16.msra.mxu0 %v1353
    %1429 = vmatprep.subr.bf16.mxu0 %v1352
    %1430 = vmatpush2.bf16.msra.mxu0 %v1351
    %1431 = vmatprep.mubr.bf16.mxu0 %v1110
    %1432 = vmatmul.mubr.bf16.gmra.mxu0 %v1098
    %v1433 = vpop.f32.mrf.mxu0
    %v1434 = vadd.f32 0.0, %v1433
    %v1435 = vpop.f32.mrf.mxu0
    %v1436 = vadd.f32 0.0, %v1435
    %v1437 = vpop.f32.mrf.mxu0
    %v1438 = vadd.f32 0.0, %v1437
    %v1439 = vpop.f32.mrf.mxu0
    %v1440 = vadd.f32 0.0, %v1439
    %1441 = vmatprep.mubr.bf16.mxu0 %v1126
    %1442 = vmatmul.mubr.bf16.gmra.mxu0 %v1118
    %v1443 = vpop.f32.mrf.mxu0
    %v1444 = vadd.f32 0.0, %v1443
    %v1445 = vpop.f32.mrf.mxu0
    %v1446 = vadd.f32 0.0, %v1445
    %v1447 = vpop.f32.mrf.mxu0
    %v1448 = vadd.f32 0.0, %v1447
    %v1449 = vpop.f32.mrf.mxu0
    %v1450 = vadd.f32 0.0, %v1449
    %1451 = vmatprep.mubr.bf16.mxu0 %v1142
    %1452 = vmatmul.mubr.bf16.gmra.mxu0 %v1134
    %v1453 = vpop.f32.mrf.mxu0
    %v1454 = vadd.f32 0.0, %v1453
    %v1455 = vpop.f32.mrf.mxu0
    %v1456 = vadd.f32 0.0, %v1455
    %v1457 = vpop.f32.mrf.mxu0
    %v1458 = vadd.f32 0.0, %v1457
    %v1459 = vpop.f32.mrf.mxu0
    %v1460 = vadd.f32 0.0, %v1459
    %1461 = vmatprep.mubr.bf16.mxu0 %v1158
    %1462 = vmatmul.mubr.bf16.gmra.mxu0 %v1150
    %v1463 = vpop.f32.mrf.mxu0
    %v1464 = vadd.f32 0.0, %v1463
    %v1465 = vpop.f32.mrf.mxu0
    %v1466 = vadd.f32 0.0, %v1465
    %v1467 = vpop.f32.mrf.mxu0
    %v1468 = vadd.f32 0.0, %v1467
    %v1469 = vpop.f32.mrf.mxu0
    %v1470 = vadd.f32 0.0, %v1469
    %1471 = vmatprep.mubr.bf16.mxu0 %v1174
    %1472 = vmatmul.mubr.bf16.gmra.mxu0 %v1166
    %v1473 = vpop.f32.mrf.mxu0
    %v1474 = vadd.f32 0.0, %v1473
    %v1475 = vpop.f32.mrf.mxu0
    %v1476 = vadd.f32 0.0, %v1475
    %v1477 = vpop.f32.mrf.mxu0
    %v1478 = vadd.f32 0.0, %v1477
    %v1479 = vpop.f32.mrf.mxu0
    %v1480 = vadd.f32 0.0, %v1479
    %1481 = vmatprep.mubr.bf16.mxu0 %v1190
    %1482 = vmatmul.mubr.bf16.gmra.mxu0 %v1182
    %v1483 = vpop.f32.mrf.mxu0
    %v1484 = vadd.f32 0.0, %v1483
    %v1485 = vpop.f32.mrf.mxu0
    %v1486 = vadd.f32 0.0, %v1485
    %v1487 = vpop.f32.mrf.mxu0
    %v1488 = vadd.f32 0.0, %v1487
    %v1489 = vpop.f32.mrf.mxu0
    %v1490 = vadd.f32 0.0, %v1489
    %1491 = vmatprep.mubr.bf16.mxu0 %v1206
    %1492 = vmatmul.mubr.bf16.gmra.mxu0 %v1198
    %v1493 = vpop.f32.mrf.mxu0
    %v1494 = vadd.f32 0.0, %v1493
    %v1495 = vpop.f32.mrf.mxu0
    %v1496 = vadd.f32 0.0, %v1495
    %v1497 = vpop.f32.mrf.mxu0
    %v1498 = vadd.f32 0.0, %v1497
    %v1499 = vpop.f32.mrf.mxu0
    %v1500 = vadd.f32 0.0, %v1499
    %1501 = vmatprep.mubr.bf16.mxu0 %v1222
    %1502 = vmatmul.mubr.bf16.gmra.mxu0 %v1214
    %v1503 = vpop.f32.mrf.mxu0
    %v1504 = vadd.f32 0.0, %v1503
    %v1505 = vpop.f32.mrf.mxu0
    %v1506 = vadd.f32 0.0, %v1505
    %v1507 = vpop.f32.mrf.mxu0
    %v1508 = vadd.f32 0.0, %v1507
    %v1509 = vpop.f32.mrf.mxu0
    %v1510 = vadd.f32 0.0, %v1509
    %1511 = vdwg.mxu0
    %v1528 = vunpack.c.l.b16 %v920
    %v1529 = vunpack.c.h.b16 %v920
    %v1530 = vunpack.c.l.b16 %v921
    %v1531 = vunpack.c.h.b16 %v921
    %v1532 = vunpack.c.l.b16 %v922
    %v1533 = vunpack.c.h.b16 %v922
    %v1534 = vunpack.c.l.b16 %v923
    %v1535 = vunpack.c.h.b16 %v923
    %v1536 = vunpack.c.l.b16 %v924
    %v1537 = vunpack.c.h.b16 %v924
    %v1538 = vunpack.c.l.b16 %v925
    %v1539 = vunpack.c.h.b16 %v925
    %v1540 = vunpack.c.l.b16 %v926
    %v1541 = vunpack.c.h.b16 %v926
    %v1542 = vunpack.c.l.b16 %v927
    %v1543 = vunpack.c.h.b16 %v927
    %v1544 = vunpack.c.l.b16 %v928
    %v1545 = vunpack.c.h.b16 %v928
    %v1546 = vunpack.c.l.b16 %v929
    %v1547 = vunpack.c.h.b16 %v929
    %v1548 = vunpack.c.l.b16 %v930
    %v1549 = vunpack.c.h.b16 %v930
    %v1550 = vunpack.c.l.b16 %v931
    %v1551 = vunpack.c.h.b16 %v931
    %v1552 = vunpack.c.l.b16 %v932
    %v1553 = vunpack.c.h.b16 %v932
    %v1554 = vunpack.c.l.b16 %v933
    %v1555 = vunpack.c.h.b16 %v933
    %v1556 = vunpack.c.l.b16 %v934
    %v1557 = vunpack.c.h.b16 %v934
    %v1558 = vunpack.c.l.b16 %v935
    %v1559 = vunpack.c.h.b16 %v935
    %v1560 = vpack.c.b16 %v1530, %v1528
    %v1561 = vpack.c.b16 %v1531, %v1529
    %v1562 = vpack.c.b16 %v1534, %v1532
    %v1563 = vpack.c.b16 %v1535, %v1533
    %v1564 = vpack.c.b16 %v1538, %v1536
    %v1565 = vpack.c.b16 %v1539, %v1537
    %v1566 = vpack.c.b16 %v1542, %v1540
    %v1567 = vpack.c.b16 %v1543, %v1541
    %v1568 = vpack.c.b16 %v1546, %v1544
    %v1569 = vpack.c.b16 %v1547, %v1545
    %v1570 = vpack.c.b16 %v1550, %v1548
    %v1571 = vpack.c.b16 %v1551, %v1549
    %v1572 = vpack.c.b16 %v1554, %v1552
    %v1573 = vpack.c.b16 %v1555, %v1553
    %v1574 = vpack.c.b16 %v1558, %v1556
    %v1575 = vpack.c.b16 %v1559, %v1557
    %v1624 = vunpack.c.l.b16 %v936
    %v1625 = vunpack.c.h.b16 %v936
    %v1626 = vunpack.c.l.b16 %v937
    %v1627 = vunpack.c.h.b16 %v937
    %v1628 = vunpack.c.l.b16 %v938
    %v1629 = vunpack.c.h.b16 %v938
    %v1630 = vunpack.c.l.b16 %v939
    %v1631 = vunpack.c.h.b16 %v939
    %v1632 = vunpack.c.l.b16 %v940
    %v1633 = vunpack.c.h.b16 %v940
    %v1634 = vunpack.c.l.b16 %v941
    %v1635 = vunpack.c.h.b16 %v941
    %v1636 = vunpack.c.l.b16 %v942
    %v1637 = vunpack.c.h.b16 %v942
    %v1638 = vunpack.c.l.b16 %v943
    %v1639 = vunpack.c.h.b16 %v943
    %v1640 = vunpack.c.l.b16 %v944
    %v1641 = vunpack.c.h.b16 %v944
    %v1642 = vunpack.c.l.b16 %v945
    %v1643 = vunpack.c.h.b16 %v945
    %v1644 = vunpack.c.l.b16 %v946
    %v1645 = vunpack.c.h.b16 %v946
    %v1646 = vunpack.c.l.b16 %v947
    %v1647 = vunpack.c.h.b16 %v947
    %v1648 = vunpack.c.l.b16 %v948
    %v1649 = vunpack.c.h.b16 %v948
    %v1650 = vunpack.c.l.b16 %v949
    %v1651 = vunpack.c.h.b16 %v949
    %v1652 = vunpack.c.l.b16 %v950
    %v1653 = vunpack.c.h.b16 %v950
    %v1654 = vunpack.c.l.b16 %v951
    %v1655 = vunpack.c.h.b16 %v951
    %v1656 = vunpack.c.l.b16 %v952
    %v1657 = vunpack.c.h.b16 %v952
    %v1658 = vunpack.c.l.b16 %v953
    %v1659 = vunpack.c.h.b16 %v953
    %v1660 = vunpack.c.l.b16 %v954
    %v1661 = vunpack.c.h.b16 %v954
    %v1662 = vunpack.c.l.b16 %v955
    %v1663 = vunpack.c.h.b16 %v955
    %v1664 = vunpack.c.l.b16 %v956
    %v1665 = vunpack.c.h.b16 %v956
    %v1666 = vunpack.c.l.b16 %v957
    %v1667 = vunpack.c.h.b16 %v957
    %v1668 = vunpack.c.l.b16 %v958
    %v1669 = vunpack.c.h.b16 %v958
    %v1670 = vunpack.c.l.b16 %v959
    %v1671 = vunpack.c.h.b16 %v959
    %v1672 = vunpack.c.l.b16 %v960
    %v1673 = vunpack.c.h.b16 %v960
    %v1674 = vunpack.c.l.b16 %v961
    %v1675 = vunpack.c.h.b16 %v961
    %v1676 = vunpack.c.l.b16 %v962
    %v1677 = vunpack.c.h.b16 %v962
    %v1678 = vunpack.c.l.b16 %v963
    %v1679 = vunpack.c.h.b16 %v963
    %v1680 = vunpack.c.l.b16 %v964
    %v1681 = vunpack.c.h.b16 %v964
    %v1682 = vunpack.c.l.b16 %v965
    %v1683 = vunpack.c.h.b16 %v965
    %v1684 = vunpack.c.l.b16 %v966
    %v1685 = vunpack.c.h.b16 %v966
    %v1686 = vunpack.c.l.b16 %v967
    %v1687 = vunpack.c.h.b16 %v967
    %v1688 = vpack.c.b16 %v1626, %v1624
    %v1689 = vpack.c.b16 %v1627, %v1625
    %v1690 = vpack.c.b16 %v1630, %v1628
    %v1691 = vpack.c.b16 %v1631, %v1629
    %v1692 = vpack.c.b16 %v1634, %v1632
    %v1693 = vpack.c.b16 %v1635, %v1633
    %v1694 = vpack.c.b16 %v1638, %v1636
    %v1695 = vpack.c.b16 %v1639, %v1637
    %v1696 = vpack.c.b16 %v1642, %v1640
    %v1697 = vpack.c.b16 %v1643, %v1641
    %v1698 = vpack.c.b16 %v1646, %v1644
    %v1699 = vpack.c.b16 %v1647, %v1645
    %v1700 = vpack.c.b16 %v1650, %v1648
    %v1701 = vpack.c.b16 %v1651, %v1649
    %v1702 = vpack.c.b16 %v1654, %v1652
    %v1703 = vpack.c.b16 %v1655, %v1653
    %v1704 = vpack.c.b16 %v1658, %v1656
    %v1705 = vpack.c.b16 %v1659, %v1657
    %v1706 = vpack.c.b16 %v1662, %v1660
    %v1707 = vpack.c.b16 %v1663, %v1661
    %v1708 = vpack.c.b16 %v1666, %v1664
    %v1709 = vpack.c.b16 %v1667, %v1665
    %v1710 = vpack.c.b16 %v1670, %v1668
    %v1711 = vpack.c.b16 %v1671, %v1669
    %v1712 = vpack.c.b16 %v1674, %v1672
    %v1713 = vpack.c.b16 %v1675, %v1673
    %v1714 = vpack.c.b16 %v1678, %v1676
    %v1715 = vpack.c.b16 %v1679, %v1677
    %v1716 = vpack.c.b16 %v1682, %v1680
    %v1717 = vpack.c.b16 %v1683, %v1681
    %v1718 = vpack.c.b16 %v1686, %v1684
    %v1719 = vpack.c.b16 %v1687, %v1685
    %1752 = vmatprep.subr.bf16.mxu0 %v1703
    %1753 = vmatpush1.bf16.msra.mxu0 %v1702
    %1754 = vmatprep.subr.bf16.mxu0 %v1701
    %1755 = vmatpush1.bf16.msra.mxu0 %v1700
    %1756 = vmatprep.subr.bf16.mxu0 %v1699
    %1757 = vmatpush1.bf16.msra.mxu0 %v1698
    %1758 = vmatprep.subr.bf16.mxu0 %v1697
    %1759 = vmatpush1.bf16.msra.mxu0 %v1696
    %1760 = vmatprep.subr.bf16.mxu0 %v1695
    %1761 = vmatpush1.bf16.msra.mxu0 %v1694
    %1762 = vmatprep.subr.bf16.mxu0 %v1693
    %1763 = vmatpush1.bf16.msra.mxu0 %v1692
    %1764 = vmatprep.subr.bf16.mxu0 %v1691
    %1765 = vmatpush1.bf16.msra.mxu0 %v1690
    %1766 = vmatprep.subr.bf16.mxu0 %v1689
    %1767 = vmatpush1.bf16.msra.mxu0 %v1688
    %1768 = vmatprep.subr.bf16.mxu0 %v1719
    %1769 = vmatpush2.bf16.msra.mxu0 %v1718
    %1770 = vmatprep.subr.bf16.mxu0 %v1717
    %1771 = vmatpush2.bf16.msra.mxu0 %v1716
    %1772 = vmatprep.subr.bf16.mxu0 %v1715
    %1773 = vmatpush2.bf16.msra.mxu0 %v1714
    %1774 = vmatprep.subr.bf16.mxu0 %v1713
    %1775 = vmatpush2.bf16.msra.mxu0 %v1712
    %1776 = vmatprep.subr.bf16.mxu0 %v1711
    %1777 = vmatpush2.bf16.msra.mxu0 %v1710
    %1778 = vmatprep.subr.bf16.mxu0 %v1709
    %1779 = vmatpush2.bf16.msra.mxu0 %v1708
    %1780 = vmatprep.subr.bf16.mxu0 %v1707
    %1781 = vmatpush2.bf16.msra.mxu0 %v1706
    %1782 = vmatprep.subr.bf16.mxu0 %v1705
    %1783 = vmatpush2.bf16.msra.mxu0 %v1704
    %1784 = vmatprep.mubr.bf16.mxu0 %v1561
    %1785 = vmatmul.mubr.bf16.gmra.mxu0 %v1560
    %v1786 = vpop.f32.mrf.mxu0
    %v1787 = vadd.f32 %v1434, %v1786
    %v1788 = vpop.f32.mrf.mxu0
    %v1789 = vadd.f32 %v1436, %v1788
    %v1790 = vpop.f32.mrf.mxu0
    %v1791 = vadd.f32 %v1438, %v1790
    %v1792 = vpop.f32.mrf.mxu0
    %v1793 = vadd.f32 %v1440, %v1792
    %1794 = vmatprep.mubr.bf16.mxu0 %v1563
    %1795 = vmatmul.mubr.bf16.gmra.mxu0 %v1562
    %v1796 = vpop.f32.mrf.mxu0
    %v1797 = vadd.f32 %v1444, %v1796
    %v1798 = vpop.f32.mrf.mxu0
    %v1799 = vadd.f32 %v1446, %v1798
    %v1800 = vpop.f32.mrf.mxu0
    %v1801 = vadd.f32 %v1448, %v1800
    %v1802 = vpop.f32.mrf.mxu0
    %v1803 = vadd.f32 %v1450, %v1802
    %1804 = vmatprep.mubr.bf16.mxu0 %v1565
    %1805 = vmatmul.mubr.bf16.gmra.mxu0 %v1564
    %v1806 = vpop.f32.mrf.mxu0
    %v1807 = vadd.f32 %v1454, %v1806
    %v1808 = vpop.f32.mrf.mxu0
    %v1809 = vadd.f32 %v1456, %v1808
    %v1810 = vpop.f32.mrf.mxu0
    %v1811 = vadd.f32 %v1458, %v1810
    %v1812 = vpop.f32.mrf.mxu0
    %v1813 = vadd.f32 %v1460, %v1812
    %1814 = vmatprep.mubr.bf16.mxu0 %v1567
    %1815 = vmatmul.mubr.bf16.gmra.mxu0 %v1566
    %v1816 = vpop.f32.mrf.mxu0
    %v1817 = vadd.f32 %v1464, %v1816
    %v1818 = vpop.f32.mrf.mxu0
    %v1819 = vadd.f32 %v1466, %v1818
    %v1820 = vpop.f32.mrf.mxu0
    %v1821 = vadd.f32 %v1468, %v1820
    %v1822 = vpop.f32.mrf.mxu0
    %v1823 = vadd.f32 %v1470, %v1822
    %1824 = vmatprep.mubr.bf16.mxu0 %v1569
    %1825 = vmatmul.mubr.bf16.gmra.mxu0 %v1568
    %v1826 = vpop.f32.mrf.mxu0
    %v1827 = vadd.f32 %v1474, %v1826
    %v1828 = vpop.f32.mrf.mxu0
    %v1829 = vadd.f32 %v1476, %v1828
    %v1830 = vpop.f32.mrf.mxu0
    %v1831 = vadd.f32 %v1478, %v1830
    %v1832 = vpop.f32.mrf.mxu0
    %v1833 = vadd.f32 %v1480, %v1832
    %1834 = vmatprep.mubr.bf16.mxu0 %v1571
    %1835 = vmatmul.mubr.bf16.gmra.mxu0 %v1570
    %v1836 = vpop.f32.mrf.mxu0
    %v1837 = vadd.f32 %v1484, %v1836
    %v1838 = vpop.f32.mrf.mxu0
    %v1839 = vadd.f32 %v1486, %v1838
    %v1840 = vpop.f32.mrf.mxu0
    %v1841 = vadd.f32 %v1488, %v1840
    %v1842 = vpop.f32.mrf.mxu0
    %v1843 = vadd.f32 %v1490, %v1842
    %1844 = vmatprep.mubr.bf16.mxu0 %v1573
    %1845 = vmatmul.mubr.bf16.gmra.mxu0 %v1572
    %v1846 = vpop.f32.mrf.mxu0
    %v1847 = vadd.f32 %v1494, %v1846
    %v1848 = vpop.f32.mrf.mxu0
    %v1849 = vadd.f32 %v1496, %v1848
    %v1850 = vpop.f32.mrf.mxu0
    %v1851 = vadd.f32 %v1498, %v1850
    %v1852 = vpop.f32.mrf.mxu0
    %v1853 = vadd.f32 %v1500, %v1852
    %1854 = vmatprep.mubr.bf16.mxu0 %v1575
    %1855 = vmatmul.mubr.bf16.gmra.mxu0 %v1574
    %v1856 = vpop.f32.mrf.mxu0
    %v1857 = vadd.f32 %v1504, %v1856
    %v1858 = vpop.f32.mrf.mxu0
    %v1859 = vadd.f32 %v1506, %v1858
    %v1860 = vpop.f32.mrf.mxu0
    %v1861 = vadd.f32 %v1508, %v1860
    %v1862 = vpop.f32.mrf.mxu0
    %v1863 = vadd.f32 %v1510, %v1862
    %1864 = vdwg.mxu0
    %v1865 = vld [vmem:[#allocation3] sm:$0xee]
    %s1866 = scalar_lea.vmem [#allocation5], 512
    %v1867 = vld [vmem:[%s1866] sm:$0xff]
    %v1868 = vld [vmem:[%s1866 + $0x8] sm:$0xff]
    %v1869 = vld [vmem:[%s1866 + $0x10] sm:$0xff]
    %v1870 = vld [vmem:[%s1866 + $0x18] sm:$0xff]
    %v1871 = vld [vmem:[%s1866 + $0x20] sm:$0xff]
    %v1872 = vld [vmem:[%s1866 + $0x28] sm:$0xff]
    %v1873 = vld [vmem:[%s1866 + $0x30] sm:$0xff]
    %v1874 = vld [vmem:[%s1866 + $0x38] sm:$0xff]
    %v1875 = vld [vmem:[%s1866 + $0x40] sm:$0xff]
    %v1876 = vld [vmem:[%s1866 + $0x48] sm:$0xff]
    %v1877 = vld [vmem:[%s1866 + $0x50] sm:$0xff]
    %v1878 = vld [vmem:[%s1866 + $0x58] sm:$0xff]
    %v1879 = vld [vmem:[%s1866 + $0x60] sm:$0xff]
    %v1880 = vld [vmem:[%s1866 + $0x68] sm:$0xff]
    %v1881 = vld [vmem:[%s1866 + $0x70] sm:$0xff]
    %v1882 = vld [vmem:[%s1866 + $0x78] sm:$0xff]
    %v1883 = vld [vmem:[%s1866 + $0x80] sm:$0xff]
    %v1884 = vld [vmem:[%s1866 + $0x88] sm:$0xff]
    %v1885 = vld [vmem:[%s1866 + $0x90] sm:$0xff]
    %v1886 = vld [vmem:[%s1866 + $0x98] sm:$0xff]
    %v1887 = vld [vmem:[%s1866 + $0xa0] sm:$0xff]
    %v1888 = vld [vmem:[%s1866 + $0xa8] sm:$0xff]
    %v1889 = vld [vmem:[%s1866 + $0xb0] sm:$0xff]
    %v1890 = vld [vmem:[%s1866 + $0xb8] sm:$0xff]
    %v1891 = vld [vmem:[%s1866 + $0xc0] sm:$0xff]
    %v1892 = vld [vmem:[%s1866 + $0xc8] sm:$0xff]
    %v1893 = vld [vmem:[%s1866 + $0xd0] sm:$0xff]
    %v1894 = vld [vmem:[%s1866 + $0xd8] sm:$0xff]
    %v1895 = vld [vmem:[%s1866 + $0xe0] sm:$0xff]
    %v1896 = vld [vmem:[%s1866 + $0xe8] sm:$0xff]
    %v1897 = vld [vmem:[%s1866 + $0xf0] sm:$0xff]
    %v1898 = vld [vmem:[%s1866 + $0xf8] sm:$0xff]
    %v1900 = vunpack.c.l.b16 %v1865
    %v1901 = vunpack.c.h.b16 %v1865
    %v1902 = vpack.c.b16 %v1037, %v1900
    %v1903 = vpack.c.b16 %v1038, %v1901
    %v1904 = vrot.slane %v1902, 1
    %v1905 = vrot.slane %v1071, 1
    %v1906 = vsel %vm574, %v1904, %v1905
    %v1907 = vrot.slane %v1903, 1
    %v1908 = vrot.slane %v1072, 1
    %v1909 = vsel %vm574, %v1907, %v1908
    %v1910 = vrot.slane %v1073, 1
    %v1911 = vsel %vm574, %v1905, %v1910
    %v1912 = vrot.slane %v1074, 1
    %v1913 = vsel %vm574, %v1908, %v1912
    %v1914 = vrot.slane %v1075, 1
    %v1915 = vsel %vm574, %v1910, %v1914
    %v1916 = vrot.slane %v1076, 1
    %v1917 = vsel %vm574, %v1912, %v1916
    %v1918 = vrot.slane %v1077, 1
    %v1919 = vsel %vm574, %v1914, %v1918
    %v1920 = vrot.slane %v1078, 1
    %v1921 = vsel %vm574, %v1916, %v1920
    %v1922 = vrot.slane %v1079, 1
    %v1923 = vsel %vm574, %v1918, %v1922
    %v1924 = vrot.slane %v1080, 1
    %v1925 = vsel %vm574, %v1920, %v1924
    %v1926 = vrot.slane %v1081, 1
    %v1927 = vsel %vm574, %v1922, %v1926
    %v1928 = vrot.slane %v1082, 1
    %v1929 = vsel %vm574, %v1924, %v1928
    %v1930 = vrot.slane %v1083, 1
    %v1931 = vsel %vm574, %v1926, %v1930
    %v1932 = vrot.slane %v1084, 1
    %v1933 = vsel %vm574, %v1928, %v1932
    %v1934 = vrot.slane %v1085, 1
    %v1935 = vsel %vm574, %v1930, %v1934
    %v1936 = vrot.slane %v1086, 1
    %v1937 = vsel %vm574, %v1932, %v1936
    %v1986 = vunpack.c.l.b16 %v1867
    %v1987 = vunpack.c.h.b16 %v1867
    %v1988 = vunpack.c.l.b16 %v1868
    %v1989 = vunpack.c.h.b16 %v1868
    %v1990 = vunpack.c.l.b16 %v1869
    %v1991 = vunpack.c.h.b16 %v1869
    %v1992 = vunpack.c.l.b16 %v1870
    %v1993 = vunpack.c.h.b16 %v1870
    %v1994 = vunpack.c.l.b16 %v1871
    %v1995 = vunpack.c.h.b16 %v1871
    %v1996 = vunpack.c.l.b16 %v1872
    %v1997 = vunpack.c.h.b16 %v1872
    %v1998 = vunpack.c.l.b16 %v1873
    %v1999 = vunpack.c.h.b16 %v1873
    %v2000 = vunpack.c.l.b16 %v1874
    %v2001 = vunpack.c.h.b16 %v1874
    %v2002 = vunpack.c.l.b16 %v1875
    %v2003 = vunpack.c.h.b16 %v1875
    %v2004 = vunpack.c.l.b16 %v1876
    %v2005 = vunpack.c.h.b16 %v1876
    %v2006 = vunpack.c.l.b16 %v1877
    %v2007 = vunpack.c.h.b16 %v1877
    %v2008 = vunpack.c.l.b16 %v1878
    %v2009 = vunpack.c.h.b16 %v1878
    %v2010 = vunpack.c.l.b16 %v1879
    %v2011 = vunpack.c.h.b16 %v1879
    %v2012 = vunpack.c.l.b16 %v1880
    %v2013 = vunpack.c.h.b16 %v1880
    %v2014 = vunpack.c.l.b16 %v1881
    %v2015 = vunpack.c.h.b16 %v1881
    %v2016 = vunpack.c.l.b16 %v1882
    %v2017 = vunpack.c.h.b16 %v1882
    %v2018 = vunpack.c.l.b16 %v1883
    %v2019 = vunpack.c.h.b16 %v1883
    %v2020 = vunpack.c.l.b16 %v1884
    %v2021 = vunpack.c.h.b16 %v1884
    %v2022 = vunpack.c.l.b16 %v1885
    %v2023 = vunpack.c.h.b16 %v1885
    %v2024 = vunpack.c.l.b16 %v1886
    %v2025 = vunpack.c.h.b16 %v1886
    %v2026 = vunpack.c.l.b16 %v1887
    %v2027 = vunpack.c.h.b16 %v1887
    %v2028 = vunpack.c.l.b16 %v1888
    %v2029 = vunpack.c.h.b16 %v1888
    %v2030 = vunpack.c.l.b16 %v1889
    %v2031 = vunpack.c.h.b16 %v1889
    %v2032 = vunpack.c.l.b16 %v1890
    %v2033 = vunpack.c.h.b16 %v1890
    %v2034 = vunpack.c.l.b16 %v1891
    %v2035 = vunpack.c.h.b16 %v1891
    %v2036 = vunpack.c.l.b16 %v1892
    %v2037 = vunpack.c.h.b16 %v1892
    %v2038 = vunpack.c.l.b16 %v1893
    %v2039 = vunpack.c.h.b16 %v1893
    %v2040 = vunpack.c.l.b16 %v1894
    %v2041 = vunpack.c.h.b16 %v1894
    %v2042 = vunpack.c.l.b16 %v1895
    %v2043 = vunpack.c.h.b16 %v1895
    %v2044 = vunpack.c.l.b16 %v1896
    %v2045 = vunpack.c.h.b16 %v1896
    %v2046 = vunpack.c.l.b16 %v1897
    %v2047 = vunpack.c.h.b16 %v1897
    %v2048 = vunpack.c.l.b16 %v1898
    %v2049 = vunpack.c.h.b16 %v1898
    %v2050 = vpack.c.b16 %v1988, %v1986
    %v2051 = vpack.c.b16 %v1989, %v1987
    %v2052 = vpack.c.b16 %v1992, %v1990
    %v2053 = vpack.c.b16 %v1993, %v1991
    %v2054 = vpack.c.b16 %v1996, %v1994
    %v2055 = vpack.c.b16 %v1997, %v1995
    %v2056 = vpack.c.b16 %v2000, %v1998
    %v2057 = vpack.c.b16 %v2001, %v1999
    %v2058 = vpack.c.b16 %v2004, %v2002
    %v2059 = vpack.c.b16 %v2005, %v2003
    %v2060 = vpack.c.b16 %v2008, %v2006
    %v2061 = vpack.c.b16 %v2009, %v2007
    %v2062 = vpack.c.b16 %v2012, %v2010
    %v2063 = vpack.c.b16 %v2013, %v2011
    %v2064 = vpack.c.b16 %v2016, %v2014
    %v2065 = vpack.c.b16 %v2017, %v2015
    %v2066 = vpack.c.b16 %v2020, %v2018
    %v2067 = vpack.c.b16 %v2021, %v2019
    %v2068 = vpack.c.b16 %v2024, %v2022
    %v2069 = vpack.c.b16 %v2025, %v2023
    %v2070 = vpack.c.b16 %v2028, %v2026
    %v2071 = vpack.c.b16 %v2029, %v2027
    %v2072 = vpack.c.b16 %v2032, %v2030
    %v2073 = vpack.c.b16 %v2033, %v2031
    %v2074 = vpack.c.b16 %v2036, %v2034
    %v2075 = vpack.c.b16 %v2037, %v2035
    %v2076 = vpack.c.b16 %v2040, %v2038
    %v2077 = vpack.c.b16 %v2041, %v2039
    %v2078 = vpack.c.b16 %v2044, %v2042
    %v2079 = vpack.c.b16 %v2045, %v2043
    %v2080 = vpack.c.b16 %v2048, %v2046
    %v2081 = vpack.c.b16 %v2049, %v2047
    %2114 = vmatprep.subr.bf16.mxu0 %v2065
    %2115 = vmatpush1.bf16.msra.mxu0 %v2064
    %2116 = vmatprep.subr.bf16.mxu0 %v2063
    %2117 = vmatpush1.bf16.msra.mxu0 %v2062
    %2118 = vmatprep.subr.bf16.mxu0 %v2061
    %2119 = vmatpush1.bf16.msra.mxu0 %v2060
    %2120 = vmatprep.subr.bf16.mxu0 %v2059
    %2121 = vmatpush1.bf16.msra.mxu0 %v2058
    %2122 = vmatprep.subr.bf16.mxu0 %v2057
    %2123 = vmatpush1.bf16.msra.mxu0 %v2056
    %2124 = vmatprep.subr.bf16.mxu0 %v2055
    %2125 = vmatpush1.bf16.msra.mxu0 %v2054
    %2126 = vmatprep.subr.bf16.mxu0 %v2053
    %2127 = vmatpush1.bf16.msra.mxu0 %v2052
    %2128 = vmatprep.subr.bf16.mxu0 %v2051
    %2129 = vmatpush1.bf16.msra.mxu0 %v2050
    %2130 = vmatprep.subr.bf16.mxu0 %v2081
    %2131 = vmatpush2.bf16.msra.mxu0 %v2080
    %2132 = vmatprep.subr.bf16.mxu0 %v2079
    %2133 = vmatpush2.bf16.msra.mxu0 %v2078
    %2134 = vmatprep.subr.bf16.mxu0 %v2077
    %2135 = vmatpush2.bf16.msra.mxu0 %v2076
    %2136 = vmatprep.subr.bf16.mxu0 %v2075
    %2137 = vmatpush2.bf16.msra.mxu0 %v2074
    %2138 = vmatprep.subr.bf16.mxu0 %v2073
    %2139 = vmatpush2.bf16.msra.mxu0 %v2072
    %2140 = vmatprep.subr.bf16.mxu0 %v2071
    %2141 = vmatpush2.bf16.msra.mxu0 %v2070
    %2142 = vmatprep.subr.bf16.mxu0 %v2069
    %2143 = vmatpush2.bf16.msra.mxu0 %v2068
    %2144 = vmatprep.subr.bf16.mxu0 %v2067
    %2145 = vmatpush2.bf16.msra.mxu0 %v2066
    %2146 = vmatprep.mubr.bf16.mxu0 %v1909
    %2147 = vmatmul.mubr.bf16.gmra.mxu0 %v1906
    %v2148 = vpop.f32.mrf.mxu0
    %v2149 = vadd.f32 0.0, %v2148
    %v2150 = vpop.f32.mrf.mxu0
    %v2151 = vadd.f32 0.0, %v2150
    %v2152 = vpop.f32.mrf.mxu0
    %v2153 = vadd.f32 0.0, %v2152
    %v2154 = vpop.f32.mrf.mxu0
    %v2155 = vadd.f32 0.0, %v2154
    %2156 = vmatprep.mubr.bf16.mxu0 %v1913
    %2157 = vmatmul.mubr.bf16.gmra.mxu0 %v1911
    %v2158 = vpop.f32.mrf.mxu0
    %v2159 = vadd.f32 0.0, %v2158
    %v2160 = vpop.f32.mrf.mxu0
    %v2161 = vadd.f32 0.0, %v2160
    %v2162 = vpop.f32.mrf.mxu0
    %v2163 = vadd.f32 0.0, %v2162
    %v2164 = vpop.f32.mrf.mxu0
    %v2165 = vadd.f32 0.0, %v2164
    %2166 = vmatprep.mubr.bf16.mxu0 %v1917
    %2167 = vmatmul.mubr.bf16.gmra.mxu0 %v1915
    %v2168 = vpop.f32.mrf.mxu0
    %v2169 = vadd.f32 0.0, %v2168
    %v2170 = vpop.f32.mrf.mxu0
    %v2171 = vadd.f32 0.0, %v2170
    %v2172 = vpop.f32.mrf.mxu0
    %v2173 = vadd.f32 0.0, %v2172
    %v2174 = vpop.f32.mrf.mxu0
    %v2175 = vadd.f32 0.0, %v2174
    %2176 = vmatprep.mubr.bf16.mxu0 %v1921
    %2177 = vmatmul.mubr.bf16.gmra.mxu0 %v1919
    %v2178 = vpop.f32.mrf.mxu0
    %v2179 = vadd.f32 0.0, %v2178
    %v2180 = vpop.f32.mrf.mxu0
    %v2181 = vadd.f32 0.0, %v2180
    %v2182 = vpop.f32.mrf.mxu0
    %v2183 = vadd.f32 0.0, %v2182
    %v2184 = vpop.f32.mrf.mxu0
    %v2185 = vadd.f32 0.0, %v2184
    %2186 = vmatprep.mubr.bf16.mxu0 %v1925
    %2187 = vmatmul.mubr.bf16.gmra.mxu0 %v1923
    %v2188 = vpop.f32.mrf.mxu0
    %v2189 = vadd.f32 0.0, %v2188
    %v2190 = vpop.f32.mrf.mxu0
    %v2191 = vadd.f32 0.0, %v2190
    %v2192 = vpop.f32.mrf.mxu0
    %v2193 = vadd.f32 0.0, %v2192
    %v2194 = vpop.f32.mrf.mxu0
    %v2195 = vadd.f32 0.0, %v2194
    %2196 = vmatprep.mubr.bf16.mxu0 %v1929
    %2197 = vmatmul.mubr.bf16.gmra.mxu0 %v1927
    %v2198 = vpop.f32.mrf.mxu0
    %v2199 = vadd.f32 0.0, %v2198
    %v2200 = vpop.f32.mrf.mxu0
    %v2201 = vadd.f32 0.0, %v2200
    %v2202 = vpop.f32.mrf.mxu0
    %v2203 = vadd.f32 0.0, %v2202
    %v2204 = vpop.f32.mrf.mxu0
    %v2205 = vadd.f32 0.0, %v2204
    %2206 = vmatprep.mubr.bf16.mxu0 %v1933
    %2207 = vmatmul.mubr.bf16.gmra.mxu0 %v1931
    %v2208 = vpop.f32.mrf.mxu0
    %v2209 = vadd.f32 0.0, %v2208
    %v2210 = vpop.f32.mrf.mxu0
    %v2211 = vadd.f32 0.0, %v2210
    %v2212 = vpop.f32.mrf.mxu0
    %v2213 = vadd.f32 0.0, %v2212
    %v2214 = vpop.f32.mrf.mxu0
    %v2215 = vadd.f32 0.0, %v2214
    %2216 = vmatprep.mubr.bf16.mxu0 %v1937
    %2217 = vmatmul.mubr.bf16.gmra.mxu0 %v1935
    %v2218 = vpop.f32.mrf.mxu0
    %v2219 = vadd.f32 0.0, %v2218
    %v2220 = vpop.f32.mrf.mxu0
    %v2221 = vadd.f32 0.0, %v2220
    %v2222 = vpop.f32.mrf.mxu0
    %v2223 = vadd.f32 0.0, %v2222
    %v2224 = vpop.f32.mrf.mxu0
    %v2225 = vadd.f32 0.0, %v2224
    %2226 = vdwg.mxu0
    %v2227 = vadd.f32 %v1787, %v2149
    %v2228 = vadd.f32 %v1789, %v2151
    %v2229 = vadd.f32 %v1791, %v2153
    %v2230 = vadd.f32 %v1793, %v2155
    %v2231 = vadd.f32 %v1797, %v2159
    %v2232 = vadd.f32 %v1799, %v2161
    %v2233 = vadd.f32 %v1801, %v2163
    %v2234 = vadd.f32 %v1803, %v2165
    %v2235 = vadd.f32 %v1807, %v2169
    %v2236 = vadd.f32 %v1809, %v2171
    %v2237 = vadd.f32 %v1811, %v2173
    %v2238 = vadd.f32 %v1813, %v2175
    %v2239 = vadd.f32 %v1817, %v2179
    %v2240 = vadd.f32 %v1819, %v2181
    %v2241 = vadd.f32 %v1821, %v2183
    %v2242 = vadd.f32 %v1823, %v2185
    %v2243 = vadd.f32 %v1827, %v2189
    %v2244 = vadd.f32 %v1829, %v2191
    %v2245 = vadd.f32 %v1831, %v2193
    %v2246 = vadd.f32 %v1833, %v2195
    %v2247 = vadd.f32 %v1837, %v2199
    %v2248 = vadd.f32 %v1839, %v2201
    %v2249 = vadd.f32 %v1841, %v2203
    %v2250 = vadd.f32 %v1843, %v2205
    %v2251 = vadd.f32 %v1847, %v2209
    %v2252 = vadd.f32 %v1849, %v2211
    %v2253 = vadd.f32 %v1851, %v2213
    %v2254 = vadd.f32 %v1853, %v2215
    %v2255 = vadd.f32 %v1857, %v2219
    %v2256 = vadd.f32 %v1859, %v2221
    %v2257 = vadd.f32 %v1861, %v2223
    %v2258 = vadd.f32 %v1863, %v2225
    %v2259 = vmax.f32 %v2227, 0.0
    %v2260 = vmax.f32 %v2228, 0.0
    %v2261 = vmax.f32 %v2229, 0.0
    %v2262 = vmax.f32 %v2230, 0.0
    %v2263 = vmax.f32 %v2231, 0.0
    %v2264 = vmax.f32 %v2232, 0.0
    %v2265 = vmax.f32 %v2233, 0.0
    %v2266 = vmax.f32 %v2234, 0.0
    %v2267 = vmax.f32 %v2235, 0.0
    %v2268 = vmax.f32 %v2236, 0.0
    %v2269 = vmax.f32 %v2237, 0.0
    %v2270 = vmax.f32 %v2238, 0.0
    %v2271 = vmax.f32 %v2239, 0.0
    %v2272 = vmax.f32 %v2240, 0.0
    %v2273 = vmax.f32 %v2241, 0.0
    %v2274 = vmax.f32 %v2242, 0.0
    %v2275 = vmax.f32 %v2243, 0.0
    %v2276 = vmax.f32 %v2244, 0.0
    %v2277 = vmax.f32 %v2245, 0.0
    %v2278 = vmax.f32 %v2246, 0.0
    %v2279 = vmax.f32 %v2247, 0.0
    %v2280 = vmax.f32 %v2248, 0.0
    %v2281 = vmax.f32 %v2249, 0.0
    %v2282 = vmax.f32 %v2250, 0.0
    %v2283 = vmax.f32 %v2251, 0.0
    %v2284 = vmax.f32 %v2252, 0.0
    %v2285 = vmax.f32 %v2253, 0.0
    %v2286 = vmax.f32 %v2254, 0.0
    %v2287 = vmax.f32 %v2255, 0.0
    %v2288 = vmax.f32 %v2256, 0.0
    %v2289 = vmax.f32 %v2257, 0.0
    %v2290 = vmax.f32 %v2258, 0.0
    %v2291 = vpack.c.bf16 %v2261, %v2259
    %v2292 = vpack.c.bf16 %v2262, %v2260
    %v2293 = vpack.c.bf16 %v2265, %v2263
    %v2294 = vpack.c.bf16 %v2266, %v2264
    %v2295 = vpack.c.bf16 %v2269, %v2267
    %v2296 = vpack.c.bf16 %v2270, %v2268
    %v2297 = vpack.c.bf16 %v2273, %v2271
    %v2298 = vpack.c.bf16 %v2274, %v2272
    %v2299 = vpack.c.bf16 %v2277, %v2275
    %v2300 = vpack.c.bf16 %v2278, %v2276
    %v2301 = vpack.c.bf16 %v2281, %v2279
    %v2302 = vpack.c.bf16 %v2282, %v2280
    %v2303 = vpack.c.bf16 %v2285, %v2283
    %v2304 = vpack.c.bf16 %v2286, %v2284
    %v2305 = vpack.c.bf16 %v2289, %v2287
    %v2306 = vpack.c.bf16 %v2290, %v2288
    %v2323 = vunpack.c.l.b16 %v2291
    %v2324 = vunpack.c.l.b16 %v2292
    %v2325 = vunpack.c.h.b16 %v2291
    %v2326 = vunpack.c.h.b16 %v2292
    %v2327 = vunpack.c.l.b16 %v2293
    %v2328 = vunpack.c.l.b16 %v2294
    %v2329 = vunpack.c.h.b16 %v2293
    %v2330 = vunpack.c.h.b16 %v2294
    %v2331 = vunpack.c.l.b16 %v2295
    %v2332 = vunpack.c.l.b16 %v2296
    %v2333 = vunpack.c.h.b16 %v2295
    %v2334 = vunpack.c.h.b16 %v2296
    %v2335 = vunpack.c.l.b16 %v2297
    %v2336 = vunpack.c.l.b16 %v2298
    %v2337 = vunpack.c.h.b16 %v2297
    %v2338 = vunpack.c.h.b16 %v2298
    %v2339 = vunpack.c.l.b16 %v2299
    %v2340 = vunpack.c.l.b16 %v2300
    %v2341 = vunpack.c.h.b16 %v2299
    %v2342 = vunpack.c.h.b16 %v2300
    %v2343 = vunpack.c.l.b16 %v2301
    %v2344 = vunpack.c.l.b16 %v2302
    %v2345 = vunpack.c.h.b16 %v2301
    %v2346 = vunpack.c.h.b16 %v2302
    %v2347 = vunpack.c.l.b16 %v2303
    %v2348 = vunpack.c.l.b16 %v2304
    %v2349 = vunpack.c.h.b16 %v2303
    %v2350 = vunpack.c.h.b16 %v2304
    %v2351 = vunpack.c.l.b16 %v2305
    %v2352 = vunpack.c.l.b16 %v2306
    %v2353 = vunpack.c.h.b16 %v2305
    %v2354 = vunpack.c.h.b16 %v2306
    %v2355 = vpack.c.b16 %v2324, %v2323
    %v2356 = vpack.c.b16 %v2326, %v2325
    %v2357 = vpack.c.b16 %v2328, %v2327
    %v2358 = vpack.c.b16 %v2330, %v2329
    %v2359 = vpack.c.b16 %v2332, %v2331
    %v2360 = vpack.c.b16 %v2334, %v2333
    %v2361 = vpack.c.b16 %v2336, %v2335
    %v2362 = vpack.c.b16 %v2338, %v2337
    %v2363 = vpack.c.b16 %v2340, %v2339
    %v2364 = vpack.c.b16 %v2342, %v2341
    %v2365 = vpack.c.b16 %v2344, %v2343
    %v2366 = vpack.c.b16 %v2346, %v2345
    %v2367 = vpack.c.b16 %v2348, %v2347
    %v2368 = vpack.c.b16 %v2350, %v2349
    %v2369 = vpack.c.b16 %v2352, %v2351
    %v2370 = vpack.c.b16 %v2354, %v2353
    %2387 = vst [vmem:[#allocation3] sm:$0xff] %v2355
    %2388 = vst [vmem:[#allocation3 + $0x8] sm:$0xff] %v2356
    %2389 = vst [vmem:[#allocation3 + $0x10] sm:$0xff] %v2357
    %2390 = vst [vmem:[#allocation3 + $0x18] sm:$0xff] %v2358
    %2391 = vst [vmem:[#allocation3 + $0x20] sm:$0xff] %v2359
    %2392 = vst [vmem:[#allocation3 + $0x28] sm:$0xff] %v2360
    %2393 = vst [vmem:[#allocation3 + $0x30] sm:$0xff] %v2361
    %2394 = vst [vmem:[#allocation3 + $0x38] sm:$0xff] %v2362
    %2395 = vst [vmem:[#allocation3 + $0x40] sm:$0xff] %v2363
    %2396 = vst [vmem:[#allocation3 + $0x48] sm:$0xff] %v2364
    %2397 = vst [vmem:[#allocation3 + $0x50] sm:$0xff] %v2365
    %2398 = vst [vmem:[#allocation3 + $0x58] sm:$0xff] %v2366
    %2399 = vst [vmem:[#allocation3 + $0x60] sm:$0xff] %v2367
    %2400 = vst [vmem:[#allocation3 + $0x68] sm:$0xff] %v2368
    %2401 = vst [vmem:[#allocation3 + $0x70] sm:$0xff] %v2369
    %2402 = vst [vmem:[#allocation3 + $0x78] sm:$0xff] %v2370
    %v2403 = vld [vmem:[#allocation3] sm:$0xff]
    %v2404 = vld [vmem:[#allocation3 + $0x8] sm:$0xff]
    %v2405 = vld [vmem:[#allocation3 + $0x10] sm:$0xff]
    %v2406 = vld [vmem:[#allocation3 + $0x18] sm:$0xff]
    %v2407 = vld [vmem:[#allocation3 + $0x20] sm:$0xff]
    %v2408 = vld [vmem:[#allocation3 + $0x28] sm:$0xff]
    %v2409 = vld [vmem:[#allocation3 + $0x30] sm:$0xff]
    %v2410 = vld [vmem:[#allocation3 + $0x38] sm:$0xff]
    %v2411 = vld [vmem:[#allocation3 + $0x40] sm:$0xff]
    %v2412 = vld [vmem:[#allocation3 + $0x48] sm:$0xff]
    %v2413 = vld [vmem:[#allocation3 + $0x50] sm:$0xff]
    %v2414 = vld [vmem:[#allocation3 + $0x58] sm:$0xff]
    %v2415 = vld [vmem:[#allocation3 + $0x60] sm:$0xff]
    %v2416 = vld [vmem:[#allocation3 + $0x68] sm:$0xff]
    %v2417 = vld [vmem:[#allocation3 + $0x70] sm:$0xff]
    %v2418 = vld [vmem:[#allocation3 + $0x78] sm:$0xff]
    %v2419 = vld [vmem:[#allocation8] sm:$0xf]
    %v2420 = vld [vmem:[#allocation8 + $0x4] sm:$0xf]
    %v2421 = vld [vmem:[#allocation8 + $0x8] sm:$0xf]
    %v2422 = vld [vmem:[#allocation8 + $0xc] sm:$0xf]
    %v2423 = vld [vmem:[#allocation8 + $0x10] sm:$0xf]
    %v2424 = vld [vmem:[#allocation8 + $0x14] sm:$0xf]
    %v2425 = vld [vmem:[#allocation8 + $0x18] sm:$0xf]
    %v2426 = vld [vmem:[#allocation8 + $0x1c] sm:$0xf]
    %v2427 = vld [vmem:[#allocation8 + $0x20] sm:$0xf]
    %v2428 = vld [vmem:[#allocation8 + $0x24] sm:$0xf]
    %v2429 = vld [vmem:[#allocation8 + $0x28] sm:$0xf]
    %v2430 = vld [vmem:[#allocation8 + $0x2c] sm:$0xf]
    %v2431 = vld [vmem:[#allocation8 + $0x30] sm:$0xf]
    %v2432 = vld [vmem:[#allocation8 + $0x34] sm:$0xf]
    %v2433 = vld [vmem:[#allocation8 + $0x38] sm:$0xf]
    %v2434 = vld [vmem:[#allocation8 + $0x3c] sm:$0xf]
    %v2435 = vld [vmem:[#allocation8 + $0x40] sm:$0xf]
    %v2436 = vld [vmem:[#allocation8 + $0x44] sm:$0xf]
    %v2437 = vld [vmem:[#allocation8 + $0x48] sm:$0xf]
    %v2438 = vld [vmem:[#allocation8 + $0x4c] sm:$0xf]
    %v2439 = vld [vmem:[#allocation8 + $0x50] sm:$0xf]
    %v2440 = vld [vmem:[#allocation8 + $0x54] sm:$0xf]
    %v2441 = vld [vmem:[#allocation8 + $0x58] sm:$0xf]
    %v2442 = vld [vmem:[#allocation8 + $0x5c] sm:$0xf]
    %v2443 = vld [vmem:[#allocation8 + $0x60] sm:$0xf]
    %v2444 = vld [vmem:[#allocation8 + $0x64] sm:$0xf]
    %v2445 = vld [vmem:[#allocation8 + $0x68] sm:$0xf]
    %v2446 = vld [vmem:[#allocation8 + $0x6c] sm:$0xf]
    %v2447 = vld [vmem:[#allocation8 + $0x70] sm:$0xf]
    %v2448 = vld [vmem:[#allocation8 + $0x74] sm:$0xf]
    %v2449 = vld [vmem:[#allocation8 + $0x78] sm:$0xf]
    %v2450 = vld [vmem:[#allocation8 + $0x7c] sm:$0xf]
    %v2451 = vld [vmem:[#allocation3] sm:$0xff]
    %v2452 = vld [vmem:[#allocation3 + $0x8] sm:$0xff]
    %v2453 = vld [vmem:[#allocation3 + $0x10] sm:$0xff]
    %v2454 = vld [vmem:[#allocation3 + $0x18] sm:$0xff]
    %v2455 = vld [vmem:[#allocation3 + $0x20] sm:$0xff]
    %v2456 = vld [vmem:[#allocation3 + $0x28] sm:$0xff]
    %v2457 = vld [vmem:[#allocation3 + $0x30] sm:$0xff]
    %v2458 = vld [vmem:[#allocation3 + $0x38] sm:$0xff]
    %v2459 = vld [vmem:[#allocation3 + $0x40] sm:$0xff]
    %v2460 = vld [vmem:[#allocation3 + $0x48] sm:$0xff]
    %v2461 = vld [vmem:[#allocation3 + $0x50] sm:$0xff]
    %v2462 = vld [vmem:[#allocation3 + $0x58] sm:$0xff]
    %v2463 = vld [vmem:[#allocation3 + $0x60] sm:$0xff]
    %v2464 = vld [vmem:[#allocation3 + $0x68] sm:$0xff]
    %v2465 = vld [vmem:[#allocation3 + $0x70] sm:$0xff]
    %v2466 = vld [vmem:[#allocation3 + $0x78] sm:$0xff]
    %v2467 = vld [vmem:[#allocation3 + $0x80] sm:$0x11]
    %s2468 = scalar_lea.vmem [#allocation8], 128
    %v2469 = vld [vmem:[%s2468] sm:$0xf]
    %v2470 = vld [vmem:[%s2468 + $0x4] sm:$0xf]
    %v2471 = vld [vmem:[%s2468 + $0x8] sm:$0xf]
    %v2472 = vld [vmem:[%s2468 + $0xc] sm:$0xf]
    %v2473 = vld [vmem:[%s2468 + $0x10] sm:$0xf]
    %v2474 = vld [vmem:[%s2468 + $0x14] sm:$0xf]
    %v2475 = vld [vmem:[%s2468 + $0x18] sm:$0xf]
    %v2476 = vld [vmem:[%s2468 + $0x1c] sm:$0xf]
    %v2477 = vld [vmem:[%s2468 + $0x20] sm:$0xf]
    %v2478 = vld [vmem:[%s2468 + $0x24] sm:$0xf]
    %v2479 = vld [vmem:[%s2468 + $0x28] sm:$0xf]
    %v2480 = vld [vmem:[%s2468 + $0x2c] sm:$0xf]
    %v2481 = vld [vmem:[%s2468 + $0x30] sm:$0xf]
    %v2482 = vld [vmem:[%s2468 + $0x34] sm:$0xf]
    %v2483 = vld [vmem:[%s2468 + $0x38] sm:$0xf]
    %v2484 = vld [vmem:[%s2468 + $0x3c] sm:$0xf]
    %v2485 = vld [vmem:[%s2468 + $0x40] sm:$0xf]
    %v2486 = vld [vmem:[%s2468 + $0x44] sm:$0xf]
    %v2487 = vld [vmem:[%s2468 + $0x48] sm:$0xf]
    %v2488 = vld [vmem:[%s2468 + $0x4c] sm:$0xf]
    %v2489 = vld [vmem:[%s2468 + $0x50] sm:$0xf]
    %v2490 = vld [vmem:[%s2468 + $0x54] sm:$0xf]
    %v2491 = vld [vmem:[%s2468 + $0x58] sm:$0xf]
    %v2492 = vld [vmem:[%s2468 + $0x5c] sm:$0xf]
    %v2493 = vld [vmem:[%s2468 + $0x60] sm:$0xf]
    %v2494 = vld [vmem:[%s2468 + $0x64] sm:$0xf]
    %v2495 = vld [vmem:[%s2468 + $0x68] sm:$0xf]
    %v2496 = vld [vmem:[%s2468 + $0x6c] sm:$0xf]
    %v2497 = vld [vmem:[%s2468 + $0x70] sm:$0xf]
    %v2498 = vld [vmem:[%s2468 + $0x74] sm:$0xf]
    %v2499 = vld [vmem:[%s2468 + $0x78] sm:$0xf]
    %v2500 = vld [vmem:[%s2468 + $0x7c] sm:$0xf]
    %v2518 = vunpack.c.l.b16 %v2451
    %v2519 = vunpack.c.h.b16 %v2451
    %v2520 = vunpack.c.l.b16 %v2452
    %v2521 = vunpack.c.h.b16 %v2452
    %v2522 = vunpack.c.l.b16 %v2453
    %v2523 = vunpack.c.h.b16 %v2453
    %v2524 = vunpack.c.l.b16 %v2454
    %v2525 = vunpack.c.h.b16 %v2454
    %v2526 = vunpack.c.l.b16 %v2455
    %v2527 = vunpack.c.h.b16 %v2455
    %v2528 = vunpack.c.l.b16 %v2456
    %v2529 = vunpack.c.h.b16 %v2456
    %v2530 = vunpack.c.l.b16 %v2457
    %v2531 = vunpack.c.h.b16 %v2457
    %v2532 = vunpack.c.l.b16 %v2458
    %v2533 = vunpack.c.h.b16 %v2458
    %v2534 = vunpack.c.l.b16 %v2459
    %v2535 = vunpack.c.h.b16 %v2459
    %v2536 = vunpack.c.l.b16 %v2460
    %v2537 = vunpack.c.h.b16 %v2460
    %v2538 = vunpack.c.l.b16 %v2461
    %v2539 = vunpack.c.h.b16 %v2461
    %v2540 = vunpack.c.l.b16 %v2462
    %v2541 = vunpack.c.h.b16 %v2462
    %v2542 = vunpack.c.l.b16 %v2463
    %v2543 = vunpack.c.h.b16 %v2463
    %v2544 = vunpack.c.l.b16 %v2464
    %v2545 = vunpack.c.h.b16 %v2464
    %v2546 = vunpack.c.l.b16 %v2465
    %v2547 = vunpack.c.h.b16 %v2465
    %v2548 = vunpack.c.l.b16 %v2466
    %v2549 = vunpack.c.h.b16 %v2466
    %v2550 = vunpack.c.l.b16 %v2467
    %v2551 = vunpack.c.h.b16 %v2467
    %v2552 = vpack.c.b16 %v2520, %v2518
    %v2553 = vpack.c.b16 %v2521, %v2519
    %v2554 = vpack.c.b16 %v2524, %v2522
    %v2555 = vpack.c.b16 %v2525, %v2523
    %v2556 = vpack.c.b16 %v2528, %v2526
    %v2557 = vpack.c.b16 %v2529, %v2527
    %v2558 = vpack.c.b16 %v2532, %v2530
    %v2559 = vpack.c.b16 %v2533, %v2531
    %v2560 = vpack.c.b16 %v2536, %v2534
    %v2561 = vpack.c.b16 %v2537, %v2535
    %v2562 = vpack.c.b16 %v2540, %v2538
    %v2563 = vpack.c.b16 %v2541, %v2539
    %v2564 = vpack.c.b16 %v2544, %v2542
    %v2565 = vpack.c.b16 %v2545, %v2543
    %v2566 = vpack.c.b16 %v2548, %v2546
    %v2567 = vpack.c.b16 %v2549, %v2547
    %v2568 = vpack.c.b16 %v2550, %v2550
    %v2569 = vpack.c.b16 %v2551, %v2551
    %v2571 = vshrl.u32 %v2552, 16
    %v2573 = vshll.u32 %v2552, 16
    %v2575 = vrot.slane %v2573, 1
    %v2576 = vor.u32 %v2571, %v2575
    %v2578 = vshll.u32 %v2554, 16
    %v2580 = vrot.slane %v2578, 1
    %v2581 = vsel %vm145, %v2576, %v2580
    %v2583 = vshrl.u32 %v2553, 16
    %v2585 = vshll.u32 %v2553, 16
    %v2587 = vrot.slane %v2585, 1
    %v2588 = vor.u32 %v2583, %v2587
    %v2590 = vshll.u32 %v2555, 16
    %v2592 = vrot.slane %v2590, 1
    %v2593 = vsel %vm145, %v2588, %v2592
    %v2594 = vshrl.u32 %v2554, 16
    %v2596 = vor.u32 %v2594, %v2580
    %v2598 = vshll.u32 %v2556, 16
    %v2600 = vrot.slane %v2598, 1
    %v2601 = vsel %vm145, %v2596, %v2600
    %v2602 = vshrl.u32 %v2555, 16
    %v2604 = vor.u32 %v2602, %v2592
    %v2606 = vshll.u32 %v2557, 16
    %v2608 = vrot.slane %v2606, 1
    %v2609 = vsel %vm145, %v2604, %v2608
    %v2610 = vshrl.u32 %v2556, 16
    %v2612 = vor.u32 %v2610, %v2600
    %v2614 = vshll.u32 %v2558, 16
    %v2616 = vrot.slane %v2614, 1
    %v2617 = vsel %vm145, %v2612, %v2616
    %v2618 = vshrl.u32 %v2557, 16
    %v2620 = vor.u32 %v2618, %v2608
    %v2622 = vshll.u32 %v2559, 16
    %v2624 = vrot.slane %v2622, 1
    %v2625 = vsel %vm145, %v2620, %v2624
    %v2626 = vshrl.u32 %v2558, 16
    %v2628 = vor.u32 %v2626, %v2616
    %v2630 = vshll.u32 %v2560, 16
    %v2632 = vrot.slane %v2630, 1
    %v2633 = vsel %vm145, %v2628, %v2632
    %v2634 = vshrl.u32 %v2559, 16
    %v2636 = vor.u32 %v2634, %v2624
    %v2638 = vshll.u32 %v2561, 16
    %v2640 = vrot.slane %v2638, 1
    %v2641 = vsel %vm145, %v2636, %v2640
    %v2642 = vshrl.u32 %v2560, 16
    %v2644 = vor.u32 %v2642, %v2632
    %v2646 = vshll.u32 %v2562, 16
    %v2648 = vrot.slane %v2646, 1
    %v2649 = vsel %vm145, %v2644, %v2648
    %v2650 = vshrl.u32 %v2561, 16
    %v2652 = vor.u32 %v2650, %v2640
    %v2654 = vshll.u32 %v2563, 16
    %v2656 = vrot.slane %v2654, 1
    %v2657 = vsel %vm145, %v2652, %v2656
    %v2658 = vshrl.u32 %v2562, 16
    %v2660 = vor.u32 %v2658, %v2648
    %v2662 = vshll.u32 %v2564, 16
    %v2664 = vrot.slane %v2662, 1
    %v2665 = vsel %vm145, %v2660, %v2664
    %v2666 = vshrl.u32 %v2563, 16
    %v2668 = vor.u32 %v2666, %v2656
    %v2670 = vshll.u32 %v2565, 16
    %v2672 = vrot.slane %v2670, 1
    %v2673 = vsel %vm145, %v2668, %v2672
    %v2674 = vshrl.u32 %v2564, 16
    %v2676 = vor.u32 %v2674, %v2664
    %v2678 = vshll.u32 %v2566, 16
    %v2680 = vrot.slane %v2678, 1
    %v2681 = vsel %vm145, %v2676, %v2680
    %v2682 = vshrl.u32 %v2565, 16
    %v2684 = vor.u32 %v2682, %v2672
    %v2686 = vshll.u32 %v2567, 16
    %v2688 = vrot.slane %v2686, 1
    %v2689 = vsel %vm145, %v2684, %v2688
    %v2690 = vshrl.u32 %v2566, 16
    %v2692 = vor.u32 %v2690, %v2680
    %v2694 = vshll.u32 %v2568, 16
    %v2696 = vrot.slane %v2694, 1
    %v2697 = vsel %vm145, %v2692, %v2696
    %v2698 = vshrl.u32 %v2567, 16
    %v2700 = vor.u32 %v2698, %v2688
    %v2702 = vshll.u32 %v2569, 16
    %v2704 = vrot.slane %v2702, 1
    %v2705 = vsel %vm145, %v2700, %v2704
    %v2754 = vunpack.c.l.b16 %v2469
    %v2755 = vunpack.c.l.b16 %v2470
    %v2756 = vunpack.c.l.b16 %v2471
    %v2757 = vunpack.c.l.b16 %v2472
    %v2758 = vunpack.c.l.b16 %v2473
    %v2759 = vunpack.c.l.b16 %v2474
    %v2760 = vunpack.c.l.b16 %v2475
    %v2761 = vunpack.c.l.b16 %v2476
    %v2762 = vunpack.c.l.b16 %v2477
    %v2763 = vunpack.c.l.b16 %v2478
    %v2764 = vunpack.c.l.b16 %v2479
    %v2765 = vunpack.c.l.b16 %v2480
    %v2766 = vunpack.c.l.b16 %v2481
    %v2767 = vunpack.c.l.b16 %v2482
    %v2768 = vunpack.c.l.b16 %v2483
    %v2769 = vunpack.c.l.b16 %v2484
    %v2770 = vunpack.c.l.b16 %v2485
    %v2771 = vunpack.c.l.b16 %v2486
    %v2772 = vunpack.c.l.b16 %v2487
    %v2773 = vunpack.c.l.b16 %v2488
    %v2774 = vunpack.c.l.b16 %v2489
    %v2775 = vunpack.c.l.b16 %v2490
    %v2776 = vunpack.c.l.b16 %v2491
    %v2777 = vunpack.c.l.b16 %v2492
    %v2778 = vunpack.c.l.b16 %v2493
    %v2779 = vunpack.c.l.b16 %v2494
    %v2780 = vunpack.c.l.b16 %v2495
    %v2781 = vunpack.c.l.b16 %v2496
    %v2782 = vunpack.c.l.b16 %v2497
    %v2783 = vunpack.c.l.b16 %v2498
    %v2784 = vunpack.c.l.b16 %v2499
    %v2785 = vunpack.c.l.b16 %v2500
    %v2786 = vpack.c.b16 %v2755, %v2754
    %v2787 = vpack.c.b16 %v2757, %v2756
    %v2788 = vpack.c.b16 %v2759, %v2758
    %v2789 = vpack.c.b16 %v2761, %v2760
    %v2790 = vpack.c.b16 %v2763, %v2762
    %v2791 = vpack.c.b16 %v2765, %v2764
    %v2792 = vpack.c.b16 %v2767, %v2766
    %v2793 = vpack.c.b16 %v2769, %v2768
    %v2794 = vpack.c.b16 %v2771, %v2770
    %v2795 = vpack.c.b16 %v2773, %v2772
    %v2796 = vpack.c.b16 %v2775, %v2774
    %v2797 = vpack.c.b16 %v2777, %v2776
    %v2798 = vpack.c.b16 %v2779, %v2778
    %v2799 = vpack.c.b16 %v2781, %v2780
    %v2800 = vpack.c.b16 %v2783, %v2782
    %v2801 = vpack.c.b16 %v2785, %v2784
    %2818 = vmatprep.subr.bf16.mxu0 0
    %2819 = vmatpush1.bf16.msra.mxu0 %v2793
    %2820 = vmatprep.subr.bf16.mxu0 0
    %2821 = vmatpush1.bf16.msra.mxu0 %v2792
    %2822 = vmatprep.subr.bf16.mxu0 0
    %2823 = vmatpush1.bf16.msra.mxu0 %v2791
    %2824 = vmatprep.subr.bf16.mxu0 0
    %2825 = vmatpush1.bf16.msra.mxu0 %v2790
    %2826 = vmatprep.subr.bf16.mxu0 0
    %2827 = vmatpush1.bf16.msra.mxu0 %v2789
    %2828 = vmatprep.subr.bf16.mxu0 0
    %2829 = vmatpush1.bf16.msra.mxu0 %v2788
    %2830 = vmatprep.subr.bf16.mxu0 0
    %2831 = vmatpush1.bf16.msra.mxu0 %v2787
    %2832 = vmatprep.subr.bf16.mxu0 0
    %2833 = vmatpush1.bf16.msra.mxu0 %v2786
    %2834 = vmatprep.subr.bf16.mxu0 0
    %2835 = vmatpush2.bf16.msra.mxu0 %v2801
    %2836 = vmatprep.subr.bf16.mxu0 0
    %2837 = vmatpush2.bf16.msra.mxu0 %v2800
    %2838 = vmatprep.subr.bf16.mxu0 0
    %2839 = vmatpush2.bf16.msra.mxu0 %v2799
    %2840 = vmatprep.subr.bf16.mxu0 0
    %2841 = vmatpush2.bf16.msra.mxu0 %v2798
    %2842 = vmatprep.subr.bf16.mxu0 0
    %2843 = vmatpush2.bf16.msra.mxu0 %v2797
    %2844 = vmatprep.subr.bf16.mxu0 0
    %2845 = vmatpush2.bf16.msra.mxu0 %v2796
    %2846 = vmatprep.subr.bf16.mxu0 0
    %2847 = vmatpush2.bf16.msra.mxu0 %v2795
    %2848 = vmatprep.subr.bf16.mxu0 0
    %2849 = vmatpush2.bf16.msra.mxu0 %v2794
    %2850 = vmatprep.mubr.bf16.mxu0 %v2593
    %2851 = vmatmul.mubr.bf16.gmra.mxu0 %v2581
    %v2852 = vpop.f32.mrf.mxu0
    %v2853 = vadd.f32 0.0, %v2852
    %v2854 = vpop.f32.mrf.mxu0
    %v2855 = vpop.f32.mrf.mxu0
    %v2856 = vadd.f32 0.0, %v2855
    %v2857 = vpop.f32.mrf.mxu0
    %2858 = vmatprep.mubr.bf16.mxu0 %v2609
    %2859 = vmatmul.mubr.bf16.gmra.mxu0 %v2601
    %v2860 = vpop.f32.mrf.mxu0
    %v2861 = vadd.f32 0.0, %v2860
    %v2862 = vpop.f32.mrf.mxu0
    %v2863 = vpop.f32.mrf.mxu0
    %v2864 = vadd.f32 0.0, %v2863
    %v2865 = vpop.f32.mrf.mxu0
    %2866 = vmatprep.mubr.bf16.mxu0 %v2625
    %2867 = vmatmul.mubr.bf16.gmra.mxu0 %v2617
    %v2868 = vpop.f32.mrf.mxu0
    %v2869 = vadd.f32 0.0, %v2868
    %v2870 = vpop.f32.mrf.mxu0
    %v2871 = vpop.f32.mrf.mxu0
    %v2872 = vadd.f32 0.0, %v2871
    %v2873 = vpop.f32.mrf.mxu0
    %2874 = vmatprep.mubr.bf16.mxu0 %v2641
    %2875 = vmatmul.mubr.bf16.gmra.mxu0 %v2633
    %v2876 = vpop.f32.mrf.mxu0
    %v2877 = vadd.f32 0.0, %v2876
    %v2878 = vpop.f32.mrf.mxu0
    %v2879 = vpop.f32.mrf.mxu0
    %v2880 = vadd.f32 0.0, %v2879
    %v2881 = vpop.f32.mrf.mxu0
    %2882 = vmatprep.mubr.bf16.mxu0 %v2657
    %2883 = vmatmul.mubr.bf16.gmra.mxu0 %v2649
    %v2884 = vpop.f32.mrf.mxu0
    %v2885 = vadd.f32 0.0, %v2884
    %v2886 = vpop.f32.mrf.mxu0
    %v2887 = vpop.f32.mrf.mxu0
    %v2888 = vadd.f32 0.0, %v2887
    %v2889 = vpop.f32.mrf.mxu0
    %2890 = vmatprep.mubr.bf16.mxu0 %v2673
    %2891 = vmatmul.mubr.bf16.gmra.mxu0 %v2665
    %v2892 = vpop.f32.mrf.mxu0
    %v2893 = vadd.f32 0.0, %v2892
    %v2894 = vpop.f32.mrf.mxu0
    %v2895 = vpop.f32.mrf.mxu0
    %v2896 = vadd.f32 0.0, %v2895
    %v2897 = vpop.f32.mrf.mxu0
    %2898 = vmatprep.mubr.bf16.mxu0 %v2689
    %2899 = vmatmul.mubr.bf16.gmra.mxu0 %v2681
    %v2900 = vpop.f32.mrf.mxu0
    %v2901 = vadd.f32 0.0, %v2900
    %v2902 = vpop.f32.mrf.mxu0
    %v2903 = vpop.f32.mrf.mxu0
    %v2904 = vadd.f32 0.0, %v2903
    %v2905 = vpop.f32.mrf.mxu0
    %2906 = vmatprep.mubr.bf16.mxu0 %v2705
    %2907 = vmatmul.mubr.bf16.gmra.mxu0 %v2697
    %v2908 = vpop.f32.mrf.mxu0
    %v2909 = vadd.f32 0.0, %v2908
    %v2910 = vpop.f32.mrf.mxu0
    %v2911 = vpop.f32.mrf.mxu0
    %v2912 = vadd.f32 0.0, %v2911
    %v2913 = vpop.f32.mrf.mxu0
    %2914 = vdwg.mxu0
    %v2931 = vunpack.c.l.b16 %v2403
    %v2932 = vunpack.c.h.b16 %v2403
    %v2933 = vunpack.c.l.b16 %v2404
    %v2934 = vunpack.c.h.b16 %v2404
    %v2935 = vunpack.c.l.b16 %v2405
    %v2936 = vunpack.c.h.b16 %v2405
    %v2937 = vunpack.c.l.b16 %v2406
    %v2938 = vunpack.c.h.b16 %v2406
    %v2939 = vunpack.c.l.b16 %v2407
    %v2940 = vunpack.c.h.b16 %v2407
    %v2941 = vunpack.c.l.b16 %v2408
    %v2942 = vunpack.c.h.b16 %v2408
    %v2943 = vunpack.c.l.b16 %v2409
    %v2944 = vunpack.c.h.b16 %v2409
    %v2945 = vunpack.c.l.b16 %v2410
    %v2946 = vunpack.c.h.b16 %v2410
    %v2947 = vunpack.c.l.b16 %v2411
    %v2948 = vunpack.c.h.b16 %v2411
    %v2949 = vunpack.c.l.b16 %v2412
    %v2950 = vunpack.c.h.b16 %v2412
    %v2951 = vunpack.c.l.b16 %v2413
    %v2952 = vunpack.c.h.b16 %v2413
    %v2953 = vunpack.c.l.b16 %v2414
    %v2954 = vunpack.c.h.b16 %v2414
    %v2955 = vunpack.c.l.b16 %v2415
    %v2956 = vunpack.c.h.b16 %v2415
    %v2957 = vunpack.c.l.b16 %v2416
    %v2958 = vunpack.c.h.b16 %v2416
    %v2959 = vunpack.c.l.b16 %v2417
    %v2960 = vunpack.c.h.b16 %v2417
    %v2961 = vunpack.c.l.b16 %v2418
    %v2962 = vunpack.c.h.b16 %v2418
    %v2963 = vpack.c.b16 %v2933, %v2931
    %v2964 = vpack.c.b16 %v2934, %v2932
    %v2965 = vpack.c.b16 %v2937, %v2935
    %v2966 = vpack.c.b16 %v2938, %v2936
    %v2967 = vpack.c.b16 %v2941, %v2939
    %v2968 = vpack.c.b16 %v2942, %v2940
    %v2969 = vpack.c.b16 %v2945, %v2943
    %v2970 = vpack.c.b16 %v2946, %v2944
    %v2971 = vpack.c.b16 %v2949, %v2947
    %v2972 = vpack.c.b16 %v2950, %v2948
    %v2973 = vpack.c.b16 %v2953, %v2951
    %v2974 = vpack.c.b16 %v2954, %v2952
    %v2975 = vpack.c.b16 %v2957, %v2955
    %v2976 = vpack.c.b16 %v2958, %v2956
    %v2977 = vpack.c.b16 %v2961, %v2959
    %v2978 = vpack.c.b16 %v2962, %v2960
    %v3027 = vunpack.c.l.b16 %v2419
    %v3028 = vunpack.c.l.b16 %v2420
    %v3029 = vunpack.c.l.b16 %v2421
    %v3030 = vunpack.c.l.b16 %v2422
    %v3031 = vunpack.c.l.b16 %v2423
    %v3032 = vunpack.c.l.b16 %v2424
    %v3033 = vunpack.c.l.b16 %v2425
    %v3034 = vunpack.c.l.b16 %v2426
    %v3035 = vunpack.c.l.b16 %v2427
    %v3036 = vunpack.c.l.b16 %v2428
    %v3037 = vunpack.c.l.b16 %v2429
    %v3038 = vunpack.c.l.b16 %v2430
    %v3039 = vunpack.c.l.b16 %v2431
    %v3040 = vunpack.c.l.b16 %v2432
    %v3041 = vunpack.c.l.b16 %v2433
    %v3042 = vunpack.c.l.b16 %v2434
    %v3043 = vunpack.c.l.b16 %v2435
    %v3044 = vunpack.c.l.b16 %v2436
    %v3045 = vunpack.c.l.b16 %v2437
    %v3046 = vunpack.c.l.b16 %v2438
    %v3047 = vunpack.c.l.b16 %v2439
    %v3048 = vunpack.c.l.b16 %v2440
    %v3049 = vunpack.c.l.b16 %v2441
    %v3050 = vunpack.c.l.b16 %v2442
    %v3051 = vunpack.c.l.b16 %v2443
    %v3052 = vunpack.c.l.b16 %v2444
    %v3053 = vunpack.c.l.b16 %v2445
    %v3054 = vunpack.c.l.b16 %v2446
    %v3055 = vunpack.c.l.b16 %v2447
    %v3056 = vunpack.c.l.b16 %v2448
    %v3057 = vunpack.c.l.b16 %v2449
    %v3058 = vunpack.c.l.b16 %v2450
    %v3059 = vpack.c.b16 %v3028, %v3027
    %v3060 = vpack.c.b16 %v3030, %v3029
    %v3061 = vpack.c.b16 %v3032, %v3031
    %v3062 = vpack.c.b16 %v3034, %v3033
    %v3063 = vpack.c.b16 %v3036, %v3035
    %v3064 = vpack.c.b16 %v3038, %v3037
    %v3065 = vpack.c.b16 %v3040, %v3039
    %v3066 = vpack.c.b16 %v3042, %v3041
    %v3067 = vpack.c.b16 %v3044, %v3043
    %v3068 = vpack.c.b16 %v3046, %v3045
    %v3069 = vpack.c.b16 %v3048, %v3047
    %v3070 = vpack.c.b16 %v3050, %v3049
    %v3071 = vpack.c.b16 %v3052, %v3051
    %v3072 = vpack.c.b16 %v3054, %v3053
    %v3073 = vpack.c.b16 %v3056, %v3055
    %v3074 = vpack.c.b16 %v3058, %v3057
    %3091 = vmatprep.subr.bf16.mxu0 0
    %3092 = vmatpush1.bf16.msra.mxu0 %v3066
    %3093 = vmatprep.subr.bf16.mxu0 0
    %3094 = vmatpush1.bf16.msra.mxu0 %v3065
    %3095 = vmatprep.subr.bf16.mxu0 0
    %3096 = vmatpush1.bf16.msra.mxu0 %v3064
    %3097 = vmatprep.subr.bf16.mxu0 0
    %3098 = vmatpush1.bf16.msra.mxu0 %v3063
    %3099 = vmatprep.subr.bf16.mxu0 0
    %3100 = vmatpush1.bf16.msra.mxu0 %v3062
    %3101 = vmatprep.subr.bf16.mxu0 0
    %3102 = vmatpush1.bf16.msra.mxu0 %v3061
    %3103 = vmatprep.subr.bf16.mxu0 0
    %3104 = vmatpush1.bf16.msra.mxu0 %v3060
    %3105 = vmatprep.subr.bf16.mxu0 0
    %3106 = vmatpush1.bf16.msra.mxu0 %v3059
    %3107 = vmatprep.subr.bf16.mxu0 0
    %3108 = vmatpush2.bf16.msra.mxu0 %v3074
    %3109 = vmatprep.subr.bf16.mxu0 0
    %3110 = vmatpush2.bf16.msra.mxu0 %v3073
    %3111 = vmatprep.subr.bf16.mxu0 0
    %3112 = vmatpush2.bf16.msra.mxu0 %v3072
    %3113 = vmatprep.subr.bf16.mxu0 0
    %3114 = vmatpush2.bf16.msra.mxu0 %v3071
    %3115 = vmatprep.subr.bf16.mxu0 0
    %3116 = vmatpush2.bf16.msra.mxu0 %v3070
    %3117 = vmatprep.subr.bf16.mxu0 0
    %3118 = vmatpush2.bf16.msra.mxu0 %v3069
    %3119 = vmatprep.subr.bf16.mxu0 0
    %3120 = vmatpush2.bf16.msra.mxu0 %v3068
    %3121 = vmatprep.subr.bf16.mxu0 0
    %3122 = vmatpush2.bf16.msra.mxu0 %v3067
    %3123 = vmatprep.mubr.bf16.mxu0 %v2964
    %3124 = vmatmul.mubr.bf16.gmra.mxu0 %v2963
    %v3125 = vpop.f32.mrf.mxu0
    %v3126 = vadd.f32 %v2853, %v3125
    %v3127 = vpop.f32.mrf.mxu0
    %v3128 = vpop.f32.mrf.mxu0
    %v3129 = vadd.f32 %v2856, %v3128
    %v3130 = vpop.f32.mrf.mxu0
    %3131 = vmatprep.mubr.bf16.mxu0 %v2966
    %3132 = vmatmul.mubr.bf16.gmra.mxu0 %v2965
    %v3133 = vpop.f32.mrf.mxu0
    %v3134 = vadd.f32 %v2861, %v3133
    %v3135 = vpop.f32.mrf.mxu0
    %v3136 = vpop.f32.mrf.mxu0
    %v3137 = vadd.f32 %v2864, %v3136
    %v3138 = vpop.f32.mrf.mxu0
    %3139 = vmatprep.mubr.bf16.mxu0 %v2968
    %3140 = vmatmul.mubr.bf16.gmra.mxu0 %v2967
    %v3141 = vpop.f32.mrf.mxu0
    %v3142 = vadd.f32 %v2869, %v3141
    %v3143 = vpop.f32.mrf.mxu0
    %v3144 = vpop.f32.mrf.mxu0
    %v3145 = vadd.f32 %v2872, %v3144
    %v3146 = vpop.f32.mrf.mxu0
    %3147 = vmatprep.mubr.bf16.mxu0 %v2970
    %3148 = vmatmul.mubr.bf16.gmra.mxu0 %v2969
    %v3149 = vpop.f32.mrf.mxu0
    %v3150 = vadd.f32 %v2877, %v3149
    %v3151 = vpop.f32.mrf.mxu0
    %v3152 = vpop.f32.mrf.mxu0
    %v3153 = vadd.f32 %v2880, %v3152
    %v3154 = vpop.f32.mrf.mxu0
    %3155 = vmatprep.mubr.bf16.mxu0 %v2972
    %3156 = vmatmul.mubr.bf16.gmra.mxu0 %v2971
    %v3157 = vpop.f32.mrf.mxu0
    %v3158 = vadd.f32 %v2885, %v3157
    %v3159 = vpop.f32.mrf.mxu0
    %v3160 = vpop.f32.mrf.mxu0
    %v3161 = vadd.f32 %v2888, %v3160
    %v3162 = vpop.f32.mrf.mxu0
    %3163 = vmatprep.mubr.bf16.mxu0 %v2974
    %3164 = vmatmul.mubr.bf16.gmra.mxu0 %v2973
    %v3165 = vpop.f32.mrf.mxu0
    %v3166 = vadd.f32 %v2893, %v3165
    %v3167 = vpop.f32.mrf.mxu0
    %v3168 = vpop.f32.mrf.mxu0
    %v3169 = vadd.f32 %v2896, %v3168
    %v3170 = vpop.f32.mrf.mxu0
    %3171 = vmatprep.mubr.bf16.mxu0 %v2976
    %3172 = vmatmul.mubr.bf16.gmra.mxu0 %v2975
    %v3173 = vpop.f32.mrf.mxu0
    %v3174 = vadd.f32 %v2901, %v3173
    %v3175 = vpop.f32.mrf.mxu0
    %v3176 = vpop.f32.mrf.mxu0
    %v3177 = vadd.f32 %v2904, %v3176
    %v3178 = vpop.f32.mrf.mxu0
    %3179 = vmatprep.mubr.bf16.mxu0 %v2978
    %3180 = vmatmul.mubr.bf16.gmra.mxu0 %v2977
    %v3181 = vpop.f32.mrf.mxu0
    %v3182 = vadd.f32 %v2909, %v3181
    %v3183 = vpop.f32.mrf.mxu0
    %v3184 = vpop.f32.mrf.mxu0
    %v3185 = vadd.f32 %v2912, %v3184
    %v3186 = vpop.f32.mrf.mxu0
    %3187 = vdwg.mxu0
    %v3188 = vld [vmem:[#allocation3] sm:$0xee]
    %s3189 = scalar_lea.vmem [#allocation8], 256
    %v3190 = vld [vmem:[%s3189] sm:$0xf]
    %v3191 = vld [vmem:[%s3189 + $0x4] sm:$0xf]
    %v3192 = vld [vmem:[%s3189 + $0x8] sm:$0xf]
    %v3193 = vld [vmem:[%s3189 + $0xc] sm:$0xf]
    %v3194 = vld [vmem:[%s3189 + $0x10] sm:$0xf]
    %v3195 = vld [vmem:[%s3189 + $0x14] sm:$0xf]
    %v3196 = vld [vmem:[%s3189 + $0x18] sm:$0xf]
    %v3197 = vld [vmem:[%s3189 + $0x1c] sm:$0xf]
    %v3198 = vld [vmem:[%s3189 + $0x20] sm:$0xf]
    %v3199 = vld [vmem:[%s3189 + $0x24] sm:$0xf]
    %v3200 = vld [vmem:[%s3189 + $0x28] sm:$0xf]
    %v3201 = vld [vmem:[%s3189 + $0x2c] sm:$0xf]
    %v3202 = vld [vmem:[%s3189 + $0x30] sm:$0xf]
    %v3203 = vld [vmem:[%s3189 + $0x34] sm:$0xf]
    %v3204 = vld [vmem:[%s3189 + $0x38] sm:$0xf]
    %v3205 = vld [vmem:[%s3189 + $0x3c] sm:$0xf]
    %v3206 = vld [vmem:[%s3189 + $0x40] sm:$0xf]
    %v3207 = vld [vmem:[%s3189 + $0x44] sm:$0xf]
    %v3208 = vld [vmem:[%s3189 + $0x48] sm:$0xf]
    %v3209 = vld [vmem:[%s3189 + $0x4c] sm:$0xf]
    %v3210 = vld [vmem:[%s3189 + $0x50] sm:$0xf]
    %v3211 = vld [vmem:[%s3189 + $0x54] sm:$0xf]
    %v3212 = vld [vmem:[%s3189 + $0x58] sm:$0xf]
    %v3213 = vld [vmem:[%s3189 + $0x5c] sm:$0xf]
    %v3214 = vld [vmem:[%s3189 + $0x60] sm:$0xf]
    %v3215 = vld [vmem:[%s3189 + $0x64] sm:$0xf]
    %v3216 = vld [vmem:[%s3189 + $0x68] sm:$0xf]
    %v3217 = vld [vmem:[%s3189 + $0x6c] sm:$0xf]
    %v3218 = vld [vmem:[%s3189 + $0x70] sm:$0xf]
    %v3219 = vld [vmem:[%s3189 + $0x74] sm:$0xf]
    %v3220 = vld [vmem:[%s3189 + $0x78] sm:$0xf]
    %v3221 = vld [vmem:[%s3189 + $0x7c] sm:$0xf]
    %v3223 = vunpack.c.l.b16 %v3188
    %v3224 = vunpack.c.h.b16 %v3188
    %v3225 = vpack.c.b16 %v2520, %v3223
    %v3226 = vpack.c.b16 %v2521, %v3224
    %v3227 = vrot.slane %v3225, 1
    %v3228 = vrot.slane %v2554, 1
    %v3229 = vsel %vm574, %v3227, %v3228
    %v3230 = vrot.slane %v3226, 1
    %v3231 = vrot.slane %v2555, 1
    %v3232 = vsel %vm574, %v3230, %v3231
    %v3233 = vrot.slane %v2556, 1
    %v3234 = vsel %vm574, %v3228, %v3233
    %v3235 = vrot.slane %v2557, 1
    %v3236 = vsel %vm574, %v3231, %v3235
    %v3237 = vrot.slane %v2558, 1
    %v3238 = vsel %vm574, %v3233, %v3237
    %v3239 = vrot.slane %v2559, 1
    %v3240 = vsel %vm574, %v3235, %v3239
    %v3241 = vrot.slane %v2560, 1
    %v3242 = vsel %vm574, %v3237, %v3241
    %v3243 = vrot.slane %v2561, 1
    %v3244 = vsel %vm574, %v3239, %v3243
    %v3245 = vrot.slane %v2562, 1
    %v3246 = vsel %vm574, %v3241, %v3245
    %v3247 = vrot.slane %v2563, 1
    %v3248 = vsel %vm574, %v3243, %v3247
    %v3249 = vrot.slane %v2564, 1
    %v3250 = vsel %vm574, %v3245, %v3249
    %v3251 = vrot.slane %v2565, 1
    %v3252 = vsel %vm574, %v3247, %v3251
    %v3253 = vrot.slane %v2566, 1
    %v3254 = vsel %vm574, %v3249, %v3253
    %v3255 = vrot.slane %v2567, 1
    %v3256 = vsel %vm574, %v3251, %v3255
    %v3257 = vrot.slane %v2568, 1
    %v3258 = vsel %vm574, %v3253, %v3257
    %v3259 = vrot.slane %v2569, 1
    %v3260 = vsel %vm574, %v3255, %v3259
    %v3309 = vunpack.c.l.b16 %v3190
    %v3310 = vunpack.c.l.b16 %v3191
    %v3311 = vunpack.c.l.b16 %v3192
    %v3312 = vunpack.c.l.b16 %v3193
    %v3313 = vunpack.c.l.b16 %v3194
    %v3314 = vunpack.c.l.b16 %v3195
    %v3315 = vunpack.c.l.b16 %v3196
    %v3316 = vunpack.c.l.b16 %v3197
    %v3317 = vunpack.c.l.b16 %v3198
    %v3318 = vunpack.c.l.b16 %v3199
    %v3319 = vunpack.c.l.b16 %v3200
    %v3320 = vunpack.c.l.b16 %v3201
    %v3321 = vunpack.c.l.b16 %v3202
    %v3322 = vunpack.c.l.b16 %v3203
    %v3323 = vunpack.c.l.b16 %v3204
    %v3324 = vunpack.c.l.b16 %v3205
    %v3325 = vunpack.c.l.b16 %v3206
    %v3326 = vunpack.c.l.b16 %v3207
    %v3327 = vunpack.c.l.b16 %v3208
    %v3328 = vunpack.c.l.b16 %v3209
    %v3329 = vunpack.c.l.b16 %v3210
    %v3330 = vunpack.c.l.b16 %v3211
    %v3331 = vunpack.c.l.b16 %v3212
    %v3332 = vunpack.c.l.b16 %v3213
    %v3333 = vunpack.c.l.b16 %v3214
    %v3334 = vunpack.c.l.b16 %v3215
    %v3335 = vunpack.c.l.b16 %v3216
    %v3336 = vunpack.c.l.b16 %v3217
    %v3337 = vunpack.c.l.b16 %v3218
    %v3338 = vunpack.c.l.b16 %v3219
    %v3339 = vunpack.c.l.b16 %v3220
    %v3340 = vunpack.c.l.b16 %v3221
    %v3341 = vpack.c.b16 %v3310, %v3309
    %v3342 = vpack.c.b16 %v3312, %v3311
    %v3343 = vpack.c.b16 %v3314, %v3313
    %v3344 = vpack.c.b16 %v3316, %v3315
    %v3345 = vpack.c.b16 %v3318, %v3317
    %v3346 = vpack.c.b16 %v3320, %v3319
    %v3347 = vpack.c.b16 %v3322, %v3321
    %v3348 = vpack.c.b16 %v3324, %v3323
    %v3349 = vpack.c.b16 %v3326, %v3325
    %v3350 = vpack.c.b16 %v3328, %v3327
    %v3351 = vpack.c.b16 %v3330, %v3329
    %v3352 = vpack.c.b16 %v3332, %v3331
    %v3353 = vpack.c.b16 %v3334, %v3333
    %v3354 = vpack.c.b16 %v3336, %v3335
    %v3355 = vpack.c.b16 %v3338, %v3337
    %v3356 = vpack.c.b16 %v3340, %v3339
    %3373 = vmatprep.subr.bf16.mxu0 0
    %3374 = vmatpush1.bf16.msra.mxu0 %v3348
    %3375 = vmatprep.subr.bf16.mxu0 0
    %3376 = vmatpush1.bf16.msra.mxu0 %v3347
    %3377 = vmatprep.subr.bf16.mxu0 0
    %3378 = vmatpush1.bf16.msra.mxu0 %v3346
    %3379 = vmatprep.subr.bf16.mxu0 0
    %3380 = vmatpush1.bf16.msra.mxu0 %v3345
    %3381 = vmatprep.subr.bf16.mxu0 0
    %3382 = vmatpush1.bf16.msra.mxu0 %v3344
    %3383 = vmatprep.subr.bf16.mxu0 0
    %3384 = vmatpush1.bf16.msra.mxu0 %v3343
    %3385 = vmatprep.subr.bf16.mxu0 0
    %3386 = vmatpush1.bf16.msra.mxu0 %v3342
    %3387 = vmatprep.subr.bf16.mxu0 0
    %3388 = vmatpush1.bf16.msra.mxu0 %v3341
    %3389 = vmatprep.subr.bf16.mxu0 0
    %3390 = vmatpush2.bf16.msra.mxu0 %v3356
    %3391 = vmatprep.subr.bf16.mxu0 0
    %3392 = vmatpush2.bf16.msra.mxu0 %v3355
    %3393 = vmatprep.subr.bf16.mxu0 0
    %3394 = vmatpush2.bf16.msra.mxu0 %v3354
    %3395 = vmatprep.subr.bf16.mxu0 0
    %3396 = vmatpush2.bf16.msra.mxu0 %v3353
    %3397 = vmatprep.subr.bf16.mxu0 0
    %3398 = vmatpush2.bf16.msra.mxu0 %v3352
    %3399 = vmatprep.subr.bf16.mxu0 0
    %3400 = vmatpush2.bf16.msra.mxu0 %v3351
    %3401 = vmatprep.subr.bf16.mxu0 0
    %3402 = vmatpush2.bf16.msra.mxu0 %v3350
    %3403 = vmatprep.subr.bf16.mxu0 0
    %3404 = vmatpush2.bf16.msra.mxu0 %v3349
    %3405 = vmatprep.mubr.bf16.mxu0 %v3232
    %3406 = vmatmul.mubr.bf16.gmra.mxu0 %v3229
    %v3407 = vpop.f32.mrf.mxu0
    %v3408 = vadd.f32 0.0, %v3407
    %v3409 = vpop.f32.mrf.mxu0
    %v3410 = vpop.f32.mrf.mxu0
    %v3411 = vadd.f32 0.0, %v3410
    %v3412 = vpop.f32.mrf.mxu0
    %3413 = vmatprep.mubr.bf16.mxu0 %v3236
    %3414 = vmatmul.mubr.bf16.gmra.mxu0 %v3234
    %v3415 = vpop.f32.mrf.mxu0
    %v3416 = vadd.f32 0.0, %v3415
    %v3417 = vpop.f32.mrf.mxu0
    %v3418 = vpop.f32.mrf.mxu0
    %v3419 = vadd.f32 0.0, %v3418
    %v3420 = vpop.f32.mrf.mxu0
    %3421 = vmatprep.mubr.bf16.mxu0 %v3240
    %3422 = vmatmul.mubr.bf16.gmra.mxu0 %v3238
    %v3423 = vpop.f32.mrf.mxu0
    %v3424 = vadd.f32 0.0, %v3423
    %v3425 = vpop.f32.mrf.mxu0
    %v3426 = vpop.f32.mrf.mxu0
    %v3427 = vadd.f32 0.0, %v3426
    %v3428 = vpop.f32.mrf.mxu0
    %3429 = vmatprep.mubr.bf16.mxu0 %v3244
    %3430 = vmatmul.mubr.bf16.gmra.mxu0 %v3242
    %v3431 = vpop.f32.mrf.mxu0
    %v3432 = vadd.f32 0.0, %v3431
    %v3433 = vpop.f32.mrf.mxu0
    %v3434 = vpop.f32.mrf.mxu0
    %v3435 = vadd.f32 0.0, %v3434
    %v3436 = vpop.f32.mrf.mxu0
    %3437 = vmatprep.mubr.bf16.mxu0 %v3248
    %3438 = vmatmul.mubr.bf16.gmra.mxu0 %v3246
    %v3439 = vpop.f32.mrf.mxu0
    %v3440 = vadd.f32 0.0, %v3439
    %v3441 = vpop.f32.mrf.mxu0
    %v3442 = vpop.f32.mrf.mxu0
    %v3443 = vadd.f32 0.0, %v3442
    %v3444 = vpop.f32.mrf.mxu0
    %3445 = vmatprep.mubr.bf16.mxu0 %v3252
    %3446 = vmatmul.mubr.bf16.gmra.mxu0 %v3250
    %v3447 = vpop.f32.mrf.mxu0
    %v3448 = vadd.f32 0.0, %v3447
    %v3449 = vpop.f32.mrf.mxu0
    %v3450 = vpop.f32.mrf.mxu0
    %v3451 = vadd.f32 0.0, %v3450
    %v3452 = vpop.f32.mrf.mxu0
    %3453 = vmatprep.mubr.bf16.mxu0 %v3256
    %3454 = vmatmul.mubr.bf16.gmra.mxu0 %v3254
    %v3455 = vpop.f32.mrf.mxu0
    %v3456 = vadd.f32 0.0, %v3455
    %v3457 = vpop.f32.mrf.mxu0
    %v3458 = vpop.f32.mrf.mxu0
    %v3459 = vadd.f32 0.0, %v3458
    %v3460 = vpop.f32.mrf.mxu0
    %3461 = vmatprep.mubr.bf16.mxu0 %v3260
    %3462 = vmatmul.mubr.bf16.gmra.mxu0 %v3258
    %v3463 = vpop.f32.mrf.mxu0
    %v3464 = vadd.f32 0.0, %v3463
    %v3465 = vpop.f32.mrf.mxu0
    %v3466 = vpop.f32.mrf.mxu0
    %v3467 = vadd.f32 0.0, %v3466
    %v3468 = vpop.f32.mrf.mxu0
    %3469 = vdwg.mxu0
    %v3470 = vadd.f32 %v3126, %v3408
    %v3471 = vadd.f32 %v3129, %v3411
    %v3472 = vadd.f32 %v3134, %v3416
    %v3473 = vadd.f32 %v3137, %v3419
    %v3474 = vadd.f32 %v3142, %v3424
    %v3475 = vadd.f32 %v3145, %v3427
    %v3476 = vadd.f32 %v3150, %v3432
    %v3477 = vadd.f32 %v3153, %v3435
    %v3478 = vadd.f32 %v3158, %v3440
    %v3479 = vadd.f32 %v3161, %v3443
    %v3480 = vadd.f32 %v3166, %v3448
    %v3481 = vadd.f32 %v3169, %v3451
    %v3482 = vadd.f32 %v3174, %v3456
    %v3483 = vadd.f32 %v3177, %v3459
    %v3484 = vadd.f32 %v3182, %v3464
    %v3485 = vadd.f32 %v3185, %v3467
    %v3486 = vmax.f32 %v3470, 0.0
    %v3487 = vmax.f32 %v3471, 0.0
    %v3488 = vmax.f32 %v3472, 0.0
    %v3489 = vmax.f32 %v3473, 0.0
    %v3490 = vmax.f32 %v3474, 0.0
    %v3491 = vmax.f32 %v3475, 0.0
    %v3492 = vmax.f32 %v3476, 0.0
    %v3493 = vmax.f32 %v3477, 0.0
    %v3494 = vmax.f32 %v3478, 0.0
    %v3495 = vmax.f32 %v3479, 0.0
    %v3496 = vmax.f32 %v3480, 0.0
    %v3497 = vmax.f32 %v3481, 0.0
    %v3498 = vmax.f32 %v3482, 0.0
    %v3499 = vmax.f32 %v3483, 0.0
    %v3500 = vmax.f32 %v3484, 0.0
    %v3501 = vmax.f32 %v3485, 0.0
    %3502 = vst [vmem:[#allocation4] sm:$0xff] %v3486
    %3503 = vst [vmem:[#allocation4 + $0x8] sm:$0xff] %v3487
    %3504 = vst [vmem:[#allocation4 + $0x10] sm:$0xff] %v3488
    %3505 = vst [vmem:[#allocation4 + $0x18] sm:$0xff] %v3489
    %3506 = vst [vmem:[#allocation4 + $0x20] sm:$0xff] %v3490
    %3507 = vst [vmem:[#allocation4 + $0x28] sm:$0xff] %v3491
    %3508 = vst [vmem:[#allocation4 + $0x30] sm:$0xff] %v3492
    %3509 = vst [vmem:[#allocation4 + $0x38] sm:$0xff] %v3493
    %3510 = vst [vmem:[#allocation4 + $0x40] sm:$0xff] %v3494
    %3511 = vst [vmem:[#allocation4 + $0x48] sm:$0xff] %v3495
    %3512 = vst [vmem:[#allocation4 + $0x50] sm:$0xff] %v3496
    %3513 = vst [vmem:[#allocation4 + $0x58] sm:$0xff] %v3497
    %3514 = vst [vmem:[#allocation4 + $0x60] sm:$0xff] %v3498
    %3515 = vst [vmem:[#allocation4 + $0x68] sm:$0xff] %v3499
    %3516 = vst [vmem:[#allocation4 + $0x70] sm:$0xff] %v3500
    %3517 = vst [vmem:[#allocation4 + $0x78] sm:$0xff] %v3501
    %v3518 = vlaneseq
    %v3519 = vshrl.u32 %v3518, 7
    %v3520 = vadd.s32 %v3519, 8
    %vm3521 = vcmp.lt.s32.totalorder %v3519, 10
    %vm3522 = vcmp.lt.s32.totalorder %v3520, 10
    loop: start=0, step=1, limit=8
    $region26: #{tpu_custom_call.1} parent=1 // loop_pre_header
      _
    $region27: #{tpu_custom_call.1} parent=1 // loop_header
      %s3524 = sphi 0, %s3528
      %p3525 = scmp.ge.s32.totalorder %s3524, 8
    $region28: #{tpu_custom_call.1} parent=1 // loop_header_branch
      %3527 = sbr.rel (%p3525) target = $region32
    $region29: #{tpu_custom_call.1} parent=1 // loop_body
      %s3529 = smul.u32 %s3524, 16
      %s3530 = scalar_lea.vmem [#allocation4], %s3529
      %v3531 = vld [vmem:[%s3530] sm:$0xff]
      %v3532 = vld [vmem:[%s3530 + $0x8] sm:$0xff]
      %v3533 = vsel %vm3521, %v3531, 0.0
      %v3534 = vsel %vm3522, %v3532, 0.0
      %v3535 = vadd.f32 %v3533, %v3534
      %v3536 = vrot.slane %v3535, 4
      %v3537 = vadd.f32 %v3535, %v3536
      %v3538 = vrot.slane %v3537, 2
      %v3539 = vadd.f32 %v3537, %v3538
      %v3540 = vrot.slane %v3539, 1
      %v3541 = vadd.f32 %v3539, %v3540
      %s3542 = scalar_lea.vmem [#allocation10], %s3524
      %3543 = vst [vmem:[%s3542] sm:$0x1] %v3541
    $region30: #{tpu_custom_call.1} parent=1 // loop_footer
      %s3528 = sadd.s32 1, %s3524
    $region31: #{tpu_custom_call.1} parent=1 // loop_footer_branch
      %3523 = sbr.rel target = $region27
    $region32: #{tpu_custom_call.1} parent=1 // loop_exit
      _
    // Predicated region
    $region33: #{tpu_custom_call.1} parent=1 // pred_check
      _
    $region34: #{tpu_custom_call.1} parent=1 // pred_check_branch
      %3545 = sbr.rel (0) target = $region36
    $region35: #{tpu_custom_call.1} parent=1 // pred_region
      %s3547 = ssub.s32 128, 128
      %3548 = vsyncadd [#allocation7], %s3547
      %s3550 = sshll.u32 [#allocation10], 4
      %s3551 = int_to_ptr.vmem [resolvable:$true] %s3550
      %3553 = dma.vmem_to_hbm [thread:$0]  %s3551, 128, %s4, [#allocation7]
    $region36: #{tpu_custom_call.1} parent=1 // pred_fallthru
      _
    // Predicated region
    $region37: #{tpu_custom_call.1} parent=1 // pred_check
      _
    $region38: #{tpu_custom_call.1} parent=1 // pred_check_branch
      %3555 = sbr.rel (0) target = $region40
    $region39: #{tpu_custom_call.1} parent=1 // pred_region
      %3556 = dma.done [#allocation7], 128
    $region40: #{tpu_custom_call.1} parent=1 // pred_fallthru
      _
    %3557 = vsyncpa [#allocation6], 1
    %3558 = vsyncpa [#allocation9], 1
    %3559 = vsyncpa [#allocation7], 1

</llo_original>
